<compile_context>
chip_gen: v6e
topology: v6e:2x2x1
jax: 0.10.0
libtpu: 0.0.40
codegen_flags: <defaults>
</compile_context>

<pallas_src>
import functools

import jax
import jax.numpy as jnp
from jax.experimental import pallas as pl
from jax.experimental.pallas import tpu as pltpu


# ----------------------------- Pallas kernel --------------------------------
def _matmul_bias_act_kernel(a_ref, w_ref, b_ref, o_ref, acc_ref, *, apply_relu):
    """Grid = (M tiles, N tiles, K tiles).  K is the (arbitrary) reduction axis."""
    k = pl.program_id(2)

    @pl.when(k == 0)
    def _():
        acc_ref[...] = jnp.zeros_like(acc_ref)

    acc_ref[...] += jnp.dot(
        a_ref[...], w_ref[...], preferred_element_type=jnp.float32)

    @pl.when(k == pl.num_programs(2) - 1)
    def _():
        acc = acc_ref[...] + b_ref[...]          # bias broadcast over rows
        if apply_relu:
            acc = jnp.maximum(acc, 0.0)
        o_ref[...] = acc.astype(o_ref.dtype)


def _round_up(x, m):
    return (x + m - 1) // m * m


def _choose_tiles(M, N, K):
    """Pick (padded sizes, tile sizes) that are (8,128)-aligned and MXU-friendly."""
    # M tile: up to 512 rows (sublane axis only needs multiples of 8).
    tm = 512 if M >= 512 else _round_up(M, 8)
    Mp = _round_up(M, tm)
    # N tile: lane-dense (>=128), prefer 256/512 multiples for the 256x256 MXU.
    tn = min(512, _round_up(N, 128))
    Np = _round_up(N, tn)
    # K tile: largest of 512/256/128 that divides the 128-padded K exactly.
    Kp = _round_up(K, 128)
    tk = 128
    for cand in (512, 256):
        if Kp % cand == 0:
            tk = cand
            break
    return (Mp, Np, Kp), (tm, tn, tk)


def matmul_bias_act(a, w, b, apply_relu):
    """a: (M, K) patches, w: (K, N) weights, b: (N,) bias -> (M, N) float32."""
    M, K = a.shape
    K2, N = w.shape
    assert K == K2

    (Mp, Np, Kp), (tm, tn, tk) = _choose_tiles(M, N, K)

    # bf16 MXU inputs (halves HBM/VMEM traffic, ~2-4x MXU issue rate);
    # zero-padding along K is exact, padded M rows / N cols are sliced off.
    a_p = jnp.pad(a.astype(jnp.bfloat16), ((0, Mp - M), (0, Kp - K)))
    w_p = jnp.pad(w.astype(jnp.bfloat16), ((0, Kp - K), (0, Np - N)))
    b_p = jnp.pad(b.astype(jnp.float32), (0, Np - N)).reshape(1, Np)

    grid = (Mp // tm, Np // tn, Kp // tk)

    out = pl.pallas_call(
        functools.partial(_matmul_bias_act_kernel, apply_relu=apply_relu),
        out_shape=jax.ShapeDtypeStruct((Mp, Np), jnp.float32),
        grid_spec=pltpu.PrefetchScalarGridSpec(
            num_scalar_prefetch=0,
            grid=grid,
            in_specs=[
                pl.BlockSpec((tm, tk), lambda i, j, k: (i, k)),
                pl.BlockSpec((tk, tn), lambda i, j, k: (k, j)),
                pl.BlockSpec((1, tn), lambda i, j, k: (0, j)),
            ],
            out_specs=pl.BlockSpec((tm, tn), lambda i, j, k: (i, j)),
            scratch_shapes=[pltpu.VMEM((tm, tn), jnp.float32)],
        ),
        compiler_params=pltpu.CompilerParams(
            dimension_semantics=("parallel", "parallel", "arbitrary"),
            vmem_limit_bytes=48 * 1024 * 1024,   # headroom under v7x's 64 MiB
        ),
        cost_estimate=pl.CostEstimate(
            flops=2 * Mp * Np * Kp,
            transcendentals=0,
            bytes_accessed=Mp * Kp * 2 + Kp * Np * 2 + Mp * Np * 4 + Np * 4,
        ),
    )(a_p, w_p, b_p)
    return out[:M, :N]


# ------------------------------ JAX glue -------------------------------------
def _im2col(x_nhwc, k=3, stride=2, pad=1):
    """Extract 3x3 stride-2 patches.  Returns ((B*Ho*Wo, k*k*C), B, Ho, Wo).

    K-axis ordering is (kh, kw, C) to match the weight reshape below."""
    B, H, W, C = x_nhwc.shape
    xp = jnp.pad(x_nhwc, ((0, 0), (pad, pad), (pad, pad), (0, 0)))
    Ho = (H + 2 * pad - k) // stride + 1
    Wo = (W + 2 * pad - k) // stride + 1
    taps = []
    for i in range(k):
        for j in range(k):
            taps.append(xp[:, i:i + stride * Ho:stride, j:j + stride * Wo:stride, :])
    p = jnp.stack(taps, axis=3)                       # (B, Ho, Wo, k*k, C)
    return p.reshape(B * Ho * Wo, k * k * C), B, Ho, Wo


def _conv2d_s2(x_nhwc, w_oihw, b, apply_relu):
    """3x3 / stride 2 / pad 1 conv via im2col + tiled Pallas matmul. NHWC in/out."""
    cout = w_oihw.shape[0]
    patches, B, Ho, Wo = _im2col(x_nhwc)
    # (O, I, kh, kw) -> (kh, kw, I, O) -> (kh*kw*I, O)  (matches patch K order)
    w_mat = jnp.transpose(w_oihw, (2, 3, 1, 0)).reshape(-1, cout)
    y = matmul_bias_act(patches, w_mat, b, apply_relu)
    return y.reshape(B, Ho, Wo, cout)


_LAYER_SPECS = (  # (C_out, C_in, apply_relu)
    (64, 3, True),
    (256, 64, True),
    (512, 256, True),
    (512, 512, False),
)


@jax.jit
def encoder_cell_forward(x_nchw, params):
    """params: list of (weight(O,I,3,3), bias(O,)); relu flags are static."""
    x = jnp.transpose(x_nchw, (0, 2, 3, 1))           # NCHW -> NHWC (once)
    for (w, b), (_co, _ci, relu) in zip(params, _LAYER_SPECS):
        x = _conv2d_s2(x, w, b, relu)
    return jnp.transpose(x, (0, 3, 1, 2))             # NHWC -> NCHW (once)


def init_params(key):
    """Deterministic synthetic parameters with the EncoderCell shapes."""
    params = []
    for idx, (co, ci, _relu) in enumerate(_LAYER_SPECS):
        kw_key, kb_key = jax.random.split(jax.random.fold_in(key, idx))
        fan_in = ci * 9
        w = jax.random.normal(kw_key, (co, ci, 3, 3), jnp.float32) * (fan_in ** -0.5)
        b = jax.random.normal(kb_key, (co,), jnp.float32) * 0.01
        params.append((w, b))
    return params


def _reference_forward(x_nchw, params):
    """XLA reference (lax conv) with the same bf16-input / fp32-accum numerics."""
    x = x_nchw
    for (w, b), (_co, _ci, relu) in zip(params, _LAYER_SPECS):
        y = jax.lax.conv_general_dilated(
            x.astype(jnp.bfloat16), w.astype(jnp.bfloat16),
            window_strides=(2, 2), padding=((1, 1), (1, 1)),
            dimension_numbers=("NCHW", "OIHW", "NCHW"),
            preferred_element_type=jnp.float32)
        x = y + b[None, :, None, None]
        if relu:
            x = jnp.maximum(x, 0.0)
    return x


if __name__ == "__main__":
    key = jax.random.PRNGKey(0)
    xkey, pkey = jax.random.split(key)
    # Small NCHW input consistent with the module (C_in = 3).
    x = jax.random.normal(xkey, (2, 3, 16, 16), jnp.float32)
    params = init_params(pkey)

    out = jax.block_until_ready(encoder_cell_forward(x, params))
    assert out.shape == (2, 512, 1, 1), out.shape

    ref = jax.block_until_ready(_reference_forward(x, params))
    assert jnp.allclose(out, ref, atol=2e-2, rtol=2e-2), \
        float(jnp.max(jnp.abs(out - ref)))

    print("KERNEL_OK")
</pallas_src>

<mosaic_0001>
module attributes {stable_mosaic.version = 11 : i64} {
  func.func @_matmul_bias_act_kernel(%arg0: i32, %arg1: i32, %arg2: i32, %arg3: memref<128x128xbf16, #tpu.memory_space<vmem>>, %arg4: memref<128x128xbf16, #tpu.memory_space<vmem>>, %arg5: memref<1x128xf32, #tpu.memory_space<vmem>>, %arg6: memref<128x128xf32, #tpu.memory_space<vmem>>, %arg7: memref<128x128xf32, #tpu.memory_space<vmem>>) attributes {dimension_semantics = [#tpu.dimension_semantics<parallel>, #tpu.dimension_semantics<parallel>, #tpu.dimension_semantics<arbitrary>], iteration_bounds = array<i64: 1, 1, 1>, scalar_prefetch = 0 : i64, scratch_operands = 1 : i64, tpu.core_type = #tpu.core_type<tc>, window_params = [{transform_indices = @transform_0, window_bounds = array<i64: 128, 128>}, {transform_indices = @transform_1, window_bounds = array<i64: 128, 128>}, {transform_indices = @transform_2, window_bounds = array<i64: 1, 128>}, {transform_indices = @transform_3, window_bounds = array<i64: 128, 128>}]} {
    %c0_i32 = arith.constant 0 : i32
    %0 = arith.cmpi eq, %arg2, %c0_i32 : i32
    %1 = arith.extui %0 : i1 to i32
    %c0_i32_0 = arith.constant 0 : i32
    %2 = arith.cmpi ne, %1, %c0_i32_0 : i32
    scf.if %2 {
      %cst_10 = arith.constant 0.000000e+00 : f32
      %12 = vector.broadcast %cst_10 : f32 to vector<128x128xf32>
      %c0_11 = arith.constant 0 : index
      %c0_12 = arith.constant 0 : index
      %13 = vector.load %arg7[%c0_11, %c0_12] : memref<128x128xf32, #tpu.memory_space<vmem>>, vector<128x128xf32>
      tpu.vector_store %arg7[%c0_11, %c0_12], %12 {strides = array<i32>} : memref<128x128xf32, #tpu.memory_space<vmem>>, vector<128x128xf32>,
    } else {
    }
    %c0 = arith.constant 0 : index
    %c0_1 = arith.constant 0 : index
    %3 = vector.load %arg7[%c0, %c0_1] : memref<128x128xf32, #tpu.memory_space<vmem>>, vector<128x128xf32>
    %c0_2 = arith.constant 0 : index
    %c0_3 = arith.constant 0 : index
    %4 = vector.load %arg3[%c0_2, %c0_3] : memref<128x128xbf16, #tpu.memory_space<vmem>>, vector<128x128xbf16>
    %c0_4 = arith.constant 0 : index
    %c0_5 = arith.constant 0 : index
    %5 = vector.load %arg4[%c0_4, %c0_5] : memref<128x128xbf16, #tpu.memory_space<vmem>>, vector<128x128xbf16>
    %cst = arith.constant dense<0.000000e+00> : vector<128x128xf32>
    %6 = tpu.matmul %4, %5, %cst {dimension_numbers = #tpu.dot_dimension_numbers<[1], [0], [0], [1], [0, 0, 1, 1], [], []>} : vector<128x128xbf16>, vector<128x128xbf16>, vector<128x128xf32> -> vector<128x128xf32>
    %7 = arith.addf %3, %6 : vector<128x128xf32>
    %c0_6 = arith.constant 0 : index
    %c0_7 = arith.constant 0 : index
    %8 = vector.load %arg7[%c0_6, %c0_7] : memref<128x128xf32, #tpu.memory_space<vmem>>, vector<128x128xf32>
    tpu.vector_store %arg7[%c0_6, %c0_7], %7 {strides = array<i32>} : memref<128x128xf32, #tpu.memory_space<vmem>>, vector<128x128xf32>,
    %c0_i32_8 = arith.constant 0 : i32
    %9 = arith.cmpi eq, %arg2, %c0_i32_8 : i32
    %10 = arith.extui %9 : i1 to i32
    %c0_i32_9 = arith.constant 0 : i32
    %11 = arith.cmpi ne, %10, %c0_i32_9 : i32
    scf.if %11 {
      %c0_10 = arith.constant 0 : index
      %c0_11 = arith.constant 0 : index
      %12 = vector.load %arg7[%c0_10, %c0_11] : memref<128x128xf32, #tpu.memory_space<vmem>>, vector<128x128xf32>
      %c0_12 = arith.constant 0 : index
      %c0_13 = arith.constant 0 : index
      %13 = vector.load %arg5[%c0_12, %c0_13] : memref<1x128xf32, #tpu.memory_space<vmem>>, vector<1x128xf32>
      %14 = vector.broadcast %13 : vector<1x128xf32> to vector<128x128xf32>
      %15 = arith.addf %12, %14 : vector<128x128xf32>
      %cst_14 = arith.constant 0.000000e+00 : f32
      %16 = vector.broadcast %cst_14 : f32 to vector<128x128xf32>
      %17 = arith.maximumf %15, %16 : vector<128x128xf32>
      %c0_15 = arith.constant 0 : index
      %c0_16 = arith.constant 0 : index
      %18 = vector.load %arg6[%c0_15, %c0_16] : memref<128x128xf32, #tpu.memory_space<vmem>>, vector<128x128xf32>
      tpu.vector_store %arg6[%c0_15, %c0_16], %17 {strides = array<i32>} : memref<128x128xf32, #tpu.memory_space<vmem>>, vector<128x128xf32>,
    } else {
    }
    return
  }
  func.func @transform_0(%arg0: i32, %arg1: i32, %arg2: i32) -> (i32, i32) {
    %c0_i32 = arith.constant 0 : i32
    return %arg0, %arg2 : i32, i32
  }
  func.func @transform_1(%arg0: i32, %arg1: i32, %arg2: i32) -> (i32, i32) {
    %c0_i32 = arith.constant 0 : i32
    return %arg2, %arg1 : i32, i32
  }
  func.func @transform_2(%arg0: i32, %arg1: i32, %arg2: i32) -> (i32, i32) {
    %c0_i32 = arith.constant 0 : i32
    %c0_i32_0 = arith.constant 0 : i32
    return %c0_i32, %arg1 : i32, i32
  }
  func.func @transform_3(%arg0: i32, %arg1: i32, %arg2: i32) -> (i32, i32) {
    %c0_i32 = arith.constant 0 : i32
    return %arg0, %arg1 : i32, i32
  }
}

module attributes {stable_mosaic.version = 11 : i64} {
  func.func @_matmul_bias_act_kernel(%arg0: i32, %arg1: i32, %arg2: i32, %arg3: memref<32x128xbf16, #tpu.memory_space<vmem>>, %arg4: memref<128x256xbf16, #tpu.memory_space<vmem>>, %arg5: memref<1x256xf32, #tpu.memory_space<vmem>>, %arg6: memref<32x256xf32, #tpu.memory_space<vmem>>, %arg7: memref<32x256xf32, #tpu.memory_space<vmem>>) attributes {dimension_semantics = [#tpu.dimension_semantics<parallel>, #tpu.dimension_semantics<parallel>, #tpu.dimension_semantics<arbitrary>], iteration_bounds = array<i64: 1, 1, 5>, scalar_prefetch = 0 : i64, scratch_operands = 1 : i64, tpu.core_type = #tpu.core_type<tc>, window_params = [{transform_indices = @transform_0, window_bounds = array<i64: 32, 128>}, {transform_indices = @transform_1, window_bounds = array<i64: 128, 256>}, {transform_indices = @transform_2, window_bounds = array<i64: 1, 256>}, {transform_indices = @transform_3, window_bounds = array<i64: 32, 256>}]} {
    %c0_i32 = arith.constant 0 : i32
    %0 = arith.cmpi eq, %arg2, %c0_i32 : i32
    %1 = arith.extui %0 : i1 to i32
    %c0_i32_0 = arith.constant 0 : i32
    %2 = arith.cmpi ne, %1, %c0_i32_0 : i32
    scf.if %2 {
      %cst_9 = arith.constant 0.000000e+00 : f32
      %12 = vector.broadcast %cst_9 : f32 to vector<32x256xf32>
      %c0_10 = arith.constant 0 : index
      %c0_11 = arith.constant 0 : index
      %13 = vector.load %arg7[%c0_10, %c0_11] : memref<32x256xf32, #tpu.memory_space<vmem>>, vector<32x256xf32>
      tpu.vector_store %arg7[%c0_10, %c0_11], %12 {strides = array<i32>} : memref<32x256xf32, #tpu.memory_space<vmem>>, vector<32x256xf32>,
    } else {
    }
    %c0 = arith.constant 0 : index
    %c0_1 = arith.constant 0 : index
    %3 = vector.load %arg7[%c0, %c0_1] : memref<32x256xf32, #tpu.memory_space<vmem>>, vector<32x256xf32>
    %c0_2 = arith.constant 0 : index
    %c0_3 = arith.constant 0 : index
    %4 = vector.load %arg3[%c0_2, %c0_3] : memref<32x128xbf16, #tpu.memory_space<vmem>>, vector<32x128xbf16>
    %c0_4 = arith.constant 0 : index
    %c0_5 = arith.constant 0 : index
    %5 = vector.load %arg4[%c0_4, %c0_5] : memref<128x256xbf16, #tpu.memory_space<vmem>>, vector<128x256xbf16>
    %cst = arith.constant dense<0.000000e+00> : vector<32x256xf32>
    %6 = tpu.matmul %4, %5, %cst {dimension_numbers = #tpu.dot_dimension_numbers<[1], [0], [0], [1], [0, 0, 1, 1], [], []>} : vector<32x128xbf16>, vector<128x256xbf16>, vector<32x256xf32> -> vector<32x256xf32>
    %7 = arith.addf %3, %6 : vector<32x256xf32>
    %c0_6 = arith.constant 0 : index
    %c0_7 = arith.constant 0 : index
    %8 = vector.load %arg7[%c0_6, %c0_7] : memref<32x256xf32, #tpu.memory_space<vmem>>, vector<32x256xf32>
    tpu.vector_store %arg7[%c0_6, %c0_7], %7 {strides = array<i32>} : memref<32x256xf32, #tpu.memory_space<vmem>>, vector<32x256xf32>,
    %c4_i32 = arith.constant 4 : i32
    %9 = arith.cmpi eq, %arg2, %c4_i32 : i32
    %10 = arith.extui %9 : i1 to i32
    %c0_i32_8 = arith.constant 0 : i32
    %11 = arith.cmpi ne, %10, %c0_i32_8 : i32
    scf.if %11 {
      %c0_9 = arith.constant 0 : index
      %c0_10 = arith.constant 0 : index
      %12 = vector.load %arg7[%c0_9, %c0_10] : memref<32x256xf32, #tpu.memory_space<vmem>>, vector<32x256xf32>
      %c0_11 = arith.constant 0 : index
      %c0_12 = arith.constant 0 : index
      %13 = vector.load %arg5[%c0_11, %c0_12] : memref<1x256xf32, #tpu.memory_space<vmem>>, vector<1x256xf32>
      %14 = vector.broadcast %13 : vector<1x256xf32> to vector<32x256xf32>
      %15 = arith.addf %12, %14 : vector<32x256xf32>
      %cst_13 = arith.constant 0.000000e+00 : f32
      %16 = vector.broadcast %cst_13 : f32 to vector<32x256xf32>
      %17 = arith.maximumf %15, %16 : vector<32x256xf32>
      %c0_14 = arith.constant 0 : index
      %c0_15 = arith.constant 0 : index
      %18 = vector.load %arg6[%c0_14, %c0_15] : memref<32x256xf32, #tpu.memory_space<vmem>>, vector<32x256xf32>
      tpu.vector_store %arg6[%c0_14, %c0_15], %17 {strides = array<i32>} : memref<32x256xf32, #tpu.memory_space<vmem>>, vector<32x256xf32>,
    } else {
    }
    return
  }
  func.func @transform_0(%arg0: i32, %arg1: i32, %arg2: i32) -> (i32, i32) {
    %c0_i32 = arith.constant 0 : i32
    return %arg0, %arg2 : i32, i32
  }
  func.func @transform_1(%arg0: i32, %arg1: i32, %arg2: i32) -> (i32, i32) {
    %c0_i32 = arith.constant 0 : i32
    return %arg2, %arg1 : i32, i32
  }
  func.func @transform_2(%arg0: i32, %arg1: i32, %arg2: i32) -> (i32, i32) {
    %c0_i32 = arith.constant 0 : i32
    %c0_i32_0 = arith.constant 0 : i32
    return %c0_i32, %arg1 : i32, i32
  }
  func.func @transform_3(%arg0: i32, %arg1: i32, %arg2: i32) -> (i32, i32) {
    %c0_i32 = arith.constant 0 : i32
    return %arg0, %arg1 : i32, i32
  }
}

module attributes {stable_mosaic.version = 11 : i64} {
  func.func @_matmul_bias_act_kernel(%arg0: i32, %arg1: i32, %arg2: i32, %arg3: memref<8x256xbf16, #tpu.memory_space<vmem>>, %arg4: memref<256x512xbf16, #tpu.memory_space<vmem>>, %arg5: memref<1x512xf32, #tpu.memory_space<vmem>>, %arg6: memref<8x512xf32, #tpu.memory_space<vmem>>, %arg7: memref<8x512xf32, #tpu.memory_space<vmem>>) attributes {dimension_semantics = [#tpu.dimension_semantics<parallel>, #tpu.dimension_semantics<parallel>, #tpu.dimension_semantics<arbitrary>], iteration_bounds = array<i64: 1, 1, 9>, scalar_prefetch = 0 : i64, scratch_operands = 1 : i64, tpu.core_type = #tpu.core_type<tc>, window_params = [{transform_indices = @transform_0, window_bounds = array<i64: 8, 256>}, {transform_indices = @transform_1, window_bounds = array<i64: 256, 512>}, {transform_indices = @transform_2, window_bounds = array<i64: 1, 512>}, {transform_indices = @transform_3, window_bounds = array<i64: 8, 512>}]} {
    %c0_i32 = arith.constant 0 : i32
    %0 = arith.cmpi eq, %arg2, %c0_i32 : i32
    %1 = arith.extui %0 : i1 to i32
    %c0_i32_0 = arith.constant 0 : i32
    %2 = arith.cmpi ne, %1, %c0_i32_0 : i32
    scf.if %2 {
      %cst_9 = arith.constant 0.000000e+00 : f32
      %12 = vector.broadcast %cst_9 : f32 to vector<8x512xf32>
      %c0_10 = arith.constant 0 : index
      %c0_11 = arith.constant 0 : index
      %13 = vector.load %arg7[%c0_10, %c0_11] : memref<8x512xf32, #tpu.memory_space<vmem>>, vector<8x512xf32>
      tpu.vector_store %arg7[%c0_10, %c0_11], %12 {strides = array<i32>} : memref<8x512xf32, #tpu.memory_space<vmem>>, vector<8x512xf32>,
    } else {
    }
    %c0 = arith.constant 0 : index
    %c0_1 = arith.constant 0 : index
    %3 = vector.load %arg7[%c0, %c0_1] : memref<8x512xf32, #tpu.memory_space<vmem>>, vector<8x512xf32>
    %c0_2 = arith.constant 0 : index
    %c0_3 = arith.constant 0 : index
    %4 = vector.load %arg3[%c0_2, %c0_3] : memref<8x256xbf16, #tpu.memory_space<vmem>>, vector<8x256xbf16>
    %c0_4 = arith.constant 0 : index
    %c0_5 = arith.constant 0 : index
    %5 = vector.load %arg4[%c0_4, %c0_5] : memref<256x512xbf16, #tpu.memory_space<vmem>>, vector<256x512xbf16>
    %cst = arith.constant dense<0.000000e+00> : vector<8x512xf32>
    %6 = tpu.matmul %4, %5, %cst {dimension_numbers = #tpu.dot_dimension_numbers<[1], [0], [0], [1], [0, 0, 1, 1], [], []>} : vector<8x256xbf16>, vector<256x512xbf16>, vector<8x512xf32> -> vector<8x512xf32>
    %7 = arith.addf %3, %6 : vector<8x512xf32>
    %c0_6 = arith.constant 0 : index
    %c0_7 = arith.constant 0 : index
    %8 = vector.load %arg7[%c0_6, %c0_7] : memref<8x512xf32, #tpu.memory_space<vmem>>, vector<8x512xf32>
    tpu.vector_store %arg7[%c0_6, %c0_7], %7 {strides = array<i32>} : memref<8x512xf32, #tpu.memory_space<vmem>>, vector<8x512xf32>,
    %c8_i32 = arith.constant 8 : i32
    %9 = arith.cmpi eq, %arg2, %c8_i32 : i32
    %10 = arith.extui %9 : i1 to i32
    %c0_i32_8 = arith.constant 0 : i32
    %11 = arith.cmpi ne, %10, %c0_i32_8 : i32
    scf.if %11 {
      %c0_9 = arith.constant 0 : index
      %c0_10 = arith.constant 0 : index
      %12 = vector.load %arg7[%c0_9, %c0_10] : memref<8x512xf32, #tpu.memory_space<vmem>>, vector<8x512xf32>
      %c0_11 = arith.constant 0 : index
      %c0_12 = arith.constant 0 : index
      %13 = vector.load %arg5[%c0_11, %c0_12] : memref<1x512xf32, #tpu.memory_space<vmem>>, vector<1x512xf32>
      %14 = vector.broadcast %13 : vector<1x512xf32> to vector<8x512xf32>
      %15 = arith.addf %12, %14 : vector<8x512xf32>
      %cst_13 = arith.constant 0.000000e+00 : f32
      %16 = vector.broadcast %cst_13 : f32 to vector<8x512xf32>
      %17 = arith.maximumf %15, %16 : vector<8x512xf32>
      %c0_14 = arith.constant 0 : index
      %c0_15 = arith.constant 0 : index
      %18 = vector.load %arg6[%c0_14, %c0_15] : memref<8x512xf32, #tpu.memory_space<vmem>>, vector<8x512xf32>
      tpu.vector_store %arg6[%c0_14, %c0_15], %17 {strides = array<i32>} : memref<8x512xf32, #tpu.memory_space<vmem>>, vector<8x512xf32>,
    } else {
    }
    return
  }
  func.func @transform_0(%arg0: i32, %arg1: i32, %arg2: i32) -> (i32, i32) {
    %c0_i32 = arith.constant 0 : i32
    return %arg0, %arg2 : i32, i32
  }
  func.func @transform_1(%arg0: i32, %arg1: i32, %arg2: i32) -> (i32, i32) {
    %c0_i32 = arith.constant 0 : i32
    return %arg2, %arg1 : i32, i32
  }
  func.func @transform_2(%arg0: i32, %arg1: i32, %arg2: i32) -> (i32, i32) {
    %c0_i32 = arith.constant 0 : i32
    %c0_i32_0 = arith.constant 0 : i32
    return %c0_i32, %arg1 : i32, i32
  }
  func.func @transform_3(%arg0: i32, %arg1: i32, %arg2: i32) -> (i32, i32) {
    %c0_i32 = arith.constant 0 : i32
    return %arg0, %arg1 : i32, i32
  }
}

module attributes {stable_mosaic.version = 11 : i64} {
  func.func @_matmul_bias_act_kernel(%arg0: i32, %arg1: i32, %arg2: i32, %arg3: memref<8x512xbf16, #tpu.memory_space<vmem>>, %arg4: memref<512x512xbf16, #tpu.memory_space<vmem>>, %arg5: memref<1x512xf32, #tpu.memory_space<vmem>>, %arg6: memref<8x512xf32, #tpu.memory_space<vmem>>, %arg7: memref<8x512xf32, #tpu.memory_space<vmem>>) attributes {dimension_semantics = [#tpu.dimension_semantics<parallel>, #tpu.dimension_semantics<parallel>, #tpu.dimension_semantics<arbitrary>], iteration_bounds = array<i64: 1, 1, 9>, scalar_prefetch = 0 : i64, scratch_operands = 1 : i64, tpu.core_type = #tpu.core_type<tc>, window_params = [{transform_indices = @transform_0, window_bounds = array<i64: 8, 512>}, {transform_indices = @transform_1, window_bounds = array<i64: 512, 512>}, {transform_indices = @transform_2, window_bounds = array<i64: 1, 512>}, {transform_indices = @transform_3, window_bounds = array<i64: 8, 512>}]} {
    %c0_i32 = arith.constant 0 : i32
    %0 = arith.cmpi eq, %arg2, %c0_i32 : i32
    %1 = arith.extui %0 : i1 to i32
    %c0_i32_0 = arith.constant 0 : i32
    %2 = arith.cmpi ne, %1, %c0_i32_0 : i32
    scf.if %2 {
      %cst_9 = arith.constant 0.000000e+00 : f32
      %12 = vector.broadcast %cst_9 : f32 to vector<8x512xf32>
      %c0_10 = arith.constant 0 : index
      %c0_11 = arith.constant 0 : index
      %13 = vector.load %arg7[%c0_10, %c0_11] : memref<8x512xf32, #tpu.memory_space<vmem>>, vector<8x512xf32>
      tpu.vector_store %arg7[%c0_10, %c0_11], %12 {strides = array<i32>} : memref<8x512xf32, #tpu.memory_space<vmem>>, vector<8x512xf32>,
    } else {
    }
    %c0 = arith.constant 0 : index
    %c0_1 = arith.constant 0 : index
    %3 = vector.load %arg7[%c0, %c0_1] : memref<8x512xf32, #tpu.memory_space<vmem>>, vector<8x512xf32>
    %c0_2 = arith.constant 0 : index
    %c0_3 = arith.constant 0 : index
    %4 = vector.load %arg3[%c0_2, %c0_3] : memref<8x512xbf16, #tpu.memory_space<vmem>>, vector<8x512xbf16>
    %c0_4 = arith.constant 0 : index
    %c0_5 = arith.constant 0 : index
    %5 = vector.load %arg4[%c0_4, %c0_5] : memref<512x512xbf16, #tpu.memory_space<vmem>>, vector<512x512xbf16>
    %cst = arith.constant dense<0.000000e+00> : vector<8x512xf32>
    %6 = tpu.matmul %4, %5, %cst {dimension_numbers = #tpu.dot_dimension_numbers<[1], [0], [0], [1], [0, 0, 1, 1], [], []>} : vector<8x512xbf16>, vector<512x512xbf16>, vector<8x512xf32> -> vector<8x512xf32>
    %7 = arith.addf %3, %6 : vector<8x512xf32>
    %c0_6 = arith.constant 0 : index
    %c0_7 = arith.constant 0 : index
    %8 = vector.load %arg7[%c0_6, %c0_7] : memref<8x512xf32, #tpu.memory_space<vmem>>, vector<8x512xf32>
    tpu.vector_store %arg7[%c0_6, %c0_7], %7 {strides = array<i32>} : memref<8x512xf32, #tpu.memory_space<vmem>>, vector<8x512xf32>,
    %c8_i32 = arith.constant 8 : i32
    %9 = arith.cmpi eq, %arg2, %c8_i32 : i32
    %10 = arith.extui %9 : i1 to i32
    %c0_i32_8 = arith.constant 0 : i32
    %11 = arith.cmpi ne, %10, %c0_i32_8 : i32
    scf.if %11 {
      %c0_9 = arith.constant 0 : index
      %c0_10 = arith.constant 0 : index
      %12 = vector.load %arg7[%c0_9, %c0_10] : memref<8x512xf32, #tpu.memory_space<vmem>>, vector<8x512xf32>
      %c0_11 = arith.constant 0 : index
      %c0_12 = arith.constant 0 : index
      %13 = vector.load %arg5[%c0_11, %c0_12] : memref<1x512xf32, #tpu.memory_space<vmem>>, vector<1x512xf32>
      %14 = vector.broadcast %13 : vector<1x512xf32> to vector<8x512xf32>
      %15 = arith.addf %12, %14 : vector<8x512xf32>
      %c0_13 = arith.constant 0 : index
      %c0_14 = arith.constant 0 : index
      %16 = vector.load %arg6[%c0_13, %c0_14] : memref<8x512xf32, #tpu.memory_space<vmem>>, vector<8x512xf32>
      tpu.vector_store %arg6[%c0_13, %c0_14], %15 {strides = array<i32>} : memref<8x512xf32, #tpu.memory_space<vmem>>, vector<8x512xf32>,
    } else {
    }
    return
  }
  func.func @transform_0(%arg0: i32, %arg1: i32, %arg2: i32) -> (i32, i32) {
    %c0_i32 = arith.constant 0 : i32
    return %arg0, %arg2 : i32, i32
  }
  func.func @transform_1(%arg0: i32, %arg1: i32, %arg2: i32) -> (i32, i32) {
    %c0_i32 = arith.constant 0 : i32
    return %arg2, %arg1 : i32, i32
  }
  func.func @transform_2(%arg0: i32, %arg1: i32, %arg2: i32) -> (i32, i32) {
    %c0_i32 = arith.constant 0 : i32
    %c0_i32_0 = arith.constant 0 : i32
    return %c0_i32, %arg1 : i32, i32
  }
  func.func @transform_3(%arg0: i32, %arg1: i32, %arg2: i32) -> (i32, i32) {
    %c0_i32 = arith.constant 0 : i32
    return %arg0, %arg1 : i32, i32
  }
}

</mosaic_0001>

<llo_original>
// kernel: encoder_cell_forward.4
$region0: #{encoder_cell_forward.4}
  #allocation0 [shape = 'u32[]', space=smem, size = 0x4, offset = 0x4, fixed_abs, tag = 'smem constant byte address 0x4 - core index']
  #allocation1 [shape = 'u32[144,128]{1,0:T(1,128)}', space=vmem, size = 0x12000, scoped, tag = 'internal scratch']
  #allocation2 [shape = 'f32[128,128]{1,0:T(8,128)}', space=vmem, size = 0x10000, scoped, tag = 'scratch operand']
  %s0 = inlined_call_operand.vmem [shape: bf16[128,128], index: 0, kind: input, shape index: {}]
  %s1 = inlined_call_operand.vmem [shape: bf16[128,128], index: 1, kind: input, shape index: {}]
  %s2 = inlined_call_operand.vmem [shape: f32[1,128], index: 2, kind: input, shape index: {}]
  %s3 = inlined_call_operand.vmem [shape: f32[128,128], index: 3, kind: output, shape index: {}]
  %s4 = sld [smem:[#allocation0]]
  $region30: #{encoder_cell_forward.4} parent=0
    _
  %s6 = ssub.s32 1, %s4
  %s7 = scalar_select 0, %s6, %s4
  // Predicated region
  $region2: #{encoder_cell_forward.4} parent=0 // pred_check
    _
  $region3: #{encoder_cell_forward.4} parent=0 // pred_check_branch
    %9 = sbr.rel (0) target = $region5
  $region4: #{encoder_cell_forward.4} parent=0 // pred_region
    _
  $region5: #{encoder_cell_forward.4} parent=0 // pred_fallthru
    _
  // Predicated region
  $region6: #{encoder_cell_forward.4} parent=0 // pred_check
    _
  $region7: #{encoder_cell_forward.4} parent=0 // pred_check_branch
    %11 = sbr.rel (0) target = $region9
  $region8: #{encoder_cell_forward.4} parent=0 // pred_region
    _
  $region9: #{encoder_cell_forward.4} parent=0 // pred_fallthru
    _
  // Predicated region
  $region10: #{encoder_cell_forward.4} parent=0 // pred_check
    _
  $region11: #{encoder_cell_forward.4} parent=0 // pred_check_branch
    %13 = sbr.rel (0) target = $region13
  $region12: #{encoder_cell_forward.4} parent=0 // pred_region
    _
  $region13: #{encoder_cell_forward.4} parent=0 // pred_fallthru
    _
  %p15 = scmp.eq.s32.totalorder 0, 0
  // Predicated region
  $region14: #{encoder_cell_forward.4} parent=0 // pred_check
    %p16 = pneg %p15
  $region15: #{encoder_cell_forward.4} parent=0 // pred_check_branch
    %18 = sbr.rel (%p16) target = $region17
  $region16: #{encoder_cell_forward.4} parent=0 // pred_region
    %19 = vst [vmem:[#allocation2] sm:$0xff] 0.0
    %20 = vst [vmem:[#allocation2 + $0x8] sm:$0xff] 0.0
    %21 = vst [vmem:[#allocation2 + $0x10] sm:$0xff] 0.0
    %22 = vst [vmem:[#allocation2 + $0x18] sm:$0xff] 0.0
    %23 = vst [vmem:[#allocation2 + $0x20] sm:$0xff] 0.0
    %24 = vst [vmem:[#allocation2 + $0x28] sm:$0xff] 0.0
    %25 = vst [vmem:[#allocation2 + $0x30] sm:$0xff] 0.0
    %26 = vst [vmem:[#allocation2 + $0x38] sm:$0xff] 0.0
    %27 = vst [vmem:[#allocation2 + $0x40] sm:$0xff] 0.0
    %28 = vst [vmem:[#allocation2 + $0x48] sm:$0xff] 0.0
    %29 = vst [vmem:[#allocation2 + $0x50] sm:$0xff] 0.0
    %30 = vst [vmem:[#allocation2 + $0x58] sm:$0xff] 0.0
    %31 = vst [vmem:[#allocation2 + $0x60] sm:$0xff] 0.0
    %32 = vst [vmem:[#allocation2 + $0x68] sm:$0xff] 0.0
    %33 = vst [vmem:[#allocation2 + $0x70] sm:$0xff] 0.0
    %34 = vst [vmem:[#allocation2 + $0x78] sm:$0xff] 0.0
  $region17: #{encoder_cell_forward.4} parent=0 // pred_fallthru
    _
  %v35 = vld [vmem:[#allocation2] sm:$0xff]
  %v36 = vld [vmem:[#allocation2 + $0x8] sm:$0xff]
  %v37 = vld [vmem:[#allocation2 + $0x10] sm:$0xff]
  %v38 = vld [vmem:[#allocation2 + $0x18] sm:$0xff]
  %v39 = vld [vmem:[#allocation2 + $0x20] sm:$0xff]
  %v40 = vld [vmem:[#allocation2 + $0x28] sm:$0xff]
  %v41 = vld [vmem:[#allocation2 + $0x30] sm:$0xff]
  %v42 = vld [vmem:[#allocation2 + $0x38] sm:$0xff]
  %v43 = vld [vmem:[#allocation2 + $0x40] sm:$0xff]
  %v44 = vld [vmem:[#allocation2 + $0x48] sm:$0xff]
  %v45 = vld [vmem:[#allocation2 + $0x50] sm:$0xff]
  %v46 = vld [vmem:[#allocation2 + $0x58] sm:$0xff]
  %v47 = vld [vmem:[#allocation2 + $0x60] sm:$0xff]
  %v48 = vld [vmem:[#allocation2 + $0x68] sm:$0xff]
  %v49 = vld [vmem:[#allocation2 + $0x70] sm:$0xff]
  %v50 = vld [vmem:[#allocation2 + $0x78] sm:$0xff]
  %v51 = vld [vmem:[%s0] sm:$0xf]
  %v52 = vld [vmem:[%s0 + $0x4] sm:$0xf]
  %v53 = vld [vmem:[%s0 + $0x8] sm:$0xf]
  %v54 = vld [vmem:[%s0 + $0xc] sm:$0xf]
  %v55 = vld [vmem:[%s0 + $0x10] sm:$0xf]
  %v56 = vld [vmem:[%s0 + $0x14] sm:$0xf]
  %v57 = vld [vmem:[%s0 + $0x18] sm:$0xf]
  %v58 = vld [vmem:[%s0 + $0x1c] sm:$0xf]
  %v59 = vld [vmem:[%s0 + $0x20] sm:$0xf]
  %v60 = vld [vmem:[%s0 + $0x24] sm:$0xf]
  %v61 = vld [vmem:[%s0 + $0x28] sm:$0xf]
  %v62 = vld [vmem:[%s0 + $0x2c] sm:$0xf]
  %v63 = vld [vmem:[%s0 + $0x30] sm:$0xf]
  %v64 = vld [vmem:[%s0 + $0x34] sm:$0xf]
  %v65 = vld [vmem:[%s0 + $0x38] sm:$0xf]
  %v66 = vld [vmem:[%s0 + $0x3c] sm:$0xf]
  %v67 = vld [vmem:[%s1] sm:$0xf]
  %v68 = vld [vmem:[%s1 + $0x4] sm:$0xf]
  %v69 = vld [vmem:[%s1 + $0x8] sm:$0xf]
  %v70 = vld [vmem:[%s1 + $0xc] sm:$0xf]
  %v71 = vld [vmem:[%s1 + $0x10] sm:$0xf]
  %v72 = vld [vmem:[%s1 + $0x14] sm:$0xf]
  %v73 = vld [vmem:[%s1 + $0x18] sm:$0xf]
  %v74 = vld [vmem:[%s1 + $0x1c] sm:$0xf]
  %v75 = vld [vmem:[%s1 + $0x20] sm:$0xf]
  %v76 = vld [vmem:[%s1 + $0x24] sm:$0xf]
  %v77 = vld [vmem:[%s1 + $0x28] sm:$0xf]
  %v78 = vld [vmem:[%s1 + $0x2c] sm:$0xf]
  %v79 = vld [vmem:[%s1 + $0x30] sm:$0xf]
  %v80 = vld [vmem:[%s1 + $0x34] sm:$0xf]
  %v81 = vld [vmem:[%s1 + $0x38] sm:$0xf]
  %v82 = vld [vmem:[%s1 + $0x3c] sm:$0xf]
  %v99 = vunpack.c.l.b16 %v51
  %v100 = vunpack.c.l.b16 %v52
  %v101 = vunpack.c.l.b16 %v53
  %v102 = vunpack.c.l.b16 %v54
  %v103 = vunpack.c.l.b16 %v55
  %v104 = vunpack.c.l.b16 %v56
  %v105 = vunpack.c.l.b16 %v57
  %v106 = vunpack.c.l.b16 %v58
  %v107 = vunpack.c.l.b16 %v59
  %v108 = vunpack.c.l.b16 %v60
  %v109 = vunpack.c.l.b16 %v61
  %v110 = vunpack.c.l.b16 %v62
  %v111 = vunpack.c.l.b16 %v63
  %v112 = vunpack.c.l.b16 %v64
  %v113 = vunpack.c.l.b16 %v65
  %v114 = vunpack.c.l.b16 %v66
  %v115 = vpack.c.b16 %v100, %v99
  %v116 = vpack.c.b16 %v102, %v101
  %v117 = vpack.c.b16 %v104, %v103
  %v118 = vpack.c.b16 %v106, %v105
  %v119 = vpack.c.b16 %v108, %v107
  %v120 = vpack.c.b16 %v110, %v109
  %v121 = vpack.c.b16 %v112, %v111
  %v122 = vpack.c.b16 %v114, %v113
  %v147 = vunpack.c.l.b16 %v67
  %v148 = vunpack.c.l.b16 %v68
  %v149 = vunpack.c.l.b16 %v69
  %v150 = vunpack.c.l.b16 %v70
  %v151 = vunpack.c.l.b16 %v71
  %v152 = vunpack.c.l.b16 %v72
  %v153 = vunpack.c.l.b16 %v73
  %v154 = vunpack.c.l.b16 %v74
  %v155 = vunpack.c.l.b16 %v75
  %v156 = vunpack.c.l.b16 %v76
  %v157 = vunpack.c.l.b16 %v77
  %v158 = vunpack.c.l.b16 %v78
  %v159 = vunpack.c.l.b16 %v79
  %v160 = vunpack.c.l.b16 %v80
  %v161 = vunpack.c.l.b16 %v81
  %v162 = vunpack.c.l.b16 %v82
  %v163 = vpack.c.b16 %v148, %v147
  %v164 = vpack.c.b16 %v150, %v149
  %v165 = vpack.c.b16 %v152, %v151
  %v166 = vpack.c.b16 %v154, %v153
  %v167 = vpack.c.b16 %v156, %v155
  %v168 = vpack.c.b16 %v158, %v157
  %v169 = vpack.c.b16 %v160, %v159
  %v170 = vpack.c.b16 %v162, %v161
  %179 = vmatprep.subr.bf16.mxu0 0
  %180 = vmatpush1.bf16.msra.mxu0 %v170
  %181 = vmatprep.subr.bf16.mxu0 0
  %182 = vmatpush1.bf16.msra.mxu0 %v169
  %183 = vmatprep.subr.bf16.mxu0 0
  %184 = vmatpush1.bf16.msra.mxu0 %v168
  %185 = vmatprep.subr.bf16.mxu0 0
  %186 = vmatpush1.bf16.msra.mxu0 %v167
  %187 = vmatprep.subr.bf16.mxu0 0
  %188 = vmatpush1.bf16.msra.mxu0 %v166
  %189 = vmatprep.subr.bf16.mxu0 0
  %190 = vmatpush1.bf16.msra.mxu0 %v165
  %191 = vmatprep.subr.bf16.mxu0 0
  %192 = vmatpush1.bf16.msra.mxu0 %v164
  %193 = vmatprep.subr.bf16.mxu0 0
  %194 = vmatpush1.bf16.msra.mxu0 %v163
  %195 = vmatprep.subr.bf16.mxu0 0
  %196 = vmatpush2.bf16.msra.mxu0 0
  %197 = vmatprep.subr.bf16.mxu0 0
  %198 = vmatpush2.bf16.msra.mxu0 0
  %199 = vmatprep.subr.bf16.mxu0 0
  %200 = vmatpush2.bf16.msra.mxu0 0
  %201 = vmatprep.subr.bf16.mxu0 0
  %202 = vmatpush2.bf16.msra.mxu0 0
  %203 = vmatprep.subr.bf16.mxu0 0
  %204 = vmatpush2.bf16.msra.mxu0 0
  %205 = vmatprep.subr.bf16.mxu0 0
  %206 = vmatpush2.bf16.msra.mxu0 0
  %207 = vmatprep.subr.bf16.mxu0 0
  %208 = vmatpush2.bf16.msra.mxu0 0
  %209 = vmatprep.subr.bf16.mxu0 0
  %210 = vmatpush2.bf16.msra.mxu0 0
  %211 = vmatprep.mubr.bf16.mxu0 0
  %212 = vmatmul.mubr.bf16.gmra.mxu0 %v115
  %v213 = vpop.f32.mrf.mxu0
  %v214 = vadd.f32 0.0, %v213
  %v215 = vpop.f32.mrf.mxu0
  %v216 = vpop.f32.mrf.mxu0
  %v217 = vadd.f32 0.0, %v216
  %v218 = vpop.f32.mrf.mxu0
  %219 = vmatprep.mubr.bf16.mxu0 0
  %220 = vmatmul.mubr.bf16.gmra.mxu0 %v116
  %v221 = vpop.f32.mrf.mxu0
  %v222 = vadd.f32 0.0, %v221
  %v223 = vpop.f32.mrf.mxu0
  %v224 = vpop.f32.mrf.mxu0
  %v225 = vadd.f32 0.0, %v224
  %v226 = vpop.f32.mrf.mxu0
  %227 = vmatprep.mubr.bf16.mxu0 0
  %228 = vmatmul.mubr.bf16.gmra.mxu0 %v117
  %v229 = vpop.f32.mrf.mxu0
  %v230 = vadd.f32 0.0, %v229
  %v231 = vpop.f32.mrf.mxu0
  %v232 = vpop.f32.mrf.mxu0
  %v233 = vadd.f32 0.0, %v232
  %v234 = vpop.f32.mrf.mxu0
  %235 = vmatprep.mubr.bf16.mxu0 0
  %236 = vmatmul.mubr.bf16.gmra.mxu0 %v118
  %v237 = vpop.f32.mrf.mxu0
  %v238 = vadd.f32 0.0, %v237
  %v239 = vpop.f32.mrf.mxu0
  %v240 = vpop.f32.mrf.mxu0
  %v241 = vadd.f32 0.0, %v240
  %v242 = vpop.f32.mrf.mxu0
  %243 = vmatprep.mubr.bf16.mxu0 0
  %244 = vmatmul.mubr.bf16.gmra.mxu0 %v119
  %v245 = vpop.f32.mrf.mxu0
  %v246 = vadd.f32 0.0, %v245
  %v247 = vpop.f32.mrf.mxu0
  %v248 = vpop.f32.mrf.mxu0
  %v249 = vadd.f32 0.0, %v248
  %v250 = vpop.f32.mrf.mxu0
  %251 = vmatprep.mubr.bf16.mxu0 0
  %252 = vmatmul.mubr.bf16.gmra.mxu0 %v120
  %v253 = vpop.f32.mrf.mxu0
  %v254 = vadd.f32 0.0, %v253
  %v255 = vpop.f32.mrf.mxu0
  %v256 = vpop.f32.mrf.mxu0
  %v257 = vadd.f32 0.0, %v256
  %v258 = vpop.f32.mrf.mxu0
  %259 = vmatprep.mubr.bf16.mxu0 0
  %260 = vmatmul.mubr.bf16.gmra.mxu0 %v121
  %v261 = vpop.f32.mrf.mxu0
  %v262 = vadd.f32 0.0, %v261
  %v263 = vpop.f32.mrf.mxu0
  %v264 = vpop.f32.mrf.mxu0
  %v265 = vadd.f32 0.0, %v264
  %v266 = vpop.f32.mrf.mxu0
  %267 = vmatprep.mubr.bf16.mxu0 0
  %268 = vmatmul.mubr.bf16.gmra.mxu0 %v122
  %v269 = vpop.f32.mrf.mxu0
  %v270 = vadd.f32 0.0, %v269
  %v271 = vpop.f32.mrf.mxu0
  %v272 = vpop.f32.mrf.mxu0
  %v273 = vadd.f32 0.0, %v272
  %v274 = vpop.f32.mrf.mxu0
  %275 = vdwg.mxu0
  %v276 = vadd.f32 %v35, %v214
  %v277 = vadd.f32 %v36, %v217
  %v278 = vadd.f32 %v37, %v222
  %v279 = vadd.f32 %v38, %v225
  %v280 = vadd.f32 %v39, %v230
  %v281 = vadd.f32 %v40, %v233
  %v282 = vadd.f32 %v41, %v238
  %v283 = vadd.f32 %v42, %v241
  %v284 = vadd.f32 %v43, %v246
  %v285 = vadd.f32 %v44, %v249
  %v286 = vadd.f32 %v45, %v254
  %v287 = vadd.f32 %v46, %v257
  %v288 = vadd.f32 %v47, %v262
  %v289 = vadd.f32 %v48, %v265
  %v290 = vadd.f32 %v49, %v270
  %v291 = vadd.f32 %v50, %v273
  %292 = vst [vmem:[#allocation2] sm:$0xff] %v276
  %293 = vst [vmem:[#allocation2 + $0x8] sm:$0xff] %v277
  %294 = vst [vmem:[#allocation2 + $0x10] sm:$0xff] %v278
  %295 = vst [vmem:[#allocation2 + $0x18] sm:$0xff] %v279
  %296 = vst [vmem:[#allocation2 + $0x20] sm:$0xff] %v280
  %297 = vst [vmem:[#allocation2 + $0x28] sm:$0xff] %v281
  %298 = vst [vmem:[#allocation2 + $0x30] sm:$0xff] %v282
  %299 = vst [vmem:[#allocation2 + $0x38] sm:$0xff] %v283
  %300 = vst [vmem:[#allocation2 + $0x40] sm:$0xff] %v284
  %301 = vst [vmem:[#allocation2 + $0x48] sm:$0xff] %v285
  %302 = vst [vmem:[#allocation2 + $0x50] sm:$0xff] %v286
  %303 = vst [vmem:[#allocation2 + $0x58] sm:$0xff] %v287
  %304 = vst [vmem:[#allocation2 + $0x60] sm:$0xff] %v288
  %305 = vst [vmem:[#allocation2 + $0x68] sm:$0xff] %v289
  %306 = vst [vmem:[#allocation2 + $0x70] sm:$0xff] %v290
  %307 = vst [vmem:[#allocation2 + $0x78] sm:$0xff] %v291
  // Predicated region
  $region18: #{encoder_cell_forward.4} parent=0 // pred_check
    %p308 = pneg %p15
  $region19: #{encoder_cell_forward.4} parent=0 // pred_check_branch
    %310 = sbr.rel (%p308) target = $region21
  $region20: #{encoder_cell_forward.4} parent=0 // pred_region
    %v311 = vld [vmem:[#allocation2] sm:$0xff]
    %v312 = vld [vmem:[#allocation2 + $0x8] sm:$0xff]
    %v313 = vld [vmem:[#allocation2 + $0x10] sm:$0xff]
    %v314 = vld [vmem:[#allocation2 + $0x18] sm:$0xff]
    %v315 = vld [vmem:[#allocation2 + $0x20] sm:$0xff]
    %v316 = vld [vmem:[#allocation2 + $0x28] sm:$0xff]
    %v317 = vld [vmem:[#allocation2 + $0x30] sm:$0xff]
    %v318 = vld [vmem:[#allocation2 + $0x38] sm:$0xff]
    %v319 = vld [vmem:[#allocation2 + $0x40] sm:$0xff]
    %v320 = vld [vmem:[#allocation2 + $0x48] sm:$0xff]
    %v321 = vld [vmem:[#allocation2 + $0x50] sm:$0xff]
    %v322 = vld [vmem:[#allocation2 + $0x58] sm:$0xff]
    %v323 = vld [vmem:[#allocation2 + $0x60] sm:$0xff]
    %v324 = vld [vmem:[#allocation2 + $0x68] sm:$0xff]
    %v325 = vld [vmem:[#allocation2 + $0x70] sm:$0xff]
    %v326 = vld [vmem:[#allocation2 + $0x78] sm:$0xff]
    %v327 = vld [vmem:[%s2] sm:$0x1]
    %v329 = vlaneseq
    %v330 = vshrl.u32 %v329, 7
    %v331 = vsub.s32 0, %v330
    %v332 = vrot.slane %v327, %v331
    %v334 = vadd.f32 %v311, %v332
    %v335 = vadd.f32 %v312, %v332
    %v336 = vadd.f32 %v313, %v332
    %v337 = vadd.f32 %v314, %v332
    %v338 = vadd.f32 %v315, %v332
    %v339 = vadd.f32 %v316, %v332
    %v340 = vadd.f32 %v317, %v332
    %v341 = vadd.f32 %v318, %v332
    %v342 = vadd.f32 %v319, %v332
    %v343 = vadd.f32 %v320, %v332
    %v344 = vadd.f32 %v321, %v332
    %v345 = vadd.f32 %v322, %v332
    %v346 = vadd.f32 %v323, %v332
    %v347 = vadd.f32 %v324, %v332
    %v348 = vadd.f32 %v325, %v332
    %v349 = vadd.f32 %v326, %v332
    %v350 = vmax.f32 %v334, 0.0
    %v351 = vmax.f32 %v335, 0.0
    %v352 = vmax.f32 %v336, 0.0
    %v353 = vmax.f32 %v337, 0.0
    %v354 = vmax.f32 %v338, 0.0
    %v355 = vmax.f32 %v339, 0.0
    %v356 = vmax.f32 %v340, 0.0
    %v357 = vmax.f32 %v341, 0.0
    %v358 = vmax.f32 %v342, 0.0
    %v359 = vmax.f32 %v343, 0.0
    %v360 = vmax.f32 %v344, 0.0
    %v361 = vmax.f32 %v345, 0.0
    %v362 = vmax.f32 %v346, 0.0
    %v363 = vmax.f32 %v347, 0.0
    %v364 = vmax.f32 %v348, 0.0
    %v365 = vmax.f32 %v349, 0.0
    %366 = vst [vmem:[%s3] sm:$0xff] %v350
    %367 = vst [vmem:[%s3 + $0x8] sm:$0xff] %v351
    %368 = vst [vmem:[%s3 + $0x10] sm:$0xff] %v352
    %369 = vst [vmem:[%s3 + $0x18] sm:$0xff] %v353
    %370 = vst [vmem:[%s3 + $0x20] sm:$0xff] %v354
    %371 = vst [vmem:[%s3 + $0x28] sm:$0xff] %v355
    %372 = vst [vmem:[%s3 + $0x30] sm:$0xff] %v356
    %373 = vst [vmem:[%s3 + $0x38] sm:$0xff] %v357
    %374 = vst [vmem:[%s3 + $0x40] sm:$0xff] %v358
    %375 = vst [vmem:[%s3 + $0x48] sm:$0xff] %v359
    %376 = vst [vmem:[%s3 + $0x50] sm:$0xff] %v360
    %377 = vst [vmem:[%s3 + $0x58] sm:$0xff] %v361
    %378 = vst [vmem:[%s3 + $0x60] sm:$0xff] %v362
    %379 = vst [vmem:[%s3 + $0x68] sm:$0xff] %v363
    %380 = vst [vmem:[%s3 + $0x70] sm:$0xff] %v364
    %381 = vst [vmem:[%s3 + $0x78] sm:$0xff] %v365
  $region21: #{encoder_cell_forward.4} parent=0 // pred_fallthru
    _
  // Predicated region
  $region22: #{encoder_cell_forward.4} parent=0 // pred_check
    _
  $region23: #{encoder_cell_forward.4} parent=0 // pred_check_branch
    %383 = sbr.rel (0) target = $region25
  $region24: #{encoder_cell_forward.4} parent=0 // pred_region
    _
  $region25: #{encoder_cell_forward.4} parent=0 // pred_fallthru
    _
  // Predicated region
  $region26: #{encoder_cell_forward.4} parent=0 // pred_check
    _
  $region27: #{encoder_cell_forward.4} parent=0 // pred_check_branch
    %385 = sbr.rel (0) target = $region29
  $region28: #{encoder_cell_forward.4} parent=0 // pred_region
    _
  $region29: #{encoder_cell_forward.4} parent=0 // pred_fallthru
    _

// kernel: encoder_cell_forward.5
$region0: #{encoder_cell_forward.5}
  #allocation0 [shape = 'u32[]', space=smem, size = 0x4, offset = 0x4, fixed_abs, tag = 'smem constant byte address 0x4 - core index']
  #allocation1 [shape = 'u32[144,128]{1,0:T(1,128)}', space=vmem, size = 0x12000, scoped, tag = 'internal scratch']
  #allocation2 [shape = 'f32[32,256]{1,0:T(8,128)}', space=vmem, size = 0x8000, scoped, tag = 'scratch operand']
  %s0 = inlined_call_operand.vmem [shape: bf16[32,640], index: 0, kind: input, shape index: {}]
  %s1 = inlined_call_operand.vmem [shape: bf16[640,256], index: 1, kind: input, shape index: {}]
  %s2 = inlined_call_operand.hbm [shape: f32[1,256], index: 2, kind: input, shape index: {}]
  %s3 = inlined_call_operand.vmem [shape: f32[32,256], index: 3, kind: output, shape index: {}]
  %s4 = sld [smem:[#allocation0]]
  $region98: #{encoder_cell_forward.5} parent=0
    _
  %s6 = ssub.s32 1, %s4
  %s7 = scalar_select 0, %s6, %s4
  $region1: #{encoder_cell_forward.5} parent=0
    #allocation3 [shape = 'u8[16384]{0}', space=vmem, size = 0x4000, scoped, tag = 'input window, operand 0']
    #allocation4 [shape = 'u8[1024]{0}', space=vmem, size = 0x400, scoped, tag = 'input window, operand 2, single buffered']
    #allocation5 [shape = 's32[2]{0}', space=sflag, size = 0x8, scoped, tag = 'scoped memory for encoder_cell_forward.5']
    %8 = vsyncpa [#allocation5], 0
    loop: start=0, step=1, limit=7
    $region2: #{encoder_cell_forward.5} parent=1 // loop_pre_header
      _
    $region3: #{encoder_cell_forward.5} parent=1 // loop_header
      %s10 = sphi 0, %s14
      %p11 = scmp.ge.s32.totalorder %s10, 7
      %s17 = sphi 0, %s36
      %s18 = sphi 0, %s32
      %s19 = sphi 0, %s28
      %s20 = sphi 0, %s17
      %s21 = sphi 0, %s18
      %s22 = sphi 0, %s19
      %s23 = sphi 0, %s20
      %s24 = sphi 0, %s21
      %s25 = sphi 0, %s22
      %s41 = sphi 0, %s43
      %s44 = sphi 0, %s41
      %s45 = sphi 0, %s44
      %s61 = sphi 0, %s45
      %s69 = sphi 0, %s71
      %s72 = sphi 0, %s69
      %s73 = sphi 0, %s72
      %s89 = sphi 0, %s73
      %s95 = sphi 0, %s97
      %s98 = sphi 0, %s95
      %s99 = sphi 0, %s98
      %s115 = sphi 0, %s99
      %s123 = sphi 0, %s125
      %s126 = sphi 0, %s123
      %s127 = sphi 0, %s126
      %s143 = sphi 0, %s127
    $region4: #{encoder_cell_forward.5} parent=1 // loop_header_branch
      %13 = sbr.rel (%p11) target = $region8
    $region5: #{encoder_cell_forward.5} parent=1 // loop_body
      %s15 = ssub.s32 %s10, 1
      %s16 = ssub.s32 %s10, 2
      %s26 = sadd.s32 1, %s19
      %p27 = scmp.ge.s32.totalorder %s26, 5
      %s28 = scalar_select %p27, 0, %s26
      %s29 = sadd.s32 1, %s18
      %s30 = scalar_select %p27, %s29, %s18
      %p31 = scmp.ge.s32.totalorder %s30, 1
      %s32 = scalar_select %p31, 0, %s30
      %s33 = sadd.s32 1, %s17
      %s34 = scalar_select %p31, %s33, %s17
      %p35 = scmp.ge.s32.totalorder %s34, 1
      %s36 = scalar_select %p35, 0, %s34
      %s37 = ssub.s32 %s17, %s36
      %s38 = ssub.s32 %s19, %s28
      %s39 = sor.u32 %s37, %s38
      %p40 = scmp.eq.s32.totalorder %s39, 0
      %s42 = sadd.s32 %s41, 1
      %s43 = scalar_select %p40, %s41, %s42
      %p46 = pneg %p40
      %p47 = scmp.eq.s32.totalorder %s10, 4
      %p48 = por %p46, %p47
      %p49 = scmp.ne.s32.totalorder %s41, %s44
      %p50 = scmp.eq.s32.totalorder %s10, 0
      %p51 = por %p49, %p50
      %p52 = scmp.ne.s32.totalorder %s41, %s44
      %p53 = scmp.eq.s32.totalorder %s15, 4
      %p54 = por %p52, %p53
      %p55 = scmp.ne.s32.totalorder %s44, %s45
      %p56 = scmp.eq.s32.totalorder %s15, 0
      %p57 = por %p55, %p56
      %p58 = scmp.ne.s32.totalorder %s44, %s45
      %p59 = scmp.eq.s32.totalorder %s16, 4
      %p60 = por %p58, %p59
      %p62 = scmp.ne.s32.totalorder %s45, %s61
      %p63 = scmp.eq.s32.totalorder %s16, 0
      %p64 = por %p62, %p63
      %s65 = ssub.s32 %s19, %s28
      %s66 = ssub.s32 %s18, %s32
      %s67 = sor.u32 %s65, %s66
      %p68 = scmp.eq.s32.totalorder %s67, 0
      %s70 = sadd.s32 %s69, 1
      %s71 = scalar_select %p68, %s69, %s70
      %p74 = pneg %p68
      %p75 = scmp.eq.s32.totalorder %s10, 4
      %p76 = por %p74, %p75
      %p77 = scmp.ne.s32.totalorder %s69, %s72
      %p78 = scmp.eq.s32.totalorder %s10, 0
      %p79 = por %p77, %p78
      %p80 = scmp.ne.s32.totalorder %s69, %s72
      %p81 = scmp.eq.s32.totalorder %s15, 4
      %p82 = por %p80, %p81
      %p83 = scmp.ne.s32.totalorder %s72, %s73
      %p84 = scmp.eq.s32.totalorder %s15, 0
      %p85 = por %p83, %p84
      %p86 = scmp.ne.s32.totalorder %s72, %s73
      %p87 = scmp.eq.s32.totalorder %s16, 4
      %p88 = por %p86, %p87
      %p90 = scmp.ne.s32.totalorder %s73, %s89
      %p91 = scmp.eq.s32.totalorder %s16, 0
      %p92 = por %p90, %p91
      %s93 = ssub.s32 %s18, %s32
      %p94 = scmp.eq.s32.totalorder %s93, 0
      %s96 = sadd.s32 %s95, 1
      %s97 = scalar_select %p94, %s95, %s96
      %p100 = pneg %p94
      %p101 = scmp.eq.s32.totalorder %s10, 4
      %p102 = por %p100, %p101
      %p103 = scmp.ne.s32.totalorder %s95, %s98
      %p104 = scmp.eq.s32.totalorder %s10, 0
      %p105 = por %p103, %p104
      %p106 = scmp.ne.s32.totalorder %s95, %s98
      %p107 = scmp.eq.s32.totalorder %s15, 4
      %p108 = por %p106, %p107
      %p109 = scmp.ne.s32.totalorder %s98, %s99
      %p110 = scmp.eq.s32.totalorder %s15, 0
      %p111 = por %p109, %p110
      %p112 = scmp.ne.s32.totalorder %s98, %s99
      %p113 = scmp.eq.s32.totalorder %s16, 4
      %p114 = por %p112, %p113
      %p116 = scmp.ne.s32.totalorder %s99, %s115
      %p117 = scmp.eq.s32.totalorder %s16, 0
      %p118 = por %p116, %p117
      %s119 = ssub.s32 %s17, %s36
      %s120 = ssub.s32 %s18, %s32
      %s121 = sor.u32 %s119, %s120
      %p122 = scmp.eq.s32.totalorder %s121, 0
      %s124 = sadd.s32 %s123, 1
      %s125 = scalar_select %p122, %s123, %s124
      %p128 = pneg %p122
      %p129 = scmp.eq.s32.totalorder %s10, 4
      %p130 = por %p128, %p129
      %p131 = scmp.ne.s32.totalorder %s123, %s126
      %p132 = scmp.eq.s32.totalorder %s10, 0
      %p133 = por %p131, %p132
      %p134 = scmp.ne.s32.totalorder %s123, %s126
      %p135 = scmp.eq.s32.totalorder %s15, 4
      %p136 = por %p134, %p135
      %p137 = scmp.ne.s32.totalorder %s126, %s127
      %p138 = scmp.eq.s32.totalorder %s15, 0
      %p139 = por %p137, %p138
      %p140 = scmp.ne.s32.totalorder %s126, %s127
      %p141 = scmp.eq.s32.totalorder %s16, 4
      %p142 = por %p140, %p141
      %p144 = scmp.ne.s32.totalorder %s127, %s143
      %p145 = scmp.eq.s32.totalorder %s16, 0
      %p146 = por %p144, %p145
      %p147 = scmp.le.s32.totalorder 1, %s10
      %p148 = scmp.lt.s32.totalorder %s10, 6
      %p149 = pnand %p147, %p148
      %p150 = pneg %p149
      // Predicated region
      $region9: #{encoder_cell_forward.5} parent=5 // pred_check
        _
      $region10: #{encoder_cell_forward.5} parent=5 // pred_check_branch
        %152 = sbr.rel (%p149) target = $region12
      $region11: #{encoder_cell_forward.5} parent=5 // pred_region
        %s153 = ssub.s32 %s10, 1
        // Predicated region
        $region13: #{encoder_cell_forward.5} parent=11 // pred_check
          %p154 = pneg %p111
        $region14: #{encoder_cell_forward.5} parent=11 // pred_check_branch
          %156 = sbr.rel (%p154) target = $region16
        $region15: #{encoder_cell_forward.5} parent=11 // pred_region
          %s157 = smul.u32 2, %s21
          %s159 = ssub.s32 32, 32
          %160 = vsyncadd [#allocation5], %s159
          %s161 = smul.addr %s157, 16
          %s162 = scalar_lea.hbm %s2, %s161
          %s164 = sshll.u32 [#allocation4], 4
          %s165 = int_to_ptr.vmem [resolvable:$true] %s164
          %167 = dma.hbm_to_vmem [thread:$0]  %s162, 32, %s165, [#allocation5]
        $region16: #{encoder_cell_forward.5} parent=11 // pred_fallthru
          _
      $region12: #{encoder_cell_forward.5} parent=5 // pred_fallthru
        _
      %p168 = scmp.lt.s32.totalorder %s10, 5
      // Predicated region
      $region17: #{encoder_cell_forward.5} parent=5 // pred_check
        %p169 = pneg %p168
      $region18: #{encoder_cell_forward.5} parent=5 // pred_check_branch
        %171 = sbr.rel (%p169) target = $region20
      $region19: #{encoder_cell_forward.5} parent=5 // pred_region
        // Predicated region
        $region21: #{encoder_cell_forward.5} parent=19 // pred_check
          %p172 = pneg %p51
        $region22: #{encoder_cell_forward.5} parent=19 // pred_check_branch
          %174 = sbr.rel (%p172) target = $region24
        $region23: #{encoder_cell_forward.5} parent=19 // pred_region
          %s175 = sand.u32 %s41, 1
          %s176 = sand.u32 %s41, 1
          %s177 = smul.addr %s176, 16
          %s178 = scalar_lea.vmem [#allocation3], %s177
          %s179 = smul.u32 4, %s17
          %s180 = smul.addr %s179, 5
          %s181 = sadd.s32 %s19, %s180
          %s182 = smul.addr %s181, 4
          %s183 = scalar_lea.vmem %s0, %s182
          // Predicated region
          $region25: #{encoder_cell_forward.5} parent=23 // pred_check
            _
          $region26: #{encoder_cell_forward.5} parent=23 // pred_check_branch
            %185 = sbr.rel (0) target = $region28
          $region27: #{encoder_cell_forward.5} parent=23 // pred_region
            // Predicated region
            $region29: #{encoder_cell_forward.5} parent=27 // pred_check
              _
            $region30: #{encoder_cell_forward.5} parent=27 // pred_check_branch
              %187 = sbr.rel target = $region32
            $region31: #{encoder_cell_forward.5} parent=27 // pred_region
              // Predicated region
              $region44: #{encoder_cell_forward.5} parent=31 // pred_check
                _
              $region45: #{encoder_cell_forward.5} parent=31 // pred_check_branch
                %209 = sbr.rel (0) target = $region47
              $region46: #{encoder_cell_forward.5} parent=31 // pred_region
                loop: start=0, step=1, limit=1
                $region48: #{encoder_cell_forward.5} parent=46 // loop_pre_header
                  _
                $region49: #{encoder_cell_forward.5} parent=46 // loop_header
                  %s211 = sphi 0, %s215
                  %p212 = scmp.ge.s32.totalorder %s211, 1
                  %s216 = sphi %s183, %s183
                  %s217 = sphi %s178, %s178
                $region50: #{encoder_cell_forward.5} parent=46 // loop_header_branch
                  %214 = sbr.rel (%p212) target = $region54
                $region51: #{encoder_cell_forward.5} parent=46 // loop_body
                  _
                $region52: #{encoder_cell_forward.5} parent=46 // loop_footer
                  %s215 = sadd.s32 1, %s211
                $region53: #{encoder_cell_forward.5} parent=46 // loop_footer_branch
                  %210 = sbr.rel target = $region49
                $region54: #{encoder_cell_forward.5} parent=46 // loop_exit
                  _
                %s219 = ssub.s32 16, 1
                loop: start=0, step=1, limit=1
                $region55: #{encoder_cell_forward.5} parent=46 // loop_pre_header
                  _
                $region56: #{encoder_cell_forward.5} parent=46 // loop_header
                  %s221 = sphi 0, %s225
                  %p222 = scmp.ge.s32.totalorder %s221, 1
                  %s226 = sphi %s183, %s183
                  %s227 = sphi %s178, %s178
                $region57: #{encoder_cell_forward.5} parent=46 // loop_header_branch
                  %224 = sbr.rel (%p222) target = $region61
                $region58: #{encoder_cell_forward.5} parent=46 // loop_body
                  %v228 = vld [vmem:[%s226] sm:%s219]
                  %229 = vst [vmem:[%s227] sm:%s219] %v228
                  %v230 = vld [vmem:[%s226 + $0x14] sm:%s219]
                  %231 = vst [vmem:[%s227 + $0x4] sm:%s219] %v230
                  %v232 = vld [vmem:[%s226 + $0x28] sm:%s219]
                  %233 = vst [vmem:[%s227 + $0x8] sm:%s219] %v232
                  %v234 = vld [vmem:[%s226 + $0x3c] sm:%s219]
                  %235 = vst [vmem:[%s227 + $0xc] sm:%s219] %v234
                $region59: #{encoder_cell_forward.5} parent=46 // loop_footer
                  %s225 = sadd.s32 1, %s221
                $region60: #{encoder_cell_forward.5} parent=46 // loop_footer_branch
                  %220 = sbr.rel target = $region56
                $region61: #{encoder_cell_forward.5} parent=46 // loop_exit
                  _
              $region47: #{encoder_cell_forward.5} parent=31 // pred_fallthru
                _
            $region32: #{encoder_cell_forward.5} parent=27 // pred_fallthru
              _
            // Predicated region
            $region33: #{encoder_cell_forward.5} parent=27 // pred_check
              _
            $region34: #{encoder_cell_forward.5} parent=27 // pred_check_branch
              %189 = sbr.rel (0) target = $region36
            $region35: #{encoder_cell_forward.5} parent=27 // pred_region
              %s191 = ssub.s32 16, 1
              loop: start=0, step=1, limit=1
              $region37: #{encoder_cell_forward.5} parent=35 // loop_pre_header
                _
              $region38: #{encoder_cell_forward.5} parent=35 // loop_header
                %s193 = sphi 0, %s197
                %p194 = scmp.ge.s32.totalorder %s193, 1
                %s198 = sphi %s183, %s183
                %s199 = sphi %s178, %s178
              $region39: #{encoder_cell_forward.5} parent=35 // loop_header_branch
                %196 = sbr.rel (%p194) target = $region43
              $region40: #{encoder_cell_forward.5} parent=35 // loop_body
                %v200 = vld [vmem:[%s198] sm:%s191]
                %201 = vst [vmem:[%s199] sm:%s191] %v200
                %v202 = vld [vmem:[%s198 + $0x14] sm:%s191]
                %203 = vst [vmem:[%s199 + $0x4] sm:%s191] %v202
                %v204 = vld [vmem:[%s198 + $0x28] sm:%s191]
                %205 = vst [vmem:[%s199 + $0x8] sm:%s191] %v204
                %v206 = vld [vmem:[%s198 + $0x3c] sm:%s191]
                %207 = vst [vmem:[%s199 + $0xc] sm:%s191] %v206
              $region41: #{encoder_cell_forward.5} parent=35 // loop_footer
                %s197 = sadd.s32 1, %s193
              $region42: #{encoder_cell_forward.5} parent=35 // loop_footer_branch
                %192 = sbr.rel target = $region38
              $region43: #{encoder_cell_forward.5} parent=35 // loop_exit
                _
            $region36: #{encoder_cell_forward.5} parent=27 // pred_fallthru
              _
          $region28: #{encoder_cell_forward.5} parent=23 // pred_fallthru
            _
          %236 = vnop
        $region24: #{encoder_cell_forward.5} parent=19 // pred_fallthru
          _
        // Predicated region
        $region62: #{encoder_cell_forward.5} parent=19 // pred_check
          %p237 = pneg %p79
        $region63: #{encoder_cell_forward.5} parent=19 // pred_check_branch
          %239 = sbr.rel (%p237) target = $region65
        $region64: #{encoder_cell_forward.5} parent=19 // pred_region
          %s240 = smul.u32 16, %s19
          %s241 = smul.u32 2, %s18
          %p242 = scmp.lt.s32.totalorder %s240, 79
          %s243 = scalar_select %p242, %s240, 79
          %p244 = scmp.lt.s32.totalorder %s241, 1
          %s245 = scalar_select %p244, %s241, 1
          %s246 = smul.addr %s243, 2
          %s247 = sadd.s32 %s245, %s246
          %s248 = smul.addr %s247, 4
          %s249 = scalar_lea.vmem %s1, %s248
          %s250 = smul.u32 16, %s19
          %s251 = smul.u32 2, %s18
        $region65: #{encoder_cell_forward.5} parent=19 // pred_fallthru
          _
      $region20: #{encoder_cell_forward.5} parent=5 // pred_fallthru
        _
      %p252 = scmp.le.s32.totalorder 1, %s10
      %p253 = scmp.lt.s32.totalorder %s10, 6
      %p254 = pnand %p252, %p253
      %p255 = pneg %p254
      // Predicated region
      $region66: #{encoder_cell_forward.5} parent=5 // pred_check
        _
      $region67: #{encoder_cell_forward.5} parent=5 // pred_check_branch
        %257 = sbr.rel (%p254) target = $region69
      $region68: #{encoder_cell_forward.5} parent=5 // pred_region
        %s258 = ssub.s32 %s10, 1
        %s259 = sand.u32 %s44, 1
        %s260 = sand.u32 %s44, 1
        %s261 = smul.addr %s260, 16
        %s262 = scalar_lea.vmem [#allocation3], %s261
        // Predicated region
        $region70: #{encoder_cell_forward.5} parent=68 // pred_check
          %p263 = pneg %p57
        $region71: #{encoder_cell_forward.5} parent=68 // pred_check_branch
          %265 = sbr.rel (%p263) target = $region73
        $region72: #{encoder_cell_forward.5} parent=68 // pred_region
          _
        $region73: #{encoder_cell_forward.5} parent=68 // pred_fallthru
          _
        // Predicated region
        $region74: #{encoder_cell_forward.5} parent=68 // pred_check
          %p266 = pneg %p111
        $region75: #{encoder_cell_forward.5} parent=68 // pred_check_branch
          %268 = sbr.rel (%p266) target = $region77
        $region76: #{encoder_cell_forward.5} parent=68 // pred_region
          %269 = dma.done [#allocation5], 32
        $region77: #{encoder_cell_forward.5} parent=68 // pred_fallthru
          _
        %s270 = sand.u32 %s44, 1
        %s271 = sand.u32 %s44, 1
        %s272 = smul.addr %s271, 16
        %s273 = scalar_lea.vmem [#allocation3], %s272
        %p274 = pneg %p57
        %p275 = pneg %p54
        %s276 = smul.u32 16, %s22
        %s277 = smul.u32 2, %s21
        %p278 = scmp.lt.s32.totalorder %s276, 79
        %s279 = scalar_select %p278, %s276, 79
        %p280 = scmp.lt.s32.totalorder %s277, 1
        %s281 = scalar_select %p280, %s277, 1
        %s282 = smul.addr %s279, 2
        %s283 = sadd.s32 %s281, %s282
        %s284 = smul.addr %s283, 4
        %s285 = scalar_lea.vmem %s1, %s284
        %p286 = pneg %p85
        %p287 = pneg %p82
        %p288 = pneg %p111
        %p289 = pneg %p108
        %p290 = pneg %p139
        %p291 = pneg %p136
        %s292 = smul.u32 4, %s20
        %s293 = smul.u32 2, %s21
        %p294 = scmp.lt.s32.totalorder %s292, 3
        %s295 = scalar_select %p294, %s292, 3
        %p296 = scmp.lt.s32.totalorder %s293, 1
        %s297 = scalar_select %p296, %s293, 1
        %s298 = smul.addr %s295, 2
        %s299 = sadd.s32 %s297, %s298
        %s300 = smul.addr %s299, 8
        %s301 = scalar_lea.vmem %s3, %s300
        %s302 = smul.u32 4, %s20
        %s303 = smul.u32 16, %s22
        %s304 = smul.u32 2, %s21
        %p305 = scmp.lt.s32.totalorder %s303, 79
        %s306 = scalar_select %p305, %s303, 79
        %p307 = scmp.lt.s32.totalorder %s304, 1
        %s308 = scalar_select %p307, %s304, 1
        %s309 = smul.addr %s306, 2
        %s310 = sadd.s32 %s308, %s309
        %s311 = smul.addr %s310, 4
        %s312 = scalar_lea.vmem %s1, %s311
        %s313 = smul.u32 16, %s22
        %s314 = smul.u32 2, %s21
        %s315 = smul.u32 2, %s21
        %s316 = smul.u32 4, %s20
        %s317 = smul.u32 2, %s21
        %p318 = scmp.lt.s32.totalorder %s316, 3
        %s319 = scalar_select %p318, %s316, 3
        %p320 = scmp.lt.s32.totalorder %s317, 1
        %s321 = scalar_select %p320, %s317, 1
        %s322 = smul.addr %s319, 2
        %s323 = sadd.s32 %s321, %s322
        %s324 = smul.addr %s323, 8
        %s325 = scalar_lea.vmem %s3, %s324
        %s326 = smul.u32 4, %s20
        %s327 = smul.u32 2, %s21
        %p329 = scmp.eq.s32.totalorder %s22, 0
        // Predicated region
        $region78: #{encoder_cell_forward.5} parent=68 // pred_check
          %p330 = pneg %p329
        $region79: #{encoder_cell_forward.5} parent=68 // pred_check_branch
          %332 = sbr.rel (%p330) target = $region81
        $region80: #{encoder_cell_forward.5} parent=68 // pred_region
          %333 = vst [vmem:[#allocation2] sm:$0xff] 0.0
          %334 = vst [vmem:[#allocation2 + $0x8] sm:$0xff] 0.0
          %335 = vst [vmem:[#allocation2 + $0x10] sm:$0xff] 0.0
          %336 = vst [vmem:[#allocation2 + $0x18] sm:$0xff] 0.0
          %337 = vst [vmem:[#allocation2 + $0x20] sm:$0xff] 0.0
          %338 = vst [vmem:[#allocation2 + $0x28] sm:$0xff] 0.0
          %339 = vst [vmem:[#allocation2 + $0x30] sm:$0xff] 0.0
          %340 = vst [vmem:[#allocation2 + $0x38] sm:$0xff] 0.0
        $region81: #{encoder_cell_forward.5} parent=68 // pred_fallthru
          _
        %v341 = vld [vmem:[#allocation2] sm:$0xff]
        %v342 = vld [vmem:[#allocation2 + $0x8] sm:$0xff]
        %v343 = vld [vmem:[#allocation2 + $0x10] sm:$0xff]
        %v344 = vld [vmem:[#allocation2 + $0x18] sm:$0xff]
        %v345 = vld [vmem:[#allocation2 + $0x20] sm:$0xff]
        %v346 = vld [vmem:[#allocation2 + $0x28] sm:$0xff]
        %v347 = vld [vmem:[#allocation2 + $0x30] sm:$0xff]
        %v348 = vld [vmem:[#allocation2 + $0x38] sm:$0xff]
        %v349 = vld [vmem:[%s262] sm:$0xf]
        %v350 = vld [vmem:[%s262 + $0x4] sm:$0xf]
        %v351 = vld [vmem:[%s262 + $0x8] sm:$0xf]
        %v352 = vld [vmem:[%s262 + $0xc] sm:$0xf]
        %v353 = vld [vmem:[%s312] sm:$0xff]
        %v354 = vld [vmem:[%s312 + $0x8] sm:$0xff]
        %v355 = vld [vmem:[%s312 + $0x10] sm:$0xff]
        %v356 = vld [vmem:[%s312 + $0x18] sm:$0xff]
        %v357 = vld [vmem:[%s312 + $0x20] sm:$0xff]
        %v358 = vld [vmem:[%s312 + $0x28] sm:$0xff]
        %v359 = vld [vmem:[%s312 + $0x30] sm:$0xff]
        %v360 = vld [vmem:[%s312 + $0x38] sm:$0xff]
        %v361 = vld [vmem:[%s312 + $0x40] sm:$0xff]
        %v362 = vld [vmem:[%s312 + $0x48] sm:$0xff]
        %v363 = vld [vmem:[%s312 + $0x50] sm:$0xff]
        %v364 = vld [vmem:[%s312 + $0x58] sm:$0xff]
        %v365 = vld [vmem:[%s312 + $0x60] sm:$0xff]
        %v366 = vld [vmem:[%s312 + $0x68] sm:$0xff]
        %v367 = vld [vmem:[%s312 + $0x70] sm:$0xff]
        %v368 = vld [vmem:[%s312 + $0x78] sm:$0xff]
        %v373 = vunpack.c.l.b16 %v349
        %v374 = vunpack.c.l.b16 %v350
        %v375 = vunpack.c.l.b16 %v351
        %v376 = vunpack.c.l.b16 %v352
        %v377 = vpack.c.b16 %v374, %v373
        %v378 = vpack.c.b16 %v376, %v375
        %v397 = vunpack.c.l.b16 %v353
        %v398 = vunpack.c.h.b16 %v353
        %v399 = vunpack.c.l.b16 %v354
        %v400 = vunpack.c.h.b16 %v354
        %v401 = vunpack.c.l.b16 %v355
        %v402 = vunpack.c.h.b16 %v355
        %v403 = vunpack.c.l.b16 %v356
        %v404 = vunpack.c.h.b16 %v356
        %v405 = vunpack.c.l.b16 %v357
        %v406 = vunpack.c.h.b16 %v357
        %v407 = vunpack.c.l.b16 %v358
        %v408 = vunpack.c.h.b16 %v358
        %v409 = vunpack.c.l.b16 %v359
        %v410 = vunpack.c.h.b16 %v359
        %v411 = vunpack.c.l.b16 %v360
        %v412 = vunpack.c.h.b16 %v360
        %v413 = vunpack.c.l.b16 %v361
        %v414 = vunpack.c.h.b16 %v361
        %v415 = vunpack.c.l.b16 %v362
        %v416 = vunpack.c.h.b16 %v362
        %v417 = vunpack.c.l.b16 %v363
        %v418 = vunpack.c.h.b16 %v363
        %v419 = vunpack.c.l.b16 %v364
        %v420 = vunpack.c.h.b16 %v364
        %v421 = vunpack.c.l.b16 %v365
        %v422 = vunpack.c.h.b16 %v365
        %v423 = vunpack.c.l.b16 %v366
        %v424 = vunpack.c.h.b16 %v366
        %v425 = vunpack.c.l.b16 %v367
        %v426 = vunpack.c.h.b16 %v367
        %v427 = vunpack.c.l.b16 %v368
        %v428 = vunpack.c.h.b16 %v368
        %v429 = vpack.c.b16 %v399, %v397
        %v430 = vpack.c.b16 %v400, %v398
        %v431 = vpack.c.b16 %v403, %v401
        %v432 = vpack.c.b16 %v404, %v402
        %v433 = vpack.c.b16 %v407, %v405
        %v434 = vpack.c.b16 %v408, %v406
        %v435 = vpack.c.b16 %v411, %v409
        %v436 = vpack.c.b16 %v412, %v410
        %v437 = vpack.c.b16 %v415, %v413
        %v438 = vpack.c.b16 %v416, %v414
        %v439 = vpack.c.b16 %v419, %v417
        %v440 = vpack.c.b16 %v420, %v418
        %v441 = vpack.c.b16 %v423, %v421
        %v442 = vpack.c.b16 %v424, %v422
        %v443 = vpack.c.b16 %v427, %v425
        %v444 = vpack.c.b16 %v428, %v426
        %461 = vmatprep.subr.bf16.mxu0 %v444
        %462 = vmatpush1.bf16.msra.mxu0 %v443
        %463 = vmatprep.subr.bf16.mxu0 %v442
        %464 = vmatpush1.bf16.msra.mxu0 %v441
        %465 = vmatprep.subr.bf16.mxu0 %v440
        %466 = vmatpush1.bf16.msra.mxu0 %v439
        %467 = vmatprep.subr.bf16.mxu0 %v438
        %468 = vmatpush1.bf16.msra.mxu0 %v437
        %469 = vmatprep.subr.bf16.mxu0 %v436
        %470 = vmatpush1.bf16.msra.mxu0 %v435
        %471 = vmatprep.subr.bf16.mxu0 %v434
        %472 = vmatpush1.bf16.msra.mxu0 %v433
        %473 = vmatprep.subr.bf16.mxu0 %v432
        %474 = vmatpush1.bf16.msra.mxu0 %v431
        %475 = vmatprep.subr.bf16.mxu0 %v430
        %476 = vmatpush1.bf16.msra.mxu0 %v429
        %477 = vmatprep.subr.bf16.mxu0 0
        %478 = vmatpush2.bf16.msra.mxu0 0
        %479 = vmatprep.subr.bf16.mxu0 0
        %480 = vmatpush2.bf16.msra.mxu0 0
        %481 = vmatprep.subr.bf16.mxu0 0
        %482 = vmatpush2.bf16.msra.mxu0 0
        %483 = vmatprep.subr.bf16.mxu0 0
        %484 = vmatpush2.bf16.msra.mxu0 0
        %485 = vmatprep.subr.bf16.mxu0 0
        %486 = vmatpush2.bf16.msra.mxu0 0
        %487 = vmatprep.subr.bf16.mxu0 0
        %488 = vmatpush2.bf16.msra.mxu0 0
        %489 = vmatprep.subr.bf16.mxu0 0
        %490 = vmatpush2.bf16.msra.mxu0 0
        %491 = vmatprep.subr.bf16.mxu0 0
        %492 = vmatpush2.bf16.msra.mxu0 0
        %493 = vmatprep.mubr.bf16.mxu0 0
        %494 = vmatmul.mubr.bf16.gmra.mxu0 %v377
        %v495 = vpop.f32.mrf.mxu0
        %v496 = vadd.f32 0.0, %v495
        %v497 = vpop.f32.mrf.mxu0
        %v498 = vadd.f32 0.0, %v497
        %v499 = vpop.f32.mrf.mxu0
        %v500 = vadd.f32 0.0, %v499
        %v501 = vpop.f32.mrf.mxu0
        %v502 = vadd.f32 0.0, %v501
        %503 = vmatprep.mubr.bf16.mxu0 0
        %504 = vmatmul.mubr.bf16.gmra.mxu0 %v378
        %v505 = vpop.f32.mrf.mxu0
        %v506 = vadd.f32 0.0, %v505
        %v507 = vpop.f32.mrf.mxu0
        %v508 = vadd.f32 0.0, %v507
        %v509 = vpop.f32.mrf.mxu0
        %v510 = vadd.f32 0.0, %v509
        %v511 = vpop.f32.mrf.mxu0
        %v512 = vadd.f32 0.0, %v511
        %513 = vdwg.mxu0
        %v514 = vadd.f32 %v341, %v496
        %v515 = vadd.f32 %v342, %v498
        %v516 = vadd.f32 %v343, %v500
        %v517 = vadd.f32 %v344, %v502
        %v518 = vadd.f32 %v345, %v506
        %v519 = vadd.f32 %v346, %v508
        %v520 = vadd.f32 %v347, %v510
        %v521 = vadd.f32 %v348, %v512
        %522 = vst [vmem:[#allocation2] sm:$0xff] %v514
        %523 = vst [vmem:[#allocation2 + $0x8] sm:$0xff] %v515
        %524 = vst [vmem:[#allocation2 + $0x10] sm:$0xff] %v516
        %525 = vst [vmem:[#allocation2 + $0x18] sm:$0xff] %v517
        %526 = vst [vmem:[#allocation2 + $0x20] sm:$0xff] %v518
        %527 = vst [vmem:[#allocation2 + $0x28] sm:$0xff] %v519
        %528 = vst [vmem:[#allocation2 + $0x30] sm:$0xff] %v520
        %529 = vst [vmem:[#allocation2 + $0x38] sm:$0xff] %v521
        %p530 = scmp.eq.s32.totalorder %s22, 4
        // Predicated region
        $region82: #{encoder_cell_forward.5} parent=68 // pred_check
          %p531 = pneg %p530
        $region83: #{encoder_cell_forward.5} parent=68 // pred_check_branch
          %533 = sbr.rel (%p531) target = $region85
        $region84: #{encoder_cell_forward.5} parent=68 // pred_region
          %v534 = vld [vmem:[#allocation2] sm:$0xff]
          %v535 = vld [vmem:[#allocation2 + $0x8] sm:$0xff]
          %v536 = vld [vmem:[#allocation2 + $0x10] sm:$0xff]
          %v537 = vld [vmem:[#allocation2 + $0x18] sm:$0xff]
          %v538 = vld [vmem:[#allocation2 + $0x20] sm:$0xff]
          %v539 = vld [vmem:[#allocation2 + $0x28] sm:$0xff]
          %v540 = vld [vmem:[#allocation2 + $0x30] sm:$0xff]
          %v541 = vld [vmem:[#allocation2 + $0x38] sm:$0xff]
          %v542 = vld [vmem:[#allocation4] sm:$0x3]
          %v544 = vlaneseq
          %v545 = vshrl.u32 %v544, 7
          %v546 = vsub.s32 0, %v545
          %v547 = vrot.slane %v542, %v546
          %v548 = vlaneseq
          %v549 = vshrl.u32 %v548, 7
          %v550 = vsub.s32 1, %v549
          %v551 = vrot.slane %v542, %v550
          %v554 = vadd.f32 %v534, %v547
          %v555 = vadd.f32 %v535, %v551
          %v556 = vadd.f32 %v536, %v547
          %v557 = vadd.f32 %v537, %v551
          %v558 = vadd.f32 %v538, %v547
          %v559 = vadd.f32 %v539, %v551
          %v560 = vadd.f32 %v540, %v547
          %v561 = vadd.f32 %v541, %v551
          %v562 = vmax.f32 %v554, 0.0
          %v563 = vmax.f32 %v555, 0.0
          %v564 = vmax.f32 %v556, 0.0
          %v565 = vmax.f32 %v557, 0.0
          %v566 = vmax.f32 %v558, 0.0
          %v567 = vmax.f32 %v559, 0.0
          %v568 = vmax.f32 %v560, 0.0
          %v569 = vmax.f32 %v561, 0.0
          %570 = vst [vmem:[%s325] sm:$0xff] %v562
          %571 = vst [vmem:[%s325 + $0x8] sm:$0xff] %v563
          %572 = vst [vmem:[%s325 + $0x10] sm:$0xff] %v564
          %573 = vst [vmem:[%s325 + $0x18] sm:$0xff] %v565
          %574 = vst [vmem:[%s325 + $0x20] sm:$0xff] %v566
          %575 = vst [vmem:[%s325 + $0x28] sm:$0xff] %v567
          %576 = vst [vmem:[%s325 + $0x30] sm:$0xff] %v568
          %577 = vst [vmem:[%s325 + $0x38] sm:$0xff] %v569
        $region85: #{encoder_cell_forward.5} parent=68 // pred_fallthru
          _
        %s578 = smul.u32 4, %s20
        %s579 = smul.u32 2, %s21
        %p580 = scmp.lt.s32.totalorder %s578, 3
        %s581 = scalar_select %p580, %s578, 3
        %p582 = scmp.lt.s32.totalorder %s579, 1
        %s583 = scalar_select %p582, %s579, 1
        %s584 = smul.addr %s581, 2
        %s585 = sadd.s32 %s583, %s584
        %s586 = smul.addr %s585, 8
        %s587 = scalar_lea.vmem %s3, %s586
        // Predicated region
        $region86: #{encoder_cell_forward.5} parent=68 // pred_check
          %p588 = pneg %p136
        $region87: #{encoder_cell_forward.5} parent=68 // pred_check_branch
          %590 = sbr.rel (%p588) target = $region89
        $region88: #{encoder_cell_forward.5} parent=68 // pred_region
          %s591 = smul.u32 4, %s20
          %s592 = smul.u32 2, %s21
        $region89: #{encoder_cell_forward.5} parent=68 // pred_fallthru
          _
        // Predicated region
        $region90: #{encoder_cell_forward.5} parent=68 // pred_check
          %p593 = pneg %p136
        $region91: #{encoder_cell_forward.5} parent=68 // pred_check_branch
          %595 = sbr.rel (%p593) target = $region93
        $region92: #{encoder_cell_forward.5} parent=68 // pred_region
          %s596 = smul.u32 4, %s20
          %s597 = smul.u32 2, %s21
          %p598 = scmp.lt.s32.totalorder %s596, 3
          %s599 = scalar_select %p598, %s596, 3
          %p600 = scmp.lt.s32.totalorder %s597, 1
          %s601 = scalar_select %p600, %s597, 1
          %s602 = smul.addr %s599, 2
          %s603 = sadd.s32 %s601, %s602
          %s604 = smul.addr %s603, 8
          %s605 = scalar_lea.vmem %s3, %s604
        $region93: #{encoder_cell_forward.5} parent=68 // pred_fallthru
          _
      $region69: #{encoder_cell_forward.5} parent=5 // pred_fallthru
        _
      %p606 = scmp.le.s32.totalorder 2, %s10
      // Predicated region
      $region94: #{encoder_cell_forward.5} parent=5 // pred_check
        %p607 = pneg %p606
      $region95: #{encoder_cell_forward.5} parent=5 // pred_check_branch
        %609 = sbr.rel (%p607) target = $region97
      $region96: #{encoder_cell_forward.5} parent=5 // pred_region
        %s610 = ssub.s32 %s10, 2
      $region97: #{encoder_cell_forward.5} parent=5 // pred_fallthru
        _
    $region6: #{encoder_cell_forward.5} parent=1 // loop_footer
      %s14 = sadd.s32 1, %s10
    $region7: #{encoder_cell_forward.5} parent=1 // loop_footer_branch
      %9 = sbr.rel target = $region3
    $region8: #{encoder_cell_forward.5} parent=1 // loop_exit
      _
    %611 = vsyncpa [#allocation5], 1
    %s612 = scalar_lea.sflag [#allocation5], 1
    %613 = vsyncpa %s612, 1

// kernel: encoder_cell_forward.6
$region0: #{encoder_cell_forward.6}
  #allocation0 [shape = 'u32[]', space=smem, size = 0x4, offset = 0x4, fixed_abs, tag = 'smem constant byte address 0x4 - core index']
  #allocation1 [shape = 'u32[144,128]{1,0:T(1,128)}', space=vmem, size = 0x12000, scoped, tag = 'internal scratch']
  #allocation2 [shape = 'f32[8,512]{1,0:T(8,128)}', space=vmem, size = 0x4000, scoped, tag = 'scratch operand']
  %s0 = inlined_call_operand.vmem [shape: bf16[8,2304], index: 0, kind: input, shape index: {}]
  %s1 = inlined_call_operand.vmem [shape: bf16[2304,512], index: 1, kind: input, shape index: {}]
  %s2 = inlined_call_operand.vmem [shape: f32[1,512], index: 2, kind: input, shape index: {}]
  %s3 = inlined_call_operand.vmem [shape: f32[8,512], index: 3, kind: output, shape index: {}]
  %s4 = sld [smem:[#allocation0]]
  $region53: #{encoder_cell_forward.6} parent=0
    _
  %s6 = ssub.s32 1, %s4
  %s7 = scalar_select 0, %s6, %s4
  loop: start=0, step=1, limit=11
  $region2: #{encoder_cell_forward.6} parent=0 // loop_pre_header
    _
  $region3: #{encoder_cell_forward.6} parent=0 // loop_header
    %s9 = sphi 0, %s13
    %p10 = scmp.ge.s32.totalorder %s9, 11
    %s16 = sphi 0, %s35
    %s17 = sphi 0, %s31
    %s18 = sphi 0, %s27
    %s19 = sphi 0, %s16
    %s20 = sphi 0, %s17
    %s21 = sphi 0, %s18
    %s22 = sphi 0, %s19
    %s23 = sphi 0, %s20
    %s24 = sphi 0, %s21
    %s40 = sphi 0, %s42
    %s43 = sphi 0, %s40
    %s44 = sphi 0, %s43
    %s60 = sphi 0, %s44
    %s68 = sphi 0, %s70
    %s71 = sphi 0, %s68
    %s72 = sphi 0, %s71
    %s88 = sphi 0, %s72
    %s94 = sphi 0, %s96
    %s97 = sphi 0, %s94
    %s98 = sphi 0, %s97
    %s114 = sphi 0, %s98
    %s122 = sphi 0, %s124
    %s125 = sphi 0, %s122
    %s126 = sphi 0, %s125
    %s142 = sphi 0, %s126
  $region4: #{encoder_cell_forward.6} parent=0 // loop_header_branch
    %12 = sbr.rel (%p10) target = $region8
  $region5: #{encoder_cell_forward.6} parent=0 // loop_body
    %s14 = ssub.s32 %s9, 1
    %s15 = ssub.s32 %s9, 2
    %s25 = sadd.s32 1, %s18
    %p26 = scmp.ge.s32.totalorder %s25, 9
    %s27 = scalar_select %p26, 0, %s25
    %s28 = sadd.s32 1, %s17
    %s29 = scalar_select %p26, %s28, %s17
    %p30 = scmp.ge.s32.totalorder %s29, 1
    %s31 = scalar_select %p30, 0, %s29
    %s32 = sadd.s32 1, %s16
    %s33 = scalar_select %p30, %s32, %s16
    %p34 = scmp.ge.s32.totalorder %s33, 1
    %s35 = scalar_select %p34, 0, %s33
    %s36 = ssub.s32 %s16, %s35
    %s37 = ssub.s32 %s18, %s27
    %s38 = sor.u32 %s36, %s37
    %p39 = scmp.eq.s32.totalorder %s38, 0
    %s41 = sadd.s32 %s40, 1
    %s42 = scalar_select %p39, %s40, %s41
    %p45 = pneg %p39
    %p46 = scmp.eq.s32.totalorder %s9, 8
    %p47 = por %p45, %p46
    %p48 = scmp.ne.s32.totalorder %s40, %s43
    %p49 = scmp.eq.s32.totalorder %s9, 0
    %p50 = por %p48, %p49
    %p51 = scmp.ne.s32.totalorder %s40, %s43
    %p52 = scmp.eq.s32.totalorder %s14, 8
    %p53 = por %p51, %p52
    %p54 = scmp.ne.s32.totalorder %s43, %s44
    %p55 = scmp.eq.s32.totalorder %s14, 0
    %p56 = por %p54, %p55
    %p57 = scmp.ne.s32.totalorder %s43, %s44
    %p58 = scmp.eq.s32.totalorder %s15, 8
    %p59 = por %p57, %p58
    %p61 = scmp.ne.s32.totalorder %s44, %s60
    %p62 = scmp.eq.s32.totalorder %s15, 0
    %p63 = por %p61, %p62
    %s64 = ssub.s32 %s18, %s27
    %s65 = ssub.s32 %s17, %s31
    %s66 = sor.u32 %s64, %s65
    %p67 = scmp.eq.s32.totalorder %s66, 0
    %s69 = sadd.s32 %s68, 1
    %s70 = scalar_select %p67, %s68, %s69
    %p73 = pneg %p67
    %p74 = scmp.eq.s32.totalorder %s9, 8
    %p75 = por %p73, %p74
    %p76 = scmp.ne.s32.totalorder %s68, %s71
    %p77 = scmp.eq.s32.totalorder %s9, 0
    %p78 = por %p76, %p77
    %p79 = scmp.ne.s32.totalorder %s68, %s71
    %p80 = scmp.eq.s32.totalorder %s14, 8
    %p81 = por %p79, %p80
    %p82 = scmp.ne.s32.totalorder %s71, %s72
    %p83 = scmp.eq.s32.totalorder %s14, 0
    %p84 = por %p82, %p83
    %p85 = scmp.ne.s32.totalorder %s71, %s72
    %p86 = scmp.eq.s32.totalorder %s15, 8
    %p87 = por %p85, %p86
    %p89 = scmp.ne.s32.totalorder %s72, %s88
    %p90 = scmp.eq.s32.totalorder %s15, 0
    %p91 = por %p89, %p90
    %s92 = ssub.s32 %s17, %s31
    %p93 = scmp.eq.s32.totalorder %s92, 0
    %s95 = sadd.s32 %s94, 1
    %s96 = scalar_select %p93, %s94, %s95
    %p99 = pneg %p93
    %p100 = scmp.eq.s32.totalorder %s9, 8
    %p101 = por %p99, %p100
    %p102 = scmp.ne.s32.totalorder %s94, %s97
    %p103 = scmp.eq.s32.totalorder %s9, 0
    %p104 = por %p102, %p103
    %p105 = scmp.ne.s32.totalorder %s94, %s97
    %p106 = scmp.eq.s32.totalorder %s14, 8
    %p107 = por %p105, %p106
    %p108 = scmp.ne.s32.totalorder %s97, %s98
    %p109 = scmp.eq.s32.totalorder %s14, 0
    %p110 = por %p108, %p109
    %p111 = scmp.ne.s32.totalorder %s97, %s98
    %p112 = scmp.eq.s32.totalorder %s15, 8
    %p113 = por %p111, %p112
    %p115 = scmp.ne.s32.totalorder %s98, %s114
    %p116 = scmp.eq.s32.totalorder %s15, 0
    %p117 = por %p115, %p116
    %s118 = ssub.s32 %s16, %s35
    %s119 = ssub.s32 %s17, %s31
    %s120 = sor.u32 %s118, %s119
    %p121 = scmp.eq.s32.totalorder %s120, 0
    %s123 = sadd.s32 %s122, 1
    %s124 = scalar_select %p121, %s122, %s123
    %p127 = pneg %p121
    %p128 = scmp.eq.s32.totalorder %s9, 8
    %p129 = por %p127, %p128
    %p130 = scmp.ne.s32.totalorder %s122, %s125
    %p131 = scmp.eq.s32.totalorder %s9, 0
    %p132 = por %p130, %p131
    %p133 = scmp.ne.s32.totalorder %s122, %s125
    %p134 = scmp.eq.s32.totalorder %s14, 8
    %p135 = por %p133, %p134
    %p136 = scmp.ne.s32.totalorder %s125, %s126
    %p137 = scmp.eq.s32.totalorder %s14, 0
    %p138 = por %p136, %p137
    %p139 = scmp.ne.s32.totalorder %s125, %s126
    %p140 = scmp.eq.s32.totalorder %s15, 8
    %p141 = por %p139, %p140
    %p143 = scmp.ne.s32.totalorder %s126, %s142
    %p144 = scmp.eq.s32.totalorder %s15, 0
    %p145 = por %p143, %p144
    %p146 = scmp.le.s32.totalorder 1, %s9
    %p147 = scmp.lt.s32.totalorder %s9, 10
    %p148 = pnand %p146, %p147
    %p149 = pneg %p148
    // Predicated region
    $region9: #{encoder_cell_forward.6} parent=5 // pred_check
      _
    $region10: #{encoder_cell_forward.6} parent=5 // pred_check_branch
      %151 = sbr.rel (%p148) target = $region12
    $region11: #{encoder_cell_forward.6} parent=5 // pred_region
      %s152 = ssub.s32 %s9, 1
      // Predicated region
      $region13: #{encoder_cell_forward.6} parent=11 // pred_check
        %p153 = pneg %p110
      $region14: #{encoder_cell_forward.6} parent=11 // pred_check_branch
        %155 = sbr.rel (%p153) target = $region16
      $region15: #{encoder_cell_forward.6} parent=11 // pred_region
        %s156 = smul.u32 4, %s20
        %p157 = scmp.lt.s32.totalorder %s156, 3
        %s158 = scalar_select %p157, %s156, 3
        %s159 = scalar_lea.vmem %s2, %s158
        %s160 = smul.u32 4, %s20
      $region16: #{encoder_cell_forward.6} parent=11 // pred_fallthru
        _
    $region12: #{encoder_cell_forward.6} parent=5 // pred_fallthru
      _
    %p161 = scmp.lt.s32.totalorder %s9, 9
    // Predicated region
    $region17: #{encoder_cell_forward.6} parent=5 // pred_check
      %p162 = pneg %p161
    $region18: #{encoder_cell_forward.6} parent=5 // pred_check_branch
      %164 = sbr.rel (%p162) target = $region20
    $region19: #{encoder_cell_forward.6} parent=5 // pred_region
      // Predicated region
      $region21: #{encoder_cell_forward.6} parent=19 // pred_check
        %p165 = pneg %p50
      $region22: #{encoder_cell_forward.6} parent=19 // pred_check_branch
        %167 = sbr.rel (%p165) target = $region24
      $region23: #{encoder_cell_forward.6} parent=19 // pred_region
        %s168 = smul.u32 2, %s18
        %p169 = scmp.lt.s32.totalorder %s16, 0
        %s170 = scalar_select %p169, %s16, 0
        %p171 = scmp.lt.s32.totalorder %s168, 17
        %s172 = scalar_select %p171, %s168, 17
        %s173 = smul.addr %s170, 18
        %s174 = sadd.s32 %s172, %s173
        %s175 = smul.addr %s174, 4
        %s176 = scalar_lea.vmem %s0, %s175
        %s177 = smul.u32 2, %s18
      $region24: #{encoder_cell_forward.6} parent=19 // pred_fallthru
        _
      // Predicated region
      $region25: #{encoder_cell_forward.6} parent=19 // pred_check
        %p178 = pneg %p78
      $region26: #{encoder_cell_forward.6} parent=19 // pred_check_branch
        %180 = sbr.rel (%p178) target = $region28
      $region27: #{encoder_cell_forward.6} parent=19 // pred_region
        %s181 = smul.u32 32, %s18
        %s182 = smul.u32 4, %s17
        %p183 = scmp.lt.s32.totalorder %s181, 287
        %s184 = scalar_select %p183, %s181, 287
        %p185 = scmp.lt.s32.totalorder %s182, 3
        %s186 = scalar_select %p185, %s182, 3
        %s187 = smul.addr %s184, 4
        %s188 = sadd.s32 %s186, %s187
        %s189 = smul.addr %s188, 4
        %s190 = scalar_lea.vmem %s1, %s189
        %s191 = smul.u32 32, %s18
        %s192 = smul.u32 4, %s17
      $region28: #{encoder_cell_forward.6} parent=19 // pred_fallthru
        _
    $region20: #{encoder_cell_forward.6} parent=5 // pred_fallthru
      _
    %p193 = scmp.le.s32.totalorder 1, %s9
    %p194 = scmp.lt.s32.totalorder %s9, 10
    %p195 = pnand %p193, %p194
    %p196 = pneg %p195
    // Predicated region
    $region29: #{encoder_cell_forward.6} parent=5 // pred_check
      _
    $region30: #{encoder_cell_forward.6} parent=5 // pred_check_branch
      %198 = sbr.rel (%p195) target = $region32
    $region31: #{encoder_cell_forward.6} parent=5 // pred_region
      %s199 = ssub.s32 %s9, 1
      %s200 = smul.u32 2, %s21
      %p201 = scmp.lt.s32.totalorder %s19, 0
      %s202 = scalar_select %p201, %s19, 0
      %p203 = scmp.lt.s32.totalorder %s200, 17
      %s204 = scalar_select %p203, %s200, 17
      %s205 = smul.addr %s202, 18
      %s206 = sadd.s32 %s204, %s205
      %s207 = smul.addr %s206, 4
      %s208 = scalar_lea.vmem %s0, %s207
      %p209 = pneg %p56
      %p210 = pneg %p53
      %s211 = smul.u32 32, %s21
      %s212 = smul.u32 4, %s20
      %p213 = scmp.lt.s32.totalorder %s211, 287
      %s214 = scalar_select %p213, %s211, 287
      %p215 = scmp.lt.s32.totalorder %s212, 3
      %s216 = scalar_select %p215, %s212, 3
      %s217 = smul.addr %s214, 4
      %s218 = sadd.s32 %s216, %s217
      %s219 = smul.addr %s218, 4
      %s220 = scalar_lea.vmem %s1, %s219
      %p221 = pneg %p84
      %p222 = pneg %p81
      %s223 = smul.u32 4, %s20
      %p224 = scmp.lt.s32.totalorder %s223, 3
      %s225 = scalar_select %p224, %s223, 3
      %s226 = scalar_lea.vmem %s2, %s225
      %p227 = pneg %p110
      %p228 = pneg %p107
      %p229 = pneg %p138
      %p230 = pneg %p135
      %s231 = smul.u32 4, %s20
      %p232 = scmp.lt.s32.totalorder %s19, 0
      %s233 = scalar_select %p232, %s19, 0
      %p234 = scmp.lt.s32.totalorder %s231, 3
      %s235 = scalar_select %p234, %s231, 3
      %s236 = smul.addr %s233, 4
      %s237 = sadd.s32 %s235, %s236
      %s238 = smul.addr %s237, 8
      %s239 = scalar_lea.vmem %s3, %s238
      %s240 = smul.u32 2, %s21
      %p241 = scmp.lt.s32.totalorder %s19, 0
      %s242 = scalar_select %p241, %s19, 0
      %p243 = scmp.lt.s32.totalorder %s240, 17
      %s244 = scalar_select %p243, %s240, 17
      %s245 = smul.addr %s242, 18
      %s246 = sadd.s32 %s244, %s245
      %s247 = smul.addr %s246, 4
      %s248 = scalar_lea.vmem %s0, %s247
      %s249 = smul.u32 2, %s21
      %s250 = smul.u32 32, %s21
      %s251 = smul.u32 4, %s20
      %p252 = scmp.lt.s32.totalorder %s250, 287
      %s253 = scalar_select %p252, %s250, 287
      %p254 = scmp.lt.s32.totalorder %s251, 3
      %s255 = scalar_select %p254, %s251, 3
      %s256 = smul.addr %s253, 4
      %s257 = sadd.s32 %s255, %s256
      %s258 = smul.addr %s257, 4
      %s259 = scalar_lea.vmem %s1, %s258
      %s260 = smul.u32 32, %s21
      %s261 = smul.u32 4, %s20
      %s262 = smul.u32 4, %s20
      %p263 = scmp.lt.s32.totalorder %s262, 3
      %s264 = scalar_select %p263, %s262, 3
      %s265 = scalar_lea.vmem %s2, %s264
      %s266 = smul.u32 4, %s20
      %s267 = smul.u32 4, %s20
      %p268 = scmp.lt.s32.totalorder %s19, 0
      %s269 = scalar_select %p268, %s19, 0
      %p270 = scmp.lt.s32.totalorder %s267, 3
      %s271 = scalar_select %p270, %s267, 3
      %s272 = smul.addr %s269, 4
      %s273 = sadd.s32 %s271, %s272
      %s274 = smul.addr %s273, 8
      %s275 = scalar_lea.vmem %s3, %s274
      %s276 = smul.u32 4, %s20
      %p277 = scmp.eq.s32.totalorder %s21, 0
      // Predicated region
      $region33: #{encoder_cell_forward.6} parent=31 // pred_check
        %p278 = pneg %p277
      $region34: #{encoder_cell_forward.6} parent=31 // pred_check_branch
        %280 = sbr.rel (%p278) target = $region36
      $region35: #{encoder_cell_forward.6} parent=31 // pred_region
        %281 = vst [vmem:[#allocation2] sm:$0xff] 0.0
        %282 = vst [vmem:[#allocation2 + $0x8] sm:$0xff] 0.0
        %283 = vst [vmem:[#allocation2 + $0x10] sm:$0xff] 0.0
        %284 = vst [vmem:[#allocation2 + $0x18] sm:$0xff] 0.0
      $region36: #{encoder_cell_forward.6} parent=31 // pred_fallthru
        _
      %v285 = vld [vmem:[#allocation2] sm:$0xff]
      %v286 = vld [vmem:[#allocation2 + $0x8] sm:$0xff]
      %v287 = vld [vmem:[#allocation2 + $0x10] sm:$0xff]
      %v288 = vld [vmem:[#allocation2 + $0x18] sm:$0xff]
      %v289 = vld [vmem:[%s248] sm:$0xff]
      %v290 = vld [vmem:[%s259] sm:$0xff]
      %v291 = vld [vmem:[%s259 + $0x8] sm:$0xff]
      %v292 = vld [vmem:[%s259 + $0x10] sm:$0xff]
      %v293 = vld [vmem:[%s259 + $0x18] sm:$0xff]
      %v294 = vld [vmem:[%s259 + $0x20] sm:$0xff]
      %v295 = vld [vmem:[%s259 + $0x28] sm:$0xff]
      %v296 = vld [vmem:[%s259 + $0x30] sm:$0xff]
      %v297 = vld [vmem:[%s259 + $0x38] sm:$0xff]
      %v298 = vld [vmem:[%s259 + $0x40] sm:$0xff]
      %v299 = vld [vmem:[%s259 + $0x48] sm:$0xff]
      %v300 = vld [vmem:[%s259 + $0x50] sm:$0xff]
      %v301 = vld [vmem:[%s259 + $0x58] sm:$0xff]
      %v302 = vld [vmem:[%s259 + $0x60] sm:$0xff]
      %v303 = vld [vmem:[%s259 + $0x68] sm:$0xff]
      %v304 = vld [vmem:[%s259 + $0x70] sm:$0xff]
      %v305 = vld [vmem:[%s259 + $0x78] sm:$0xff]
      %v306 = vld [vmem:[%s259 + $0x80] sm:$0xff]
      %v307 = vld [vmem:[%s259 + $0x88] sm:$0xff]
      %v308 = vld [vmem:[%s259 + $0x90] sm:$0xff]
      %v309 = vld [vmem:[%s259 + $0x98] sm:$0xff]
      %v310 = vld [vmem:[%s259 + $0xa0] sm:$0xff]
      %v311 = vld [vmem:[%s259 + $0xa8] sm:$0xff]
      %v312 = vld [vmem:[%s259 + $0xb0] sm:$0xff]
      %v313 = vld [vmem:[%s259 + $0xb8] sm:$0xff]
      %v314 = vld [vmem:[%s259 + $0xc0] sm:$0xff]
      %v315 = vld [vmem:[%s259 + $0xc8] sm:$0xff]
      %v316 = vld [vmem:[%s259 + $0xd0] sm:$0xff]
      %v317 = vld [vmem:[%s259 + $0xd8] sm:$0xff]
      %v318 = vld [vmem:[%s259 + $0xe0] sm:$0xff]
      %v319 = vld [vmem:[%s259 + $0xe8] sm:$0xff]
      %v320 = vld [vmem:[%s259 + $0xf0] sm:$0xff]
      %v321 = vld [vmem:[%s259 + $0xf8] sm:$0xff]
      %v322 = vld [vmem:[%s259 + $0x100] sm:$0xff]
      %v323 = vld [vmem:[%s259 + $0x108] sm:$0xff]
      %v324 = vld [vmem:[%s259 + $0x110] sm:$0xff]
      %v325 = vld [vmem:[%s259 + $0x118] sm:$0xff]
      %v326 = vld [vmem:[%s259 + $0x120] sm:$0xff]
      %v327 = vld [vmem:[%s259 + $0x128] sm:$0xff]
      %v328 = vld [vmem:[%s259 + $0x130] sm:$0xff]
      %v329 = vld [vmem:[%s259 + $0x138] sm:$0xff]
      %v330 = vld [vmem:[%s259 + $0x140] sm:$0xff]
      %v331 = vld [vmem:[%s259 + $0x148] sm:$0xff]
      %v332 = vld [vmem:[%s259 + $0x150] sm:$0xff]
      %v333 = vld [vmem:[%s259 + $0x158] sm:$0xff]
      %v334 = vld [vmem:[%s259 + $0x160] sm:$0xff]
      %v335 = vld [vmem:[%s259 + $0x168] sm:$0xff]
      %v336 = vld [vmem:[%s259 + $0x170] sm:$0xff]
      %v337 = vld [vmem:[%s259 + $0x178] sm:$0xff]
      %v338 = vld [vmem:[%s259 + $0x180] sm:$0xff]
      %v339 = vld [vmem:[%s259 + $0x188] sm:$0xff]
      %v340 = vld [vmem:[%s259 + $0x190] sm:$0xff]
      %v341 = vld [vmem:[%s259 + $0x198] sm:$0xff]
      %v342 = vld [vmem:[%s259 + $0x1a0] sm:$0xff]
      %v343 = vld [vmem:[%s259 + $0x1a8] sm:$0xff]
      %v344 = vld [vmem:[%s259 + $0x1b0] sm:$0xff]
      %v345 = vld [vmem:[%s259 + $0x1b8] sm:$0xff]
      %v346 = vld [vmem:[%s259 + $0x1c0] sm:$0xff]
      %v347 = vld [vmem:[%s259 + $0x1c8] sm:$0xff]
      %v348 = vld [vmem:[%s259 + $0x1d0] sm:$0xff]
      %v349 = vld [vmem:[%s259 + $0x1d8] sm:$0xff]
      %v350 = vld [vmem:[%s259 + $0x1e0] sm:$0xff]
      %v351 = vld [vmem:[%s259 + $0x1e8] sm:$0xff]
      %v352 = vld [vmem:[%s259 + $0x1f0] sm:$0xff]
      %v353 = vld [vmem:[%s259 + $0x1f8] sm:$0xff]
      %v355 = vunpack.c.l.b16 %v289
      %v356 = vunpack.c.h.b16 %v289
      %v357 = vpack.c.b16 %v355, %v355
      %v358 = vpack.c.b16 %v356, %v356
      %v425 = vunpack.c.l.b16 %v290
      %v426 = vunpack.c.h.b16 %v290
      %v427 = vunpack.c.l.b16 %v291
      %v428 = vunpack.c.h.b16 %v291
      %v429 = vunpack.c.l.b16 %v292
      %v430 = vunpack.c.h.b16 %v292
      %v431 = vunpack.c.l.b16 %v293
      %v432 = vunpack.c.h.b16 %v293
      %v433 = vunpack.c.l.b16 %v294
      %v434 = vunpack.c.h.b16 %v294
      %v435 = vunpack.c.l.b16 %v295
      %v436 = vunpack.c.h.b16 %v295
      %v437 = vunpack.c.l.b16 %v296
      %v438 = vunpack.c.h.b16 %v296
      %v439 = vunpack.c.l.b16 %v297
      %v440 = vunpack.c.h.b16 %v297
      %v441 = vunpack.c.l.b16 %v298
      %v442 = vunpack.c.h.b16 %v298
      %v443 = vunpack.c.l.b16 %v299
      %v444 = vunpack.c.h.b16 %v299
      %v445 = vunpack.c.l.b16 %v300
      %v446 = vunpack.c.h.b16 %v300
      %v447 = vunpack.c.l.b16 %v301
      %v448 = vunpack.c.h.b16 %v301
      %v449 = vunpack.c.l.b16 %v302
      %v450 = vunpack.c.h.b16 %v302
      %v451 = vunpack.c.l.b16 %v303
      %v452 = vunpack.c.h.b16 %v303
      %v453 = vunpack.c.l.b16 %v304
      %v454 = vunpack.c.h.b16 %v304
      %v455 = vunpack.c.l.b16 %v305
      %v456 = vunpack.c.h.b16 %v305
      %v457 = vunpack.c.l.b16 %v306
      %v458 = vunpack.c.h.b16 %v306
      %v459 = vunpack.c.l.b16 %v307
      %v460 = vunpack.c.h.b16 %v307
      %v461 = vunpack.c.l.b16 %v308
      %v462 = vunpack.c.h.b16 %v308
      %v463 = vunpack.c.l.b16 %v309
      %v464 = vunpack.c.h.b16 %v309
      %v465 = vunpack.c.l.b16 %v310
      %v466 = vunpack.c.h.b16 %v310
      %v467 = vunpack.c.l.b16 %v311
      %v468 = vunpack.c.h.b16 %v311
      %v469 = vunpack.c.l.b16 %v312
      %v470 = vunpack.c.h.b16 %v312
      %v471 = vunpack.c.l.b16 %v313
      %v472 = vunpack.c.h.b16 %v313
      %v473 = vunpack.c.l.b16 %v314
      %v474 = vunpack.c.h.b16 %v314
      %v475 = vunpack.c.l.b16 %v315
      %v476 = vunpack.c.h.b16 %v315
      %v477 = vunpack.c.l.b16 %v316
      %v478 = vunpack.c.h.b16 %v316
      %v479 = vunpack.c.l.b16 %v317
      %v480 = vunpack.c.h.b16 %v317
      %v481 = vunpack.c.l.b16 %v318
      %v482 = vunpack.c.h.b16 %v318
      %v483 = vunpack.c.l.b16 %v319
      %v484 = vunpack.c.h.b16 %v319
      %v485 = vunpack.c.l.b16 %v320
      %v486 = vunpack.c.h.b16 %v320
      %v487 = vunpack.c.l.b16 %v321
      %v488 = vunpack.c.h.b16 %v321
      %v489 = vunpack.c.l.b16 %v322
      %v490 = vunpack.c.h.b16 %v322
      %v491 = vunpack.c.l.b16 %v323
      %v492 = vunpack.c.h.b16 %v323
      %v493 = vunpack.c.l.b16 %v324
      %v494 = vunpack.c.h.b16 %v324
      %v495 = vunpack.c.l.b16 %v325
      %v496 = vunpack.c.h.b16 %v325
      %v497 = vunpack.c.l.b16 %v326
      %v498 = vunpack.c.h.b16 %v326
      %v499 = vunpack.c.l.b16 %v327
      %v500 = vunpack.c.h.b16 %v327
      %v501 = vunpack.c.l.b16 %v328
      %v502 = vunpack.c.h.b16 %v328
      %v503 = vunpack.c.l.b16 %v329
      %v504 = vunpack.c.h.b16 %v329
      %v505 = vunpack.c.l.b16 %v330
      %v506 = vunpack.c.h.b16 %v330
      %v507 = vunpack.c.l.b16 %v331
      %v508 = vunpack.c.h.b16 %v331
      %v509 = vunpack.c.l.b16 %v332
      %v510 = vunpack.c.h.b16 %v332
      %v511 = vunpack.c.l.b16 %v333
      %v512 = vunpack.c.h.b16 %v333
      %v513 = vunpack.c.l.b16 %v334
      %v514 = vunpack.c.h.b16 %v334
      %v515 = vunpack.c.l.b16 %v335
      %v516 = vunpack.c.h.b16 %v335
      %v517 = vunpack.c.l.b16 %v336
      %v518 = vunpack.c.h.b16 %v336
      %v519 = vunpack.c.l.b16 %v337
      %v520 = vunpack.c.h.b16 %v337
      %v521 = vunpack.c.l.b16 %v338
      %v522 = vunpack.c.h.b16 %v338
      %v523 = vunpack.c.l.b16 %v339
      %v524 = vunpack.c.h.b16 %v339
      %v525 = vunpack.c.l.b16 %v340
      %v526 = vunpack.c.h.b16 %v340
      %v527 = vunpack.c.l.b16 %v341
      %v528 = vunpack.c.h.b16 %v341
      %v529 = vunpack.c.l.b16 %v342
      %v530 = vunpack.c.h.b16 %v342
      %v531 = vunpack.c.l.b16 %v343
      %v532 = vunpack.c.h.b16 %v343
      %v533 = vunpack.c.l.b16 %v344
      %v534 = vunpack.c.h.b16 %v344
      %v535 = vunpack.c.l.b16 %v345
      %v536 = vunpack.c.h.b16 %v345
      %v537 = vunpack.c.l.b16 %v346
      %v538 = vunpack.c.h.b16 %v346
      %v539 = vunpack.c.l.b16 %v347
      %v540 = vunpack.c.h.b16 %v347
      %v541 = vunpack.c.l.b16 %v348
      %v542 = vunpack.c.h.b16 %v348
      %v543 = vunpack.c.l.b16 %v349
      %v544 = vunpack.c.h.b16 %v349
      %v545 = vunpack.c.l.b16 %v350
      %v546 = vunpack.c.h.b16 %v350
      %v547 = vunpack.c.l.b16 %v351
      %v548 = vunpack.c.h.b16 %v351
      %v549 = vunpack.c.l.b16 %v352
      %v550 = vunpack.c.h.b16 %v352
      %v551 = vunpack.c.l.b16 %v353
      %v552 = vunpack.c.h.b16 %v353
      %v553 = vpack.c.b16 %v429, %v425
      %v554 = vpack.c.b16 %v430, %v426
      %v555 = vpack.c.b16 %v431, %v427
      %v556 = vpack.c.b16 %v432, %v428
      %v557 = vpack.c.b16 %v437, %v433
      %v558 = vpack.c.b16 %v438, %v434
      %v559 = vpack.c.b16 %v439, %v435
      %v560 = vpack.c.b16 %v440, %v436
      %v561 = vpack.c.b16 %v445, %v441
      %v562 = vpack.c.b16 %v446, %v442
      %v563 = vpack.c.b16 %v447, %v443
      %v564 = vpack.c.b16 %v448, %v444
      %v565 = vpack.c.b16 %v453, %v449
      %v566 = vpack.c.b16 %v454, %v450
      %v567 = vpack.c.b16 %v455, %v451
      %v568 = vpack.c.b16 %v456, %v452
      %v569 = vpack.c.b16 %v461, %v457
      %v570 = vpack.c.b16 %v462, %v458
      %v571 = vpack.c.b16 %v463, %v459
      %v572 = vpack.c.b16 %v464, %v460
      %v573 = vpack.c.b16 %v469, %v465
      %v574 = vpack.c.b16 %v470, %v466
      %v575 = vpack.c.b16 %v471, %v467
      %v576 = vpack.c.b16 %v472, %v468
      %v577 = vpack.c.b16 %v477, %v473
      %v578 = vpack.c.b16 %v478, %v474
      %v579 = vpack.c.b16 %v479, %v475
      %v580 = vpack.c.b16 %v480, %v476
      %v581 = vpack.c.b16 %v485, %v481
      %v582 = vpack.c.b16 %v486, %v482
      %v583 = vpack.c.b16 %v487, %v483
      %v584 = vpack.c.b16 %v488, %v484
      %v585 = vpack.c.b16 %v493, %v489
      %v586 = vpack.c.b16 %v494, %v490
      %v587 = vpack.c.b16 %v495, %v491
      %v588 = vpack.c.b16 %v496, %v492
      %v589 = vpack.c.b16 %v501, %v497
      %v590 = vpack.c.b16 %v502, %v498
      %v591 = vpack.c.b16 %v503, %v499
      %v592 = vpack.c.b16 %v504, %v500
      %v593 = vpack.c.b16 %v509, %v505
      %v594 = vpack.c.b16 %v510, %v506
      %v595 = vpack.c.b16 %v511, %v507
      %v596 = vpack.c.b16 %v512, %v508
      %v597 = vpack.c.b16 %v517, %v513
      %v598 = vpack.c.b16 %v518, %v514
      %v599 = vpack.c.b16 %v519, %v515
      %v600 = vpack.c.b16 %v520, %v516
      %v601 = vpack.c.b16 %v525, %v521
      %v602 = vpack.c.b16 %v526, %v522
      %v603 = vpack.c.b16 %v527, %v523
      %v604 = vpack.c.b16 %v528, %v524
      %v605 = vpack.c.b16 %v533, %v529
      %v606 = vpack.c.b16 %v534, %v530
      %v607 = vpack.c.b16 %v535, %v531
      %v608 = vpack.c.b16 %v536, %v532
      %v609 = vpack.c.b16 %v541, %v537
      %v610 = vpack.c.b16 %v542, %v538
      %v611 = vpack.c.b16 %v543, %v539
      %v612 = vpack.c.b16 %v544, %v540
      %v613 = vpack.c.b16 %v549, %v545
      %v614 = vpack.c.b16 %v550, %v546
      %v615 = vpack.c.b16 %v551, %v547
      %v616 = vpack.c.b16 %v552, %v548
      %681 = vmatprep.subr.bf16.mxu0 %v582
      %682 = vmatpush1.bf16.msra.mxu0 %v581
      %683 = vmatprep.subr.bf16.mxu0 %v578
      %684 = vmatpush1.bf16.msra.mxu0 %v577
      %685 = vmatprep.subr.bf16.mxu0 %v574
      %686 = vmatpush1.bf16.msra.mxu0 %v573
      %687 = vmatprep.subr.bf16.mxu0 %v570
      %688 = vmatpush1.bf16.msra.mxu0 %v569
      %689 = vmatprep.subr.bf16.mxu0 %v566
      %690 = vmatpush1.bf16.msra.mxu0 %v565
      %691 = vmatprep.subr.bf16.mxu0 %v562
      %692 = vmatpush1.bf16.msra.mxu0 %v561
      %693 = vmatprep.subr.bf16.mxu0 %v558
      %694 = vmatpush1.bf16.msra.mxu0 %v557
      %695 = vmatprep.subr.bf16.mxu0 %v554
      %696 = vmatpush1.bf16.msra.mxu0 %v553
      %697 = vmatprep.subr.bf16.mxu0 %v614
      %698 = vmatpush2.bf16.msra.mxu0 %v613
      %699 = vmatprep.subr.bf16.mxu0 %v610
      %700 = vmatpush2.bf16.msra.mxu0 %v609
      %701 = vmatprep.subr.bf16.mxu0 %v606
      %702 = vmatpush2.bf16.msra.mxu0 %v605
      %703 = vmatprep.subr.bf16.mxu0 %v602
      %704 = vmatpush2.bf16.msra.mxu0 %v601
      %705 = vmatprep.subr.bf16.mxu0 %v598
      %706 = vmatpush2.bf16.msra.mxu0 %v597
      %707 = vmatprep.subr.bf16.mxu0 %v594
      %708 = vmatpush2.bf16.msra.mxu0 %v593
      %709 = vmatprep.subr.bf16.mxu0 %v590
      %710 = vmatpush2.bf16.msra.mxu0 %v589
      %711 = vmatprep.subr.bf16.mxu0 %v586
      %712 = vmatpush2.bf16.msra.mxu0 %v585
      %713 = vmatprep.mubr.bf16.mxu0 %v358
      %714 = vmatmul.mubr.bf16.gmra.mxu0 %v357
      %v715 = vpop.f32.mrf.mxu0
      %v716 = vadd.f32 0.0, %v715
      %v717 = vpop.f32.mrf.mxu0
      %v718 = vadd.f32 0.0, %v717
      %v719 = vpop.f32.mrf.mxu0
      %v720 = vpop.f32.mrf.mxu0
      %721 = vdwg.mxu0
      %722 = vmatprep.subr.bf16.mxu0 %v584
      %723 = vmatpush1.bf16.msra.mxu0 %v583
      %724 = vmatprep.subr.bf16.mxu0 %v580
      %725 = vmatpush1.bf16.msra.mxu0 %v579
      %726 = vmatprep.subr.bf16.mxu0 %v576
      %727 = vmatpush1.bf16.msra.mxu0 %v575
      %728 = vmatprep.subr.bf16.mxu0 %v572
      %729 = vmatpush1.bf16.msra.mxu0 %v571
      %730 = vmatprep.subr.bf16.mxu0 %v568
      %731 = vmatpush1.bf16.msra.mxu0 %v567
      %732 = vmatprep.subr.bf16.mxu0 %v564
      %733 = vmatpush1.bf16.msra.mxu0 %v563
      %734 = vmatprep.subr.bf16.mxu0 %v560
      %735 = vmatpush1.bf16.msra.mxu0 %v559
      %736 = vmatprep.subr.bf16.mxu0 %v556
      %737 = vmatpush1.bf16.msra.mxu0 %v555
      %738 = vmatprep.subr.bf16.mxu0 %v616
      %739 = vmatpush2.bf16.msra.mxu0 %v615
      %740 = vmatprep.subr.bf16.mxu0 %v612
      %741 = vmatpush2.bf16.msra.mxu0 %v611
      %742 = vmatprep.subr.bf16.mxu0 %v608
      %743 = vmatpush2.bf16.msra.mxu0 %v607
      %744 = vmatprep.subr.bf16.mxu0 %v604
      %745 = vmatpush2.bf16.msra.mxu0 %v603
      %746 = vmatprep.subr.bf16.mxu0 %v600
      %747 = vmatpush2.bf16.msra.mxu0 %v599
      %748 = vmatprep.subr.bf16.mxu0 %v596
      %749 = vmatpush2.bf16.msra.mxu0 %v595
      %750 = vmatprep.subr.bf16.mxu0 %v592
      %751 = vmatpush2.bf16.msra.mxu0 %v591
      %752 = vmatprep.subr.bf16.mxu0 %v588
      %753 = vmatpush2.bf16.msra.mxu0 %v587
      %754 = vmatprep.mubr.bf16.mxu0 %v358
      %755 = vmatmul.mubr.bf16.gmra.mxu0 %v357
      %v756 = vpop.f32.mrf.mxu0
      %v757 = vadd.f32 0.0, %v756
      %v758 = vpop.f32.mrf.mxu0
      %v759 = vadd.f32 0.0, %v758
      %v760 = vpop.f32.mrf.mxu0
      %v761 = vpop.f32.mrf.mxu0
      %762 = vdwg.mxu0
      %v763 = vadd.f32 %v285, %v716
      %v764 = vadd.f32 %v286, %v718
      %v765 = vadd.f32 %v287, %v757
      %v766 = vadd.f32 %v288, %v759
      %767 = vst [vmem:[#allocation2] sm:$0xff] %v763
      %768 = vst [vmem:[#allocation2 + $0x8] sm:$0xff] %v764
      %769 = vst [vmem:[#allocation2 + $0x10] sm:$0xff] %v765
      %770 = vst [vmem:[#allocation2 + $0x18] sm:$0xff] %v766
      %p771 = scmp.eq.s32.totalorder %s21, 8
      // Predicated region
      $region37: #{encoder_cell_forward.6} parent=31 // pred_check
        %p772 = pneg %p771
      $region38: #{encoder_cell_forward.6} parent=31 // pred_check_branch
        %774 = sbr.rel (%p772) target = $region40
      $region39: #{encoder_cell_forward.6} parent=31 // pred_region
        %v775 = vld [vmem:[#allocation2] sm:$0xff]
        %v776 = vld [vmem:[#allocation2 + $0x8] sm:$0xff]
        %v777 = vld [vmem:[#allocation2 + $0x10] sm:$0xff]
        %v778 = vld [vmem:[#allocation2 + $0x18] sm:$0xff]
        %v779 = vld [vmem:[%s265] sm:$0xf]
        %v781 = vlaneseq
        %v782 = vshrl.u32 %v781, 7
        %v783 = vsub.s32 0, %v782
        %v784 = vrot.slane %v779, %v783
        %v785 = vlaneseq
        %v786 = vshrl.u32 %v785, 7
        %v787 = vsub.s32 1, %v786
        %v788 = vrot.slane %v779, %v787
        %v789 = vlaneseq
        %v790 = vshrl.u32 %v789, 7
        %v791 = vsub.s32 2, %v790
        %v792 = vrot.slane %v779, %v791
        %v793 = vlaneseq
        %v794 = vshrl.u32 %v793, 7
        %v795 = vsub.s32 3, %v794
        %v796 = vrot.slane %v779, %v795
        %v801 = vadd.f32 %v775, %v784
        %v802 = vadd.f32 %v776, %v788
        %v803 = vadd.f32 %v777, %v792
        %v804 = vadd.f32 %v778, %v796
        %v805 = vmax.f32 %v801, 0.0
        %v806 = vmax.f32 %v802, 0.0
        %v807 = vmax.f32 %v803, 0.0
        %v808 = vmax.f32 %v804, 0.0
        %809 = vst [vmem:[%s275] sm:$0xff] %v805
        %810 = vst [vmem:[%s275 + $0x8] sm:$0xff] %v806
        %811 = vst [vmem:[%s275 + $0x10] sm:$0xff] %v807
        %812 = vst [vmem:[%s275 + $0x18] sm:$0xff] %v808
      $region40: #{encoder_cell_forward.6} parent=31 // pred_fallthru
        _
      %s813 = smul.u32 4, %s20
      %p814 = scmp.lt.s32.totalorder %s19, 0
      %s815 = scalar_select %p814, %s19, 0
      %p816 = scmp.lt.s32.totalorder %s813, 3
      %s817 = scalar_select %p816, %s813, 3
      %s818 = smul.addr %s815, 4
      %s819 = sadd.s32 %s817, %s818
      %s820 = smul.addr %s819, 8
      %s821 = scalar_lea.vmem %s3, %s820
      // Predicated region
      $region41: #{encoder_cell_forward.6} parent=31 // pred_check
        %p822 = pneg %p135
      $region42: #{encoder_cell_forward.6} parent=31 // pred_check_branch
        %824 = sbr.rel (%p822) target = $region44
      $region43: #{encoder_cell_forward.6} parent=31 // pred_region
        %s825 = smul.u32 4, %s20
      $region44: #{encoder_cell_forward.6} parent=31 // pred_fallthru
        _
      // Predicated region
      $region45: #{encoder_cell_forward.6} parent=31 // pred_check
        %p826 = pneg %p135
      $region46: #{encoder_cell_forward.6} parent=31 // pred_check_branch
        %828 = sbr.rel (%p826) target = $region48
      $region47: #{encoder_cell_forward.6} parent=31 // pred_region
        %s829 = smul.u32 4, %s20
        %p830 = scmp.lt.s32.totalorder %s19, 0
        %s831 = scalar_select %p830, %s19, 0
        %p832 = scmp.lt.s32.totalorder %s829, 3
        %s833 = scalar_select %p832, %s829, 3
        %s834 = smul.addr %s831, 4
        %s835 = sadd.s32 %s833, %s834
        %s836 = smul.addr %s835, 8
        %s837 = scalar_lea.vmem %s3, %s836
      $region48: #{encoder_cell_forward.6} parent=31 // pred_fallthru
        _
    $region32: #{encoder_cell_forward.6} parent=5 // pred_fallthru
      _
    %p838 = scmp.le.s32.totalorder 2, %s9
    // Predicated region
    $region49: #{encoder_cell_forward.6} parent=5 // pred_check
      %p839 = pneg %p838
    $region50: #{encoder_cell_forward.6} parent=5 // pred_check_branch
      %841 = sbr.rel (%p839) target = $region52
    $region51: #{encoder_cell_forward.6} parent=5 // pred_region
      %s842 = ssub.s32 %s9, 2
    $region52: #{encoder_cell_forward.6} parent=5 // pred_fallthru
      _
  $region6: #{encoder_cell_forward.6} parent=0 // loop_footer
    %s13 = sadd.s32 1, %s9
  $region7: #{encoder_cell_forward.6} parent=0 // loop_footer_branch
    %8 = sbr.rel target = $region3
  $region8: #{encoder_cell_forward.6} parent=0 // loop_exit
    _

// kernel: encoder_cell_forward.7
$region0: #{encoder_cell_forward.7}
  #allocation0 [shape = 'u32[]', space=smem, size = 0x4, offset = 0x4, fixed_abs, tag = 'smem constant byte address 0x4 - core index']
  #allocation1 [shape = 'u32[144,128]{1,0:T(1,128)}', space=vmem, size = 0x12000, scoped, tag = 'internal scratch']
  #allocation2 [shape = 'f32[8,512]{1,0:T(8,128)}', space=vmem, size = 0x4000, scoped, tag = 'scratch operand']
  %s0 = inlined_call_operand.vmem [shape: bf16[8,4608], index: 0, kind: input, shape index: {}]
  %s1 = inlined_call_operand.vmem [shape: bf16[4608,512], index: 1, kind: input, shape index: {}]
  %s2 = inlined_call_operand.vmem [shape: f32[1,512], index: 2, kind: input, shape index: {}]
  %s3 = inlined_call_operand.vmem [shape: f32[8,512], index: 3, kind: output, shape index: {}]
  %s4 = sld [smem:[#allocation0]]
  $region53: #{encoder_cell_forward.7} parent=0
    _
  %s6 = ssub.s32 1, %s4
  %s7 = scalar_select 0, %s6, %s4
  loop: start=0, step=1, limit=11
  $region2: #{encoder_cell_forward.7} parent=0 // loop_pre_header
    _
  $region3: #{encoder_cell_forward.7} parent=0 // loop_header
    %s9 = sphi 0, %s13
    %p10 = scmp.ge.s32.totalorder %s9, 11
    %s16 = sphi 0, %s35
    %s17 = sphi 0, %s31
    %s18 = sphi 0, %s27
    %s19 = sphi 0, %s16
    %s20 = sphi 0, %s17
    %s21 = sphi 0, %s18
    %s22 = sphi 0, %s19
    %s23 = sphi 0, %s20
    %s24 = sphi 0, %s21
    %s40 = sphi 0, %s42
    %s43 = sphi 0, %s40
    %s44 = sphi 0, %s43
    %s60 = sphi 0, %s44
    %s68 = sphi 0, %s70
    %s71 = sphi 0, %s68
    %s72 = sphi 0, %s71
    %s88 = sphi 0, %s72
    %s94 = sphi 0, %s96
    %s97 = sphi 0, %s94
    %s98 = sphi 0, %s97
    %s114 = sphi 0, %s98
    %s122 = sphi 0, %s124
    %s125 = sphi 0, %s122
    %s126 = sphi 0, %s125
    %s142 = sphi 0, %s126
  $region4: #{encoder_cell_forward.7} parent=0 // loop_header_branch
    %12 = sbr.rel (%p10) target = $region8
  $region5: #{encoder_cell_forward.7} parent=0 // loop_body
    %s14 = ssub.s32 %s9, 1
    %s15 = ssub.s32 %s9, 2
    %s25 = sadd.s32 1, %s18
    %p26 = scmp.ge.s32.totalorder %s25, 9
    %s27 = scalar_select %p26, 0, %s25
    %s28 = sadd.s32 1, %s17
    %s29 = scalar_select %p26, %s28, %s17
    %p30 = scmp.ge.s32.totalorder %s29, 1
    %s31 = scalar_select %p30, 0, %s29
    %s32 = sadd.s32 1, %s16
    %s33 = scalar_select %p30, %s32, %s16
    %p34 = scmp.ge.s32.totalorder %s33, 1
    %s35 = scalar_select %p34, 0, %s33
    %s36 = ssub.s32 %s16, %s35
    %s37 = ssub.s32 %s18, %s27
    %s38 = sor.u32 %s36, %s37
    %p39 = scmp.eq.s32.totalorder %s38, 0
    %s41 = sadd.s32 %s40, 1
    %s42 = scalar_select %p39, %s40, %s41
    %p45 = pneg %p39
    %p46 = scmp.eq.s32.totalorder %s9, 8
    %p47 = por %p45, %p46
    %p48 = scmp.ne.s32.totalorder %s40, %s43
    %p49 = scmp.eq.s32.totalorder %s9, 0
    %p50 = por %p48, %p49
    %p51 = scmp.ne.s32.totalorder %s40, %s43
    %p52 = scmp.eq.s32.totalorder %s14, 8
    %p53 = por %p51, %p52
    %p54 = scmp.ne.s32.totalorder %s43, %s44
    %p55 = scmp.eq.s32.totalorder %s14, 0
    %p56 = por %p54, %p55
    %p57 = scmp.ne.s32.totalorder %s43, %s44
    %p58 = scmp.eq.s32.totalorder %s15, 8
    %p59 = por %p57, %p58
    %p61 = scmp.ne.s32.totalorder %s44, %s60
    %p62 = scmp.eq.s32.totalorder %s15, 0
    %p63 = por %p61, %p62
    %s64 = ssub.s32 %s18, %s27
    %s65 = ssub.s32 %s17, %s31
    %s66 = sor.u32 %s64, %s65
    %p67 = scmp.eq.s32.totalorder %s66, 0
    %s69 = sadd.s32 %s68, 1
    %s70 = scalar_select %p67, %s68, %s69
    %p73 = pneg %p67
    %p74 = scmp.eq.s32.totalorder %s9, 8
    %p75 = por %p73, %p74
    %p76 = scmp.ne.s32.totalorder %s68, %s71
    %p77 = scmp.eq.s32.totalorder %s9, 0
    %p78 = por %p76, %p77
    %p79 = scmp.ne.s32.totalorder %s68, %s71
    %p80 = scmp.eq.s32.totalorder %s14, 8
    %p81 = por %p79, %p80
    %p82 = scmp.ne.s32.totalorder %s71, %s72
    %p83 = scmp.eq.s32.totalorder %s14, 0
    %p84 = por %p82, %p83
    %p85 = scmp.ne.s32.totalorder %s71, %s72
    %p86 = scmp.eq.s32.totalorder %s15, 8
    %p87 = por %p85, %p86
    %p89 = scmp.ne.s32.totalorder %s72, %s88
    %p90 = scmp.eq.s32.totalorder %s15, 0
    %p91 = por %p89, %p90
    %s92 = ssub.s32 %s17, %s31
    %p93 = scmp.eq.s32.totalorder %s92, 0
    %s95 = sadd.s32 %s94, 1
    %s96 = scalar_select %p93, %s94, %s95
    %p99 = pneg %p93
    %p100 = scmp.eq.s32.totalorder %s9, 8
    %p101 = por %p99, %p100
    %p102 = scmp.ne.s32.totalorder %s94, %s97
    %p103 = scmp.eq.s32.totalorder %s9, 0
    %p104 = por %p102, %p103
    %p105 = scmp.ne.s32.totalorder %s94, %s97
    %p106 = scmp.eq.s32.totalorder %s14, 8
    %p107 = por %p105, %p106
    %p108 = scmp.ne.s32.totalorder %s97, %s98
    %p109 = scmp.eq.s32.totalorder %s14, 0
    %p110 = por %p108, %p109
    %p111 = scmp.ne.s32.totalorder %s97, %s98
    %p112 = scmp.eq.s32.totalorder %s15, 8
    %p113 = por %p111, %p112
    %p115 = scmp.ne.s32.totalorder %s98, %s114
    %p116 = scmp.eq.s32.totalorder %s15, 0
    %p117 = por %p115, %p116
    %s118 = ssub.s32 %s16, %s35
    %s119 = ssub.s32 %s17, %s31
    %s120 = sor.u32 %s118, %s119
    %p121 = scmp.eq.s32.totalorder %s120, 0
    %s123 = sadd.s32 %s122, 1
    %s124 = scalar_select %p121, %s122, %s123
    %p127 = pneg %p121
    %p128 = scmp.eq.s32.totalorder %s9, 8
    %p129 = por %p127, %p128
    %p130 = scmp.ne.s32.totalorder %s122, %s125
    %p131 = scmp.eq.s32.totalorder %s9, 0
    %p132 = por %p130, %p131
    %p133 = scmp.ne.s32.totalorder %s122, %s125
    %p134 = scmp.eq.s32.totalorder %s14, 8
    %p135 = por %p133, %p134
    %p136 = scmp.ne.s32.totalorder %s125, %s126
    %p137 = scmp.eq.s32.totalorder %s14, 0
    %p138 = por %p136, %p137
    %p139 = scmp.ne.s32.totalorder %s125, %s126
    %p140 = scmp.eq.s32.totalorder %s15, 8
    %p141 = por %p139, %p140
    %p143 = scmp.ne.s32.totalorder %s126, %s142
    %p144 = scmp.eq.s32.totalorder %s15, 0
    %p145 = por %p143, %p144
    %p146 = scmp.le.s32.totalorder 1, %s9
    %p147 = scmp.lt.s32.totalorder %s9, 10
    %p148 = pnand %p146, %p147
    %p149 = pneg %p148
    // Predicated region
    $region9: #{encoder_cell_forward.7} parent=5 // pred_check
      _
    $region10: #{encoder_cell_forward.7} parent=5 // pred_check_branch
      %151 = sbr.rel (%p148) target = $region12
    $region11: #{encoder_cell_forward.7} parent=5 // pred_region
      %s152 = ssub.s32 %s9, 1
      // Predicated region
      $region13: #{encoder_cell_forward.7} parent=11 // pred_check
        %p153 = pneg %p110
      $region14: #{encoder_cell_forward.7} parent=11 // pred_check_branch
        %155 = sbr.rel (%p153) target = $region16
      $region15: #{encoder_cell_forward.7} parent=11 // pred_region
        %s156 = smul.u32 4, %s20
        %p157 = scmp.lt.s32.totalorder %s156, 3
        %s158 = scalar_select %p157, %s156, 3
        %s159 = scalar_lea.vmem %s2, %s158
        %s160 = smul.u32 4, %s20
      $region16: #{encoder_cell_forward.7} parent=11 // pred_fallthru
        _
    $region12: #{encoder_cell_forward.7} parent=5 // pred_fallthru
      _
    %p161 = scmp.lt.s32.totalorder %s9, 9
    // Predicated region
    $region17: #{encoder_cell_forward.7} parent=5 // pred_check
      %p162 = pneg %p161
    $region18: #{encoder_cell_forward.7} parent=5 // pred_check_branch
      %164 = sbr.rel (%p162) target = $region20
    $region19: #{encoder_cell_forward.7} parent=5 // pred_region
      // Predicated region
      $region21: #{encoder_cell_forward.7} parent=19 // pred_check
        %p165 = pneg %p50
      $region22: #{encoder_cell_forward.7} parent=19 // pred_check_branch
        %167 = sbr.rel (%p165) target = $region24
      $region23: #{encoder_cell_forward.7} parent=19 // pred_region
        %s168 = smul.u32 4, %s18
        %p169 = scmp.lt.s32.totalorder %s16, 0
        %s170 = scalar_select %p169, %s16, 0
        %p171 = scmp.lt.s32.totalorder %s168, 35
        %s172 = scalar_select %p171, %s168, 35
        %s173 = smul.addr %s170, 36
        %s174 = sadd.s32 %s172, %s173
        %s175 = smul.addr %s174, 4
        %s176 = scalar_lea.vmem %s0, %s175
        %s177 = smul.u32 4, %s18
      $region24: #{encoder_cell_forward.7} parent=19 // pred_fallthru
        _
      // Predicated region
      $region25: #{encoder_cell_forward.7} parent=19 // pred_check
        %p178 = pneg %p78
      $region26: #{encoder_cell_forward.7} parent=19 // pred_check_branch
        %180 = sbr.rel (%p178) target = $region28
      $region27: #{encoder_cell_forward.7} parent=19 // pred_region
        %s181 = smul.u32 64, %s18
        %s182 = smul.u32 4, %s17
        %p183 = scmp.lt.s32.totalorder %s181, 575
        %s184 = scalar_select %p183, %s181, 575
        %p185 = scmp.lt.s32.totalorder %s182, 3
        %s186 = scalar_select %p185, %s182, 3
        %s187 = smul.addr %s184, 4
        %s188 = sadd.s32 %s186, %s187
        %s189 = smul.addr %s188, 4
        %s190 = scalar_lea.vmem %s1, %s189
        %s191 = smul.u32 64, %s18
        %s192 = smul.u32 4, %s17
      $region28: #{encoder_cell_forward.7} parent=19 // pred_fallthru
        _
    $region20: #{encoder_cell_forward.7} parent=5 // pred_fallthru
      _
    %p193 = scmp.le.s32.totalorder 1, %s9
    %p194 = scmp.lt.s32.totalorder %s9, 10
    %p195 = pnand %p193, %p194
    %p196 = pneg %p195
    // Predicated region
    $region29: #{encoder_cell_forward.7} parent=5 // pred_check
      _
    $region30: #{encoder_cell_forward.7} parent=5 // pred_check_branch
      %198 = sbr.rel (%p195) target = $region32
    $region31: #{encoder_cell_forward.7} parent=5 // pred_region
      %s199 = ssub.s32 %s9, 1
      %s200 = smul.u32 4, %s21
      %p201 = scmp.lt.s32.totalorder %s19, 0
      %s202 = scalar_select %p201, %s19, 0
      %p203 = scmp.lt.s32.totalorder %s200, 35
      %s204 = scalar_select %p203, %s200, 35
      %s205 = smul.addr %s202, 36
      %s206 = sadd.s32 %s204, %s205
      %s207 = smul.addr %s206, 4
      %s208 = scalar_lea.vmem %s0, %s207
      %p209 = pneg %p56
      %p210 = pneg %p53
      %s211 = smul.u32 64, %s21
      %s212 = smul.u32 4, %s20
      %p213 = scmp.lt.s32.totalorder %s211, 575
      %s214 = scalar_select %p213, %s211, 575
      %p215 = scmp.lt.s32.totalorder %s212, 3
      %s216 = scalar_select %p215, %s212, 3
      %s217 = smul.addr %s214, 4
      %s218 = sadd.s32 %s216, %s217
      %s219 = smul.addr %s218, 4
      %s220 = scalar_lea.vmem %s1, %s219
      %p221 = pneg %p84
      %p222 = pneg %p81
      %s223 = smul.u32 4, %s20
      %p224 = scmp.lt.s32.totalorder %s223, 3
      %s225 = scalar_select %p224, %s223, 3
      %s226 = scalar_lea.vmem %s2, %s225
      %p227 = pneg %p110
      %p228 = pneg %p107
      %p229 = pneg %p138
      %p230 = pneg %p135
      %s231 = smul.u32 4, %s20
      %p232 = scmp.lt.s32.totalorder %s19, 0
      %s233 = scalar_select %p232, %s19, 0
      %p234 = scmp.lt.s32.totalorder %s231, 3
      %s235 = scalar_select %p234, %s231, 3
      %s236 = smul.addr %s233, 4
      %s237 = sadd.s32 %s235, %s236
      %s238 = smul.addr %s237, 8
      %s239 = scalar_lea.vmem %s3, %s238
      %s240 = smul.u32 4, %s21
      %p241 = scmp.lt.s32.totalorder %s19, 0
      %s242 = scalar_select %p241, %s19, 0
      %p243 = scmp.lt.s32.totalorder %s240, 35
      %s244 = scalar_select %p243, %s240, 35
      %s245 = smul.addr %s242, 36
      %s246 = sadd.s32 %s244, %s245
      %s247 = smul.addr %s246, 4
      %s248 = scalar_lea.vmem %s0, %s247
      %s249 = smul.u32 4, %s21
      %s250 = smul.u32 64, %s21
      %s251 = smul.u32 4, %s20
      %p252 = scmp.lt.s32.totalorder %s250, 575
      %s253 = scalar_select %p252, %s250, 575
      %p254 = scmp.lt.s32.totalorder %s251, 3
      %s255 = scalar_select %p254, %s251, 3
      %s256 = smul.addr %s253, 4
      %s257 = sadd.s32 %s255, %s256
      %s258 = smul.addr %s257, 4
      %s259 = scalar_lea.vmem %s1, %s258
      %s260 = smul.u32 64, %s21
      %s261 = smul.u32 4, %s20
      %s262 = smul.u32 4, %s20
      %p263 = scmp.lt.s32.totalorder %s262, 3
      %s264 = scalar_select %p263, %s262, 3
      %s265 = scalar_lea.vmem %s2, %s264
      %s266 = smul.u32 4, %s20
      %s267 = smul.u32 4, %s20
      %p268 = scmp.lt.s32.totalorder %s19, 0
      %s269 = scalar_select %p268, %s19, 0
      %p270 = scmp.lt.s32.totalorder %s267, 3
      %s271 = scalar_select %p270, %s267, 3
      %s272 = smul.addr %s269, 4
      %s273 = sadd.s32 %s271, %s272
      %s274 = smul.addr %s273, 8
      %s275 = scalar_lea.vmem %s3, %s274
      %s276 = smul.u32 4, %s20
      %p277 = scmp.eq.s32.totalorder %s21, 0
      // Predicated region
      $region33: #{encoder_cell_forward.7} parent=31 // pred_check
        %p278 = pneg %p277
      $region34: #{encoder_cell_forward.7} parent=31 // pred_check_branch
        %280 = sbr.rel (%p278) target = $region36
      $region35: #{encoder_cell_forward.7} parent=31 // pred_region
        %281 = vst [vmem:[#allocation2] sm:$0xff] 0.0
        %282 = vst [vmem:[#allocation2 + $0x8] sm:$0xff] 0.0
        %283 = vst [vmem:[#allocation2 + $0x10] sm:$0xff] 0.0
        %284 = vst [vmem:[#allocation2 + $0x18] sm:$0xff] 0.0
      $region36: #{encoder_cell_forward.7} parent=31 // pred_fallthru
        _
      %v285 = vld [vmem:[#allocation2] sm:$0xff]
      %v286 = vld [vmem:[#allocation2 + $0x8] sm:$0xff]
      %v287 = vld [vmem:[#allocation2 + $0x10] sm:$0xff]
      %v288 = vld [vmem:[#allocation2 + $0x18] sm:$0xff]
      %v289 = vld [vmem:[%s248] sm:$0xff]
      %v290 = vld [vmem:[%s248 + $0x8] sm:$0xff]
      %v291 = vld [vmem:[%s259] sm:$0xff]
      %v292 = vld [vmem:[%s259 + $0x8] sm:$0xff]
      %v293 = vld [vmem:[%s259 + $0x10] sm:$0xff]
      %v294 = vld [vmem:[%s259 + $0x18] sm:$0xff]
      %v295 = vld [vmem:[%s259 + $0x20] sm:$0xff]
      %v296 = vld [vmem:[%s259 + $0x28] sm:$0xff]
      %v297 = vld [vmem:[%s259 + $0x30] sm:$0xff]
      %v298 = vld [vmem:[%s259 + $0x38] sm:$0xff]
      %v299 = vld [vmem:[%s259 + $0x40] sm:$0xff]
      %v300 = vld [vmem:[%s259 + $0x48] sm:$0xff]
      %v301 = vld [vmem:[%s259 + $0x50] sm:$0xff]
      %v302 = vld [vmem:[%s259 + $0x58] sm:$0xff]
      %v303 = vld [vmem:[%s259 + $0x60] sm:$0xff]
      %v304 = vld [vmem:[%s259 + $0x68] sm:$0xff]
      %v305 = vld [vmem:[%s259 + $0x70] sm:$0xff]
      %v306 = vld [vmem:[%s259 + $0x78] sm:$0xff]
      %v307 = vld [vmem:[%s259 + $0x80] sm:$0xff]
      %v308 = vld [vmem:[%s259 + $0x88] sm:$0xff]
      %v309 = vld [vmem:[%s259 + $0x90] sm:$0xff]
      %v310 = vld [vmem:[%s259 + $0x98] sm:$0xff]
      %v311 = vld [vmem:[%s259 + $0xa0] sm:$0xff]
      %v312 = vld [vmem:[%s259 + $0xa8] sm:$0xff]
      %v313 = vld [vmem:[%s259 + $0xb0] sm:$0xff]
      %v314 = vld [vmem:[%s259 + $0xb8] sm:$0xff]
      %v315 = vld [vmem:[%s259 + $0xc0] sm:$0xff]
      %v316 = vld [vmem:[%s259 + $0xc8] sm:$0xff]
      %v317 = vld [vmem:[%s259 + $0xd0] sm:$0xff]
      %v318 = vld [vmem:[%s259 + $0xd8] sm:$0xff]
      %v319 = vld [vmem:[%s259 + $0xe0] sm:$0xff]
      %v320 = vld [vmem:[%s259 + $0xe8] sm:$0xff]
      %v321 = vld [vmem:[%s259 + $0xf0] sm:$0xff]
      %v322 = vld [vmem:[%s259 + $0xf8] sm:$0xff]
      %v323 = vld [vmem:[%s259 + $0x100] sm:$0xff]
      %v324 = vld [vmem:[%s259 + $0x108] sm:$0xff]
      %v325 = vld [vmem:[%s259 + $0x110] sm:$0xff]
      %v326 = vld [vmem:[%s259 + $0x118] sm:$0xff]
      %v327 = vld [vmem:[%s259 + $0x120] sm:$0xff]
      %v328 = vld [vmem:[%s259 + $0x128] sm:$0xff]
      %v329 = vld [vmem:[%s259 + $0x130] sm:$0xff]
      %v330 = vld [vmem:[%s259 + $0x138] sm:$0xff]
      %v331 = vld [vmem:[%s259 + $0x140] sm:$0xff]
      %v332 = vld [vmem:[%s259 + $0x148] sm:$0xff]
      %v333 = vld [vmem:[%s259 + $0x150] sm:$0xff]
      %v334 = vld [vmem:[%s259 + $0x158] sm:$0xff]
      %v335 = vld [vmem:[%s259 + $0x160] sm:$0xff]
      %v336 = vld [vmem:[%s259 + $0x168] sm:$0xff]
      %v337 = vld [vmem:[%s259 + $0x170] sm:$0xff]
      %v338 = vld [vmem:[%s259 + $0x178] sm:$0xff]
      %v339 = vld [vmem:[%s259 + $0x180] sm:$0xff]
      %v340 = vld [vmem:[%s259 + $0x188] sm:$0xff]
      %v341 = vld [vmem:[%s259 + $0x190] sm:$0xff]
      %v342 = vld [vmem:[%s259 + $0x198] sm:$0xff]
      %v343 = vld [vmem:[%s259 + $0x1a0] sm:$0xff]
      %v344 = vld [vmem:[%s259 + $0x1a8] sm:$0xff]
      %v345 = vld [vmem:[%s259 + $0x1b0] sm:$0xff]
      %v346 = vld [vmem:[%s259 + $0x1b8] sm:$0xff]
      %v347 = vld [vmem:[%s259 + $0x1c0] sm:$0xff]
      %v348 = vld [vmem:[%s259 + $0x1c8] sm:$0xff]
      %v349 = vld [vmem:[%s259 + $0x1d0] sm:$0xff]
      %v350 = vld [vmem:[%s259 + $0x1d8] sm:$0xff]
      %v351 = vld [vmem:[%s259 + $0x1e0] sm:$0xff]
      %v352 = vld [vmem:[%s259 + $0x1e8] sm:$0xff]
      %v353 = vld [vmem:[%s259 + $0x1f0] sm:$0xff]
      %v354 = vld [vmem:[%s259 + $0x1f8] sm:$0xff]
      %v355 = vld [vmem:[%s259 + $0x200] sm:$0xff]
      %v356 = vld [vmem:[%s259 + $0x208] sm:$0xff]
      %v357 = vld [vmem:[%s259 + $0x210] sm:$0xff]
      %v358 = vld [vmem:[%s259 + $0x218] sm:$0xff]
      %v359 = vld [vmem:[%s259 + $0x220] sm:$0xff]
      %v360 = vld [vmem:[%s259 + $0x228] sm:$0xff]
      %v361 = vld [vmem:[%s259 + $0x230] sm:$0xff]
      %v362 = vld [vmem:[%s259 + $0x238] sm:$0xff]
      %v363 = vld [vmem:[%s259 + $0x240] sm:$0xff]
      %v364 = vld [vmem:[%s259 + $0x248] sm:$0xff]
      %v365 = vld [vmem:[%s259 + $0x250] sm:$0xff]
      %v366 = vld [vmem:[%s259 + $0x258] sm:$0xff]
      %v367 = vld [vmem:[%s259 + $0x260] sm:$0xff]
      %v368 = vld [vmem:[%s259 + $0x268] sm:$0xff]
      %v369 = vld [vmem:[%s259 + $0x270] sm:$0xff]
      %v370 = vld [vmem:[%s259 + $0x278] sm:$0xff]
      %v371 = vld [vmem:[%s259 + $0x280] sm:$0xff]
      %v372 = vld [vmem:[%s259 + $0x288] sm:$0xff]
      %v373 = vld [vmem:[%s259 + $0x290] sm:$0xff]
      %v374 = vld [vmem:[%s259 + $0x298] sm:$0xff]
      %v375 = vld [vmem:[%s259 + $0x2a0] sm:$0xff]
      %v376 = vld [vmem:[%s259 + $0x2a8] sm:$0xff]
      %v377 = vld [vmem:[%s259 + $0x2b0] sm:$0xff]
      %v378 = vld [vmem:[%s259 + $0x2b8] sm:$0xff]
      %v379 = vld [vmem:[%s259 + $0x2c0] sm:$0xff]
      %v380 = vld [vmem:[%s259 + $0x2c8] sm:$0xff]
      %v381 = vld [vmem:[%s259 + $0x2d0] sm:$0xff]
      %v382 = vld [vmem:[%s259 + $0x2d8] sm:$0xff]
      %v383 = vld [vmem:[%s259 + $0x2e0] sm:$0xff]
      %v384 = vld [vmem:[%s259 + $0x2e8] sm:$0xff]
      %v385 = vld [vmem:[%s259 + $0x2f0] sm:$0xff]
      %v386 = vld [vmem:[%s259 + $0x2f8] sm:$0xff]
      %v387 = vld [vmem:[%s259 + $0x300] sm:$0xff]
      %v388 = vld [vmem:[%s259 + $0x308] sm:$0xff]
      %v389 = vld [vmem:[%s259 + $0x310] sm:$0xff]
      %v390 = vld [vmem:[%s259 + $0x318] sm:$0xff]
      %v391 = vld [vmem:[%s259 + $0x320] sm:$0xff]
      %v392 = vld [vmem:[%s259 + $0x328] sm:$0xff]
      %v393 = vld [vmem:[%s259 + $0x330] sm:$0xff]
      %v394 = vld [vmem:[%s259 + $0x338] sm:$0xff]
      %v395 = vld [vmem:[%s259 + $0x340] sm:$0xff]
      %v396 = vld [vmem:[%s259 + $0x348] sm:$0xff]
      %v397 = vld [vmem:[%s259 + $0x350] sm:$0xff]
      %v398 = vld [vmem:[%s259 + $0x358] sm:$0xff]
      %v399 = vld [vmem:[%s259 + $0x360] sm:$0xff]
      %v400 = vld [vmem:[%s259 + $0x368] sm:$0xff]
      %v401 = vld [vmem:[%s259 + $0x370] sm:$0xff]
      %v402 = vld [vmem:[%s259 + $0x378] sm:$0xff]
      %v403 = vld [vmem:[%s259 + $0x380] sm:$0xff]
      %v404 = vld [vmem:[%s259 + $0x388] sm:$0xff]
      %v405 = vld [vmem:[%s259 + $0x390] sm:$0xff]
      %v406 = vld [vmem:[%s259 + $0x398] sm:$0xff]
      %v407 = vld [vmem:[%s259 + $0x3a0] sm:$0xff]
      %v408 = vld [vmem:[%s259 + $0x3a8] sm:$0xff]
      %v409 = vld [vmem:[%s259 + $0x3b0] sm:$0xff]
      %v410 = vld [vmem:[%s259 + $0x3b8] sm:$0xff]
      %v411 = vld [vmem:[%s259 + $0x3c0] sm:$0xff]
      %v412 = vld [vmem:[%s259 + $0x3c8] sm:$0xff]
      %v413 = vld [vmem:[%s259 + $0x3d0] sm:$0xff]
      %v414 = vld [vmem:[%s259 + $0x3d8] sm:$0xff]
      %v415 = vld [vmem:[%s259 + $0x3e0] sm:$0xff]
      %v416 = vld [vmem:[%s259 + $0x3e8] sm:$0xff]
      %v417 = vld [vmem:[%s259 + $0x3f0] sm:$0xff]
      %v418 = vld [vmem:[%s259 + $0x3f8] sm:$0xff]
      %v421 = vunpack.c.l.b16 %v289
      %v422 = vunpack.c.h.b16 %v289
      %v423 = vunpack.c.l.b16 %v290
      %v424 = vunpack.c.h.b16 %v290
      %v425 = vpack.c.b16 %v421, %v421
      %v426 = vpack.c.b16 %v422, %v422
      %v427 = vpack.c.b16 %v423, %v423
      %v428 = vpack.c.b16 %v424, %v424
      %v561 = vunpack.c.l.b16 %v291
      %v562 = vunpack.c.h.b16 %v291
      %v563 = vunpack.c.l.b16 %v292
      %v564 = vunpack.c.h.b16 %v292
      %v565 = vunpack.c.l.b16 %v293
      %v566 = vunpack.c.h.b16 %v293
      %v567 = vunpack.c.l.b16 %v294
      %v568 = vunpack.c.h.b16 %v294
      %v569 = vunpack.c.l.b16 %v295
      %v570 = vunpack.c.h.b16 %v295
      %v571 = vunpack.c.l.b16 %v296
      %v572 = vunpack.c.h.b16 %v296
      %v573 = vunpack.c.l.b16 %v297
      %v574 = vunpack.c.h.b16 %v297
      %v575 = vunpack.c.l.b16 %v298
      %v576 = vunpack.c.h.b16 %v298
      %v577 = vunpack.c.l.b16 %v299
      %v578 = vunpack.c.h.b16 %v299
      %v579 = vunpack.c.l.b16 %v300
      %v580 = vunpack.c.h.b16 %v300
      %v581 = vunpack.c.l.b16 %v301
      %v582 = vunpack.c.h.b16 %v301
      %v583 = vunpack.c.l.b16 %v302
      %v584 = vunpack.c.h.b16 %v302
      %v585 = vunpack.c.l.b16 %v303
      %v586 = vunpack.c.h.b16 %v303
      %v587 = vunpack.c.l.b16 %v304
      %v588 = vunpack.c.h.b16 %v304
      %v589 = vunpack.c.l.b16 %v305
      %v590 = vunpack.c.h.b16 %v305
      %v591 = vunpack.c.l.b16 %v306
      %v592 = vunpack.c.h.b16 %v306
      %v593 = vunpack.c.l.b16 %v307
      %v594 = vunpack.c.h.b16 %v307
      %v595 = vunpack.c.l.b16 %v308
      %v596 = vunpack.c.h.b16 %v308
      %v597 = vunpack.c.l.b16 %v309
      %v598 = vunpack.c.h.b16 %v309
      %v599 = vunpack.c.l.b16 %v310
      %v600 = vunpack.c.h.b16 %v310
      %v601 = vunpack.c.l.b16 %v311
      %v602 = vunpack.c.h.b16 %v311
      %v603 = vunpack.c.l.b16 %v312
      %v604 = vunpack.c.h.b16 %v312
      %v605 = vunpack.c.l.b16 %v313
      %v606 = vunpack.c.h.b16 %v313
      %v607 = vunpack.c.l.b16 %v314
      %v608 = vunpack.c.h.b16 %v314
      %v609 = vunpack.c.l.b16 %v315
      %v610 = vunpack.c.h.b16 %v315
      %v611 = vunpack.c.l.b16 %v316
      %v612 = vunpack.c.h.b16 %v316
      %v613 = vunpack.c.l.b16 %v317
      %v614 = vunpack.c.h.b16 %v317
      %v615 = vunpack.c.l.b16 %v318
      %v616 = vunpack.c.h.b16 %v318
      %v617 = vunpack.c.l.b16 %v319
      %v618 = vunpack.c.h.b16 %v319
      %v619 = vunpack.c.l.b16 %v320
      %v620 = vunpack.c.h.b16 %v320
      %v621 = vunpack.c.l.b16 %v321
      %v622 = vunpack.c.h.b16 %v321
      %v623 = vunpack.c.l.b16 %v322
      %v624 = vunpack.c.h.b16 %v322
      %v625 = vunpack.c.l.b16 %v323
      %v626 = vunpack.c.h.b16 %v323
      %v627 = vunpack.c.l.b16 %v324
      %v628 = vunpack.c.h.b16 %v324
      %v629 = vunpack.c.l.b16 %v325
      %v630 = vunpack.c.h.b16 %v325
      %v631 = vunpack.c.l.b16 %v326
      %v632 = vunpack.c.h.b16 %v326
      %v633 = vunpack.c.l.b16 %v327
      %v634 = vunpack.c.h.b16 %v327
      %v635 = vunpack.c.l.b16 %v328
      %v636 = vunpack.c.h.b16 %v328
      %v637 = vunpack.c.l.b16 %v329
      %v638 = vunpack.c.h.b16 %v329
      %v639 = vunpack.c.l.b16 %v330
      %v640 = vunpack.c.h.b16 %v330
      %v641 = vunpack.c.l.b16 %v331
      %v642 = vunpack.c.h.b16 %v331
      %v643 = vunpack.c.l.b16 %v332
      %v644 = vunpack.c.h.b16 %v332
      %v645 = vunpack.c.l.b16 %v333
      %v646 = vunpack.c.h.b16 %v333
      %v647 = vunpack.c.l.b16 %v334
      %v648 = vunpack.c.h.b16 %v334
      %v649 = vunpack.c.l.b16 %v335
      %v650 = vunpack.c.h.b16 %v335
      %v651 = vunpack.c.l.b16 %v336
      %v652 = vunpack.c.h.b16 %v336
      %v653 = vunpack.c.l.b16 %v337
      %v654 = vunpack.c.h.b16 %v337
      %v655 = vunpack.c.l.b16 %v338
      %v656 = vunpack.c.h.b16 %v338
      %v657 = vunpack.c.l.b16 %v339
      %v658 = vunpack.c.h.b16 %v339
      %v659 = vunpack.c.l.b16 %v340
      %v660 = vunpack.c.h.b16 %v340
      %v661 = vunpack.c.l.b16 %v341
      %v662 = vunpack.c.h.b16 %v341
      %v663 = vunpack.c.l.b16 %v342
      %v664 = vunpack.c.h.b16 %v342
      %v665 = vunpack.c.l.b16 %v343
      %v666 = vunpack.c.h.b16 %v343
      %v667 = vunpack.c.l.b16 %v344
      %v668 = vunpack.c.h.b16 %v344
      %v669 = vunpack.c.l.b16 %v345
      %v670 = vunpack.c.h.b16 %v345
      %v671 = vunpack.c.l.b16 %v346
      %v672 = vunpack.c.h.b16 %v346
      %v673 = vunpack.c.l.b16 %v347
      %v674 = vunpack.c.h.b16 %v347
      %v675 = vunpack.c.l.b16 %v348
      %v676 = vunpack.c.h.b16 %v348
      %v677 = vunpack.c.l.b16 %v349
      %v678 = vunpack.c.h.b16 %v349
      %v679 = vunpack.c.l.b16 %v350
      %v680 = vunpack.c.h.b16 %v350
      %v681 = vunpack.c.l.b16 %v351
      %v682 = vunpack.c.h.b16 %v351
      %v683 = vunpack.c.l.b16 %v352
      %v684 = vunpack.c.h.b16 %v352
      %v685 = vunpack.c.l.b16 %v353
      %v686 = vunpack.c.h.b16 %v353
      %v687 = vunpack.c.l.b16 %v354
      %v688 = vunpack.c.h.b16 %v354
      %v689 = vunpack.c.l.b16 %v355
      %v690 = vunpack.c.h.b16 %v355
      %v691 = vunpack.c.l.b16 %v356
      %v692 = vunpack.c.h.b16 %v356
      %v693 = vunpack.c.l.b16 %v357
      %v694 = vunpack.c.h.b16 %v357
      %v695 = vunpack.c.l.b16 %v358
      %v696 = vunpack.c.h.b16 %v358
      %v697 = vunpack.c.l.b16 %v359
      %v698 = vunpack.c.h.b16 %v359
      %v699 = vunpack.c.l.b16 %v360
      %v700 = vunpack.c.h.b16 %v360
      %v701 = vunpack.c.l.b16 %v361
      %v702 = vunpack.c.h.b16 %v361
      %v703 = vunpack.c.l.b16 %v362
      %v704 = vunpack.c.h.b16 %v362
      %v705 = vunpack.c.l.b16 %v363
      %v706 = vunpack.c.h.b16 %v363
      %v707 = vunpack.c.l.b16 %v364
      %v708 = vunpack.c.h.b16 %v364
      %v709 = vunpack.c.l.b16 %v365
      %v710 = vunpack.c.h.b16 %v365
      %v711 = vunpack.c.l.b16 %v366
      %v712 = vunpack.c.h.b16 %v366
      %v713 = vunpack.c.l.b16 %v367
      %v714 = vunpack.c.h.b16 %v367
      %v715 = vunpack.c.l.b16 %v368
      %v716 = vunpack.c.h.b16 %v368
      %v717 = vunpack.c.l.b16 %v369
      %v718 = vunpack.c.h.b16 %v369
      %v719 = vunpack.c.l.b16 %v370
      %v720 = vunpack.c.h.b16 %v370
      %v721 = vunpack.c.l.b16 %v371
      %v722 = vunpack.c.h.b16 %v371
      %v723 = vunpack.c.l.b16 %v372
      %v724 = vunpack.c.h.b16 %v372
      %v725 = vunpack.c.l.b16 %v373
      %v726 = vunpack.c.h.b16 %v373
      %v727 = vunpack.c.l.b16 %v374
      %v728 = vunpack.c.h.b16 %v374
      %v729 = vunpack.c.l.b16 %v375
      %v730 = vunpack.c.h.b16 %v375
      %v731 = vunpack.c.l.b16 %v376
      %v732 = vunpack.c.h.b16 %v376
      %v733 = vunpack.c.l.b16 %v377
      %v734 = vunpack.c.h.b16 %v377
      %v735 = vunpack.c.l.b16 %v378
      %v736 = vunpack.c.h.b16 %v378
      %v737 = vunpack.c.l.b16 %v379
      %v738 = vunpack.c.h.b16 %v379
      %v739 = vunpack.c.l.b16 %v380
      %v740 = vunpack.c.h.b16 %v380
      %v741 = vunpack.c.l.b16 %v381
      %v742 = vunpack.c.h.b16 %v381
      %v743 = vunpack.c.l.b16 %v382
      %v744 = vunpack.c.h.b16 %v382
      %v745 = vunpack.c.l.b16 %v383
      %v746 = vunpack.c.h.b16 %v383
      %v747 = vunpack.c.l.b16 %v384
      %v748 = vunpack.c.h.b16 %v384
      %v749 = vunpack.c.l.b16 %v385
      %v750 = vunpack.c.h.b16 %v385
      %v751 = vunpack.c.l.b16 %v386
      %v752 = vunpack.c.h.b16 %v386
      %v753 = vunpack.c.l.b16 %v387
      %v754 = vunpack.c.h.b16 %v387
      %v755 = vunpack.c.l.b16 %v388
      %v756 = vunpack.c.h.b16 %v388
      %v757 = vunpack.c.l.b16 %v389
      %v758 = vunpack.c.h.b16 %v389
      %v759 = vunpack.c.l.b16 %v390
      %v760 = vunpack.c.h.b16 %v390
      %v761 = vunpack.c.l.b16 %v391
      %v762 = vunpack.c.h.b16 %v391
      %v763 = vunpack.c.l.b16 %v392
      %v764 = vunpack.c.h.b16 %v392
      %v765 = vunpack.c.l.b16 %v393
      %v766 = vunpack.c.h.b16 %v393
      %v767 = vunpack.c.l.b16 %v394
      %v768 = vunpack.c.h.b16 %v394
      %v769 = vunpack.c.l.b16 %v395
      %v770 = vunpack.c.h.b16 %v395
      %v771 = vunpack.c.l.b16 %v396
      %v772 = vunpack.c.h.b16 %v396
      %v773 = vunpack.c.l.b16 %v397
      %v774 = vunpack.c.h.b16 %v397
      %v775 = vunpack.c.l.b16 %v398
      %v776 = vunpack.c.h.b16 %v398
      %v777 = vunpack.c.l.b16 %v399
      %v778 = vunpack.c.h.b16 %v399
      %v779 = vunpack.c.l.b16 %v400
      %v780 = vunpack.c.h.b16 %v400
      %v781 = vunpack.c.l.b16 %v401
      %v782 = vunpack.c.h.b16 %v401
      %v783 = vunpack.c.l.b16 %v402
      %v784 = vunpack.c.h.b16 %v402
      %v785 = vunpack.c.l.b16 %v403
      %v786 = vunpack.c.h.b16 %v403
      %v787 = vunpack.c.l.b16 %v404
      %v788 = vunpack.c.h.b16 %v404
      %v789 = vunpack.c.l.b16 %v405
      %v790 = vunpack.c.h.b16 %v405
      %v791 = vunpack.c.l.b16 %v406
      %v792 = vunpack.c.h.b16 %v406
      %v793 = vunpack.c.l.b16 %v407
      %v794 = vunpack.c.h.b16 %v407
      %v795 = vunpack.c.l.b16 %v408
      %v796 = vunpack.c.h.b16 %v408
      %v797 = vunpack.c.l.b16 %v409
      %v798 = vunpack.c.h.b16 %v409
      %v799 = vunpack.c.l.b16 %v410
      %v800 = vunpack.c.h.b16 %v410
      %v801 = vunpack.c.l.b16 %v411
      %v802 = vunpack.c.h.b16 %v411
      %v803 = vunpack.c.l.b16 %v412
      %v804 = vunpack.c.h.b16 %v412
      %v805 = vunpack.c.l.b16 %v413
      %v806 = vunpack.c.h.b16 %v413
      %v807 = vunpack.c.l.b16 %v414
      %v808 = vunpack.c.h.b16 %v414
      %v809 = vunpack.c.l.b16 %v415
      %v810 = vunpack.c.h.b16 %v415
      %v811 = vunpack.c.l.b16 %v416
      %v812 = vunpack.c.h.b16 %v416
      %v813 = vunpack.c.l.b16 %v417
      %v814 = vunpack.c.h.b16 %v417
      %v815 = vunpack.c.l.b16 %v418
      %v816 = vunpack.c.h.b16 %v418
      %v817 = vpack.c.b16 %v565, %v561
      %v818 = vpack.c.b16 %v566, %v562
      %v819 = vpack.c.b16 %v567, %v563
      %v820 = vpack.c.b16 %v568, %v564
      %v821 = vpack.c.b16 %v573, %v569
      %v822 = vpack.c.b16 %v574, %v570
      %v823 = vpack.c.b16 %v575, %v571
      %v824 = vpack.c.b16 %v576, %v572
      %v825 = vpack.c.b16 %v581, %v577
      %v826 = vpack.c.b16 %v582, %v578
      %v827 = vpack.c.b16 %v583, %v579
      %v828 = vpack.c.b16 %v584, %v580
      %v829 = vpack.c.b16 %v589, %v585
      %v830 = vpack.c.b16 %v590, %v586
      %v831 = vpack.c.b16 %v591, %v587
      %v832 = vpack.c.b16 %v592, %v588
      %v833 = vpack.c.b16 %v597, %v593
      %v834 = vpack.c.b16 %v598, %v594
      %v835 = vpack.c.b16 %v599, %v595
      %v836 = vpack.c.b16 %v600, %v596
      %v837 = vpack.c.b16 %v605, %v601
      %v838 = vpack.c.b16 %v606, %v602
      %v839 = vpack.c.b16 %v607, %v603
      %v840 = vpack.c.b16 %v608, %v604
      %v841 = vpack.c.b16 %v613, %v609
      %v842 = vpack.c.b16 %v614, %v610
      %v843 = vpack.c.b16 %v615, %v611
      %v844 = vpack.c.b16 %v616, %v612
      %v845 = vpack.c.b16 %v621, %v617
      %v846 = vpack.c.b16 %v622, %v618
      %v847 = vpack.c.b16 %v623, %v619
      %v848 = vpack.c.b16 %v624, %v620
      %v849 = vpack.c.b16 %v629, %v625
      %v850 = vpack.c.b16 %v630, %v626
      %v851 = vpack.c.b16 %v631, %v627
      %v852 = vpack.c.b16 %v632, %v628
      %v853 = vpack.c.b16 %v637, %v633
      %v854 = vpack.c.b16 %v638, %v634
      %v855 = vpack.c.b16 %v639, %v635
      %v856 = vpack.c.b16 %v640, %v636
      %v857 = vpack.c.b16 %v645, %v641
      %v858 = vpack.c.b16 %v646, %v642
      %v859 = vpack.c.b16 %v647, %v643
      %v860 = vpack.c.b16 %v648, %v644
      %v861 = vpack.c.b16 %v653, %v649
      %v862 = vpack.c.b16 %v654, %v650
      %v863 = vpack.c.b16 %v655, %v651
      %v864 = vpack.c.b16 %v656, %v652
      %v865 = vpack.c.b16 %v661, %v657
      %v866 = vpack.c.b16 %v662, %v658
      %v867 = vpack.c.b16 %v663, %v659
      %v868 = vpack.c.b16 %v664, %v660
      %v869 = vpack.c.b16 %v669, %v665
      %v870 = vpack.c.b16 %v670, %v666
      %v871 = vpack.c.b16 %v671, %v667
      %v872 = vpack.c.b16 %v672, %v668
      %v873 = vpack.c.b16 %v677, %v673
      %v874 = vpack.c.b16 %v678, %v674
      %v875 = vpack.c.b16 %v679, %v675
      %v876 = vpack.c.b16 %v680, %v676
      %v877 = vpack.c.b16 %v685, %v681
      %v878 = vpack.c.b16 %v686, %v682
      %v879 = vpack.c.b16 %v687, %v683
      %v880 = vpack.c.b16 %v688, %v684
      %v881 = vpack.c.b16 %v693, %v689
      %v882 = vpack.c.b16 %v694, %v690
      %v883 = vpack.c.b16 %v695, %v691
      %v884 = vpack.c.b16 %v696, %v692
      %v885 = vpack.c.b16 %v701, %v697
      %v886 = vpack.c.b16 %v702, %v698
      %v887 = vpack.c.b16 %v703, %v699
      %v888 = vpack.c.b16 %v704, %v700
      %v889 = vpack.c.b16 %v709, %v705
      %v890 = vpack.c.b16 %v710, %v706
      %v891 = vpack.c.b16 %v711, %v707
      %v892 = vpack.c.b16 %v712, %v708
      %v893 = vpack.c.b16 %v717, %v713
      %v894 = vpack.c.b16 %v718, %v714
      %v895 = vpack.c.b16 %v719, %v715
      %v896 = vpack.c.b16 %v720, %v716
      %v897 = vpack.c.b16 %v725, %v721
      %v898 = vpack.c.b16 %v726, %v722
      %v899 = vpack.c.b16 %v727, %v723
      %v900 = vpack.c.b16 %v728, %v724
      %v901 = vpack.c.b16 %v733, %v729
      %v902 = vpack.c.b16 %v734, %v730
      %v903 = vpack.c.b16 %v735, %v731
      %v904 = vpack.c.b16 %v736, %v732
      %v905 = vpack.c.b16 %v741, %v737
      %v906 = vpack.c.b16 %v742, %v738
      %v907 = vpack.c.b16 %v743, %v739
      %v908 = vpack.c.b16 %v744, %v740
      %v909 = vpack.c.b16 %v749, %v745
      %v910 = vpack.c.b16 %v750, %v746
      %v911 = vpack.c.b16 %v751, %v747
      %v912 = vpack.c.b16 %v752, %v748
      %v913 = vpack.c.b16 %v757, %v753
      %v914 = vpack.c.b16 %v758, %v754
      %v915 = vpack.c.b16 %v759, %v755
      %v916 = vpack.c.b16 %v760, %v756
      %v917 = vpack.c.b16 %v765, %v761
      %v918 = vpack.c.b16 %v766, %v762
      %v919 = vpack.c.b16 %v767, %v763
      %v920 = vpack.c.b16 %v768, %v764
      %v921 = vpack.c.b16 %v773, %v769
      %v922 = vpack.c.b16 %v774, %v770
      %v923 = vpack.c.b16 %v775, %v771
      %v924 = vpack.c.b16 %v776, %v772
      %v925 = vpack.c.b16 %v781, %v777
      %v926 = vpack.c.b16 %v782, %v778
      %v927 = vpack.c.b16 %v783, %v779
      %v928 = vpack.c.b16 %v784, %v780
      %v929 = vpack.c.b16 %v789, %v785
      %v930 = vpack.c.b16 %v790, %v786
      %v931 = vpack.c.b16 %v791, %v787
      %v932 = vpack.c.b16 %v792, %v788
      %v933 = vpack.c.b16 %v797, %v793
      %v934 = vpack.c.b16 %v798, %v794
      %v935 = vpack.c.b16 %v799, %v795
      %v936 = vpack.c.b16 %v800, %v796
      %v937 = vpack.c.b16 %v805, %v801
      %v938 = vpack.c.b16 %v806, %v802
      %v939 = vpack.c.b16 %v807, %v803
      %v940 = vpack.c.b16 %v808, %v804
      %v941 = vpack.c.b16 %v813, %v809
      %v942 = vpack.c.b16 %v814, %v810
      %v943 = vpack.c.b16 %v815, %v811
      %v944 = vpack.c.b16 %v816, %v812
      %1073 = vmatprep.subr.bf16.mxu0 %v846
      %1074 = vmatpush1.bf16.msra.mxu0 %v845
      %1075 = vmatprep.subr.bf16.mxu0 %v842
      %1076 = vmatpush1.bf16.msra.mxu0 %v841
      %1077 = vmatprep.subr.bf16.mxu0 %v838
      %1078 = vmatpush1.bf16.msra.mxu0 %v837
      %1079 = vmatprep.subr.bf16.mxu0 %v834
      %1080 = vmatpush1.bf16.msra.mxu0 %v833
      %1081 = vmatprep.subr.bf16.mxu0 %v830
      %1082 = vmatpush1.bf16.msra.mxu0 %v829
      %1083 = vmatprep.subr.bf16.mxu0 %v826
      %1084 = vmatpush1.bf16.msra.mxu0 %v825
      %1085 = vmatprep.subr.bf16.mxu0 %v822
      %1086 = vmatpush1.bf16.msra.mxu0 %v821
      %1087 = vmatprep.subr.bf16.mxu0 %v818
      %1088 = vmatpush1.bf16.msra.mxu0 %v817
      %1089 = vmatprep.subr.bf16.mxu0 %v878
      %1090 = vmatpush2.bf16.msra.mxu0 %v877
      %1091 = vmatprep.subr.bf16.mxu0 %v874
      %1092 = vmatpush2.bf16.msra.mxu0 %v873
      %1093 = vmatprep.subr.bf16.mxu0 %v870
      %1094 = vmatpush2.bf16.msra.mxu0 %v869
      %1095 = vmatprep.subr.bf16.mxu0 %v866
      %1096 = vmatpush2.bf16.msra.mxu0 %v865
      %1097 = vmatprep.subr.bf16.mxu0 %v862
      %1098 = vmatpush2.bf16.msra.mxu0 %v861
      %1099 = vmatprep.subr.bf16.mxu0 %v858
      %1100 = vmatpush2.bf16.msra.mxu0 %v857
      %1101 = vmatprep.subr.bf16.mxu0 %v854
      %1102 = vmatpush2.bf16.msra.mxu0 %v853
      %1103 = vmatprep.subr.bf16.mxu0 %v850
      %1104 = vmatpush2.bf16.msra.mxu0 %v849
      %1105 = vmatprep.mubr.bf16.mxu0 %v426
      %1106 = vmatmul.mubr.bf16.gmra.mxu0 %v425
      %v1107 = vpop.f32.mrf.mxu0
      %v1108 = vadd.f32 0.0, %v1107
      %v1109 = vpop.f32.mrf.mxu0
      %v1110 = vadd.f32 0.0, %v1109
      %v1111 = vpop.f32.mrf.mxu0
      %v1112 = vpop.f32.mrf.mxu0
      %1113 = vdwg.mxu0
      %1114 = vmatprep.subr.bf16.mxu0 %v910
      %1115 = vmatpush1.bf16.msra.mxu0 %v909
      %1116 = vmatprep.subr.bf16.mxu0 %v906
      %1117 = vmatpush1.bf16.msra.mxu0 %v905
      %1118 = vmatprep.subr.bf16.mxu0 %v902
      %1119 = vmatpush1.bf16.msra.mxu0 %v901
      %1120 = vmatprep.subr.bf16.mxu0 %v898
      %1121 = vmatpush1.bf16.msra.mxu0 %v897
      %1122 = vmatprep.subr.bf16.mxu0 %v894
      %1123 = vmatpush1.bf16.msra.mxu0 %v893
      %1124 = vmatprep.subr.bf16.mxu0 %v890
      %1125 = vmatpush1.bf16.msra.mxu0 %v889
      %1126 = vmatprep.subr.bf16.mxu0 %v886
      %1127 = vmatpush1.bf16.msra.mxu0 %v885
      %1128 = vmatprep.subr.bf16.mxu0 %v882
      %1129 = vmatpush1.bf16.msra.mxu0 %v881
      %1130 = vmatprep.subr.bf16.mxu0 %v942
      %1131 = vmatpush2.bf16.msra.mxu0 %v941
      %1132 = vmatprep.subr.bf16.mxu0 %v938
      %1133 = vmatpush2.bf16.msra.mxu0 %v937
      %1134 = vmatprep.subr.bf16.mxu0 %v934
      %1135 = vmatpush2.bf16.msra.mxu0 %v933
      %1136 = vmatprep.subr.bf16.mxu0 %v930
      %1137 = vmatpush2.bf16.msra.mxu0 %v929
      %1138 = vmatprep.subr.bf16.mxu0 %v926
      %1139 = vmatpush2.bf16.msra.mxu0 %v925
      %1140 = vmatprep.subr.bf16.mxu0 %v922
      %1141 = vmatpush2.bf16.msra.mxu0 %v921
      %1142 = vmatprep.subr.bf16.mxu0 %v918
      %1143 = vmatpush2.bf16.msra.mxu0 %v917
      %1144 = vmatprep.subr.bf16.mxu0 %v914
      %1145 = vmatpush2.bf16.msra.mxu0 %v913
      %1146 = vmatprep.mubr.bf16.mxu0 %v428
      %1147 = vmatmul.mubr.bf16.gmra.mxu0 %v427
      %v1148 = vpop.f32.mrf.mxu0
      %v1149 = vadd.f32 %v1108, %v1148
      %v1150 = vpop.f32.mrf.mxu0
      %v1151 = vadd.f32 %v1110, %v1150
      %v1152 = vpop.f32.mrf.mxu0
      %v1153 = vpop.f32.mrf.mxu0
      %1154 = vdwg.mxu0
      %1155 = vmatprep.subr.bf16.mxu0 %v848
      %1156 = vmatpush1.bf16.msra.mxu0 %v847
      %1157 = vmatprep.subr.bf16.mxu0 %v844
      %1158 = vmatpush1.bf16.msra.mxu0 %v843
      %1159 = vmatprep.subr.bf16.mxu0 %v840
      %1160 = vmatpush1.bf16.msra.mxu0 %v839
      %1161 = vmatprep.subr.bf16.mxu0 %v836
      %1162 = vmatpush1.bf16.msra.mxu0 %v835
      %1163 = vmatprep.subr.bf16.mxu0 %v832
      %1164 = vmatpush1.bf16.msra.mxu0 %v831
      %1165 = vmatprep.subr.bf16.mxu0 %v828
      %1166 = vmatpush1.bf16.msra.mxu0 %v827
      %1167 = vmatprep.subr.bf16.mxu0 %v824
      %1168 = vmatpush1.bf16.msra.mxu0 %v823
      %1169 = vmatprep.subr.bf16.mxu0 %v820
      %1170 = vmatpush1.bf16.msra.mxu0 %v819
      %1171 = vmatprep.subr.bf16.mxu0 %v880
      %1172 = vmatpush2.bf16.msra.mxu0 %v879
      %1173 = vmatprep.subr.bf16.mxu0 %v876
      %1174 = vmatpush2.bf16.msra.mxu0 %v875
      %1175 = vmatprep.subr.bf16.mxu0 %v872
      %1176 = vmatpush2.bf16.msra.mxu0 %v871
      %1177 = vmatprep.subr.bf16.mxu0 %v868
      %1178 = vmatpush2.bf16.msra.mxu0 %v867
      %1179 = vmatprep.subr.bf16.mxu0 %v864
      %1180 = vmatpush2.bf16.msra.mxu0 %v863
      %1181 = vmatprep.subr.bf16.mxu0 %v860
      %1182 = vmatpush2.bf16.msra.mxu0 %v859
      %1183 = vmatprep.subr.bf16.mxu0 %v856
      %1184 = vmatpush2.bf16.msra.mxu0 %v855
      %1185 = vmatprep.subr.bf16.mxu0 %v852
      %1186 = vmatpush2.bf16.msra.mxu0 %v851
      %1187 = vmatprep.mubr.bf16.mxu0 %v426
      %1188 = vmatmul.mubr.bf16.gmra.mxu0 %v425
      %v1189 = vpop.f32.mrf.mxu0
      %v1190 = vadd.f32 0.0, %v1189
      %v1191 = vpop.f32.mrf.mxu0
      %v1192 = vadd.f32 0.0, %v1191
      %v1193 = vpop.f32.mrf.mxu0
      %v1194 = vpop.f32.mrf.mxu0
      %1195 = vdwg.mxu0
      %1196 = vmatprep.subr.bf16.mxu0 %v912
      %1197 = vmatpush1.bf16.msra.mxu0 %v911
      %1198 = vmatprep.subr.bf16.mxu0 %v908
      %1199 = vmatpush1.bf16.msra.mxu0 %v907
      %1200 = vmatprep.subr.bf16.mxu0 %v904
      %1201 = vmatpush1.bf16.msra.mxu0 %v903
      %1202 = vmatprep.subr.bf16.mxu0 %v900
      %1203 = vmatpush1.bf16.msra.mxu0 %v899
      %1204 = vmatprep.subr.bf16.mxu0 %v896
      %1205 = vmatpush1.bf16.msra.mxu0 %v895
      %1206 = vmatprep.subr.bf16.mxu0 %v892
      %1207 = vmatpush1.bf16.msra.mxu0 %v891
      %1208 = vmatprep.subr.bf16.mxu0 %v888
      %1209 = vmatpush1.bf16.msra.mxu0 %v887
      %1210 = vmatprep.subr.bf16.mxu0 %v884
      %1211 = vmatpush1.bf16.msra.mxu0 %v883
      %1212 = vmatprep.subr.bf16.mxu0 %v944
      %1213 = vmatpush2.bf16.msra.mxu0 %v943
      %1214 = vmatprep.subr.bf16.mxu0 %v940
      %1215 = vmatpush2.bf16.msra.mxu0 %v939
      %1216 = vmatprep.subr.bf16.mxu0 %v936
      %1217 = vmatpush2.bf16.msra.mxu0 %v935
      %1218 = vmatprep.subr.bf16.mxu0 %v932
      %1219 = vmatpush2.bf16.msra.mxu0 %v931
      %1220 = vmatprep.subr.bf16.mxu0 %v928
      %1221 = vmatpush2.bf16.msra.mxu0 %v927
      %1222 = vmatprep.subr.bf16.mxu0 %v924
      %1223 = vmatpush2.bf16.msra.mxu0 %v923
      %1224 = vmatprep.subr.bf16.mxu0 %v920
      %1225 = vmatpush2.bf16.msra.mxu0 %v919
      %1226 = vmatprep.subr.bf16.mxu0 %v916
      %1227 = vmatpush2.bf16.msra.mxu0 %v915
      %1228 = vmatprep.mubr.bf16.mxu0 %v428
      %1229 = vmatmul.mubr.bf16.gmra.mxu0 %v427
      %v1230 = vpop.f32.mrf.mxu0
      %v1231 = vadd.f32 %v1190, %v1230
      %v1232 = vpop.f32.mrf.mxu0
      %v1233 = vadd.f32 %v1192, %v1232
      %v1234 = vpop.f32.mrf.mxu0
      %v1235 = vpop.f32.mrf.mxu0
      %1236 = vdwg.mxu0
      %v1237 = vadd.f32 %v285, %v1149
      %v1238 = vadd.f32 %v286, %v1151
      %v1239 = vadd.f32 %v287, %v1231
      %v1240 = vadd.f32 %v288, %v1233
      %1241 = vst [vmem:[#allocation2] sm:$0xff] %v1237
      %1242 = vst [vmem:[#allocation2 + $0x8] sm:$0xff] %v1238
      %1243 = vst [vmem:[#allocation2 + $0x10] sm:$0xff] %v1239
      %1244 = vst [vmem:[#allocation2 + $0x18] sm:$0xff] %v1240
      %p1245 = scmp.eq.s32.totalorder %s21, 8
      // Predicated region
      $region37: #{encoder_cell_forward.7} parent=31 // pred_check
        %p1246 = pneg %p1245
      $region38: #{encoder_cell_forward.7} parent=31 // pred_check_branch
        %1248 = sbr.rel (%p1246) target = $region40
      $region39: #{encoder_cell_forward.7} parent=31 // pred_region
        %v1249 = vld [vmem:[#allocation2] sm:$0xff]
        %v1250 = vld [vmem:[#allocation2 + $0x8] sm:$0xff]
        %v1251 = vld [vmem:[#allocation2 + $0x10] sm:$0xff]
        %v1252 = vld [vmem:[#allocation2 + $0x18] sm:$0xff]
        %v1253 = vld [vmem:[%s265] sm:$0xf]
        %v1255 = vlaneseq
        %v1256 = vshrl.u32 %v1255, 7
        %v1257 = vsub.s32 0, %v1256
        %v1258 = vrot.slane %v1253, %v1257
        %v1259 = vlaneseq
        %v1260 = vshrl.u32 %v1259, 7
        %v1261 = vsub.s32 1, %v1260
        %v1262 = vrot.slane %v1253, %v1261
        %v1263 = vlaneseq
        %v1264 = vshrl.u32 %v1263, 7
        %v1265 = vsub.s32 2, %v1264
        %v1266 = vrot.slane %v1253, %v1265
        %v1267 = vlaneseq
        %v1268 = vshrl.u32 %v1267, 7
        %v1269 = vsub.s32 3, %v1268
        %v1270 = vrot.slane %v1253, %v1269
        %v1275 = vadd.f32 %v1249, %v1258
        %v1276 = vadd.f32 %v1250, %v1262
        %v1277 = vadd.f32 %v1251, %v1266
        %v1278 = vadd.f32 %v1252, %v1270
        %1279 = vst [vmem:[%s275] sm:$0xff] %v1275
        %1280 = vst [vmem:[%s275 + $0x8] sm:$0xff] %v1276
        %1281 = vst [vmem:[%s275 + $0x10] sm:$0xff] %v1277
        %1282 = vst [vmem:[%s275 + $0x18] sm:$0xff] %v1278
      $region40: #{encoder_cell_forward.7} parent=31 // pred_fallthru
        _
      %s1283 = smul.u32 4, %s20
      %p1284 = scmp.lt.s32.totalorder %s19, 0
      %s1285 = scalar_select %p1284, %s19, 0
      %p1286 = scmp.lt.s32.totalorder %s1283, 3
      %s1287 = scalar_select %p1286, %s1283, 3
      %s1288 = smul.addr %s1285, 4
      %s1289 = sadd.s32 %s1287, %s1288
      %s1290 = smul.addr %s1289, 8
      %s1291 = scalar_lea.vmem %s3, %s1290
      // Predicated region
      $region41: #{encoder_cell_forward.7} parent=31 // pred_check
        %p1292 = pneg %p135
      $region42: #{encoder_cell_forward.7} parent=31 // pred_check_branch
        %1294 = sbr.rel (%p1292) target = $region44
      $region43: #{encoder_cell_forward.7} parent=31 // pred_region
        %s1295 = smul.u32 4, %s20
      $region44: #{encoder_cell_forward.7} parent=31 // pred_fallthru
        _
      // Predicated region
      $region45: #{encoder_cell_forward.7} parent=31 // pred_check
        %p1296 = pneg %p135
      $region46: #{encoder_cell_forward.7} parent=31 // pred_check_branch
        %1298 = sbr.rel (%p1296) target = $region48
      $region47: #{encoder_cell_forward.7} parent=31 // pred_region
        %s1299 = smul.u32 4, %s20
        %p1300 = scmp.lt.s32.totalorder %s19, 0
        %s1301 = scalar_select %p1300, %s19, 0
        %p1302 = scmp.lt.s32.totalorder %s1299, 3
        %s1303 = scalar_select %p1302, %s1299, 3
        %s1304 = smul.addr %s1301, 4
        %s1305 = sadd.s32 %s1303, %s1304
        %s1306 = smul.addr %s1305, 8
        %s1307 = scalar_lea.vmem %s3, %s1306
      $region48: #{encoder_cell_forward.7} parent=31 // pred_fallthru
        _
    $region32: #{encoder_cell_forward.7} parent=5 // pred_fallthru
      _
    %p1308 = scmp.le.s32.totalorder 2, %s9
    // Predicated region
    $region49: #{encoder_cell_forward.7} parent=5 // pred_check
      %p1309 = pneg %p1308
    $region50: #{encoder_cell_forward.7} parent=5 // pred_check_branch
      %1311 = sbr.rel (%p1309) target = $region52
    $region51: #{encoder_cell_forward.7} parent=5 // pred_region
      %s1312 = ssub.s32 %s9, 2
    $region52: #{encoder_cell_forward.7} parent=5 // pred_fallthru
      _
  $region6: #{encoder_cell_forward.7} parent=0 // loop_footer
    %s13 = sadd.s32 1, %s9
  $region7: #{encoder_cell_forward.7} parent=0 // loop_footer_branch
    %8 = sbr.rel target = $region3
  $region8: #{encoder_cell_forward.7} parent=0 // loop_exit
    _

</llo_original>
